<compile_context>
chip_gen: v6e
topology: v6e:2x2x1
jax: 0.10.0
libtpu: 0.0.40
codegen_flags: <defaults>
</compile_context>

<pallas_src>
import functools

import jax
import jax.numpy as jnp
from jax.experimental import pallas as pl
from jax.experimental.pallas import tpu as pltpu


def _erf_approx(x):
    # Abramowitz & Stegun 7.1.26 rational approximation, max abs err ~1.5e-7.
    # Only uses ops with guaranteed Mosaic lowerings (cmp/select/abs/exp/mul/add/div).
    p = 0.3275911
    a1 = 0.254829592
    a2 = -0.284496736
    a3 = 1.421413741
    a4 = -1.453152027
    a5 = 1.061405429
    s = jnp.where(x < 0.0, -1.0, 1.0)
    z = jnp.abs(x)
    t = 1.0 / (1.0 + p * z)
    poly = ((((a5 * t + a4) * t + a3) * t + a2) * t + a1) * t
    return s * (1.0 - poly * jnp.exp(-z * z))


def _gelu_exact(x):
    # matches torch.nn.GELU() default (erf-based, NOT tanh approximation)
    return 0.5 * x * (1.0 + _erf_approx(x * 0.7071067811865476))


def _round_up(x, m):
    return (x + m - 1) // m * m


def actor_kernel(obs_ref, noi_ref,
                 w0a_ref, w0b_ref, b0_ref,
                 w1_ref, b1_ref,
                 w2_ref, b2_ref,
                 w3_ref, b3_ref,
                 w4_ref, b4_ref,
                 o_ref):
    # Fused concat: concat([obs, noise]) @ W0  ==  obs @ W0[:S] + noise @ W0[S:]
    obs = obs_ref[...].astype(jnp.bfloat16)
    noi = noi_ref[...].astype(jnp.bfloat16)
    h = (jnp.dot(obs, w0a_ref[...], preferred_element_type=jnp.float32)
         + jnp.dot(noi, w0b_ref[...], preferred_element_type=jnp.float32)
         + b0_ref[...])
    h = _gelu_exact(h)
    for w_ref, b_ref in ((w1_ref, b1_ref), (w2_ref, b2_ref), (w3_ref, b3_ref)):
        h = _gelu_exact(
            jnp.dot(h.astype(jnp.bfloat16), w_ref[...],
                    preferred_element_type=jnp.float32) + b_ref[...])
    a = jnp.dot(h.astype(jnp.bfloat16), w4_ref[...],
                preferred_element_type=jnp.float32) + b4_ref[...]
    o_ref[...] = jnp.tanh(a)      # padded columns are tanh(0) = 0


def init_params(key, state_dim, action_dim, hidden_dims=(512, 512, 512, 512)):
    """Deterministic init mirroring the PyTorch module:
    orthogonal(gain=1.0) on hidden layers, orthogonal(gain=0.01) on the final
    layer, zero biases.  Stored f32 as (in_features, out_features)."""
    input_dim = state_dim + action_dim
    dims = [input_dim] + list(hidden_dims) + [action_dim]
    orth1 = jax.nn.initializers.orthogonal(scale=1.0)
    orth001 = jax.nn.initializers.orthogonal(scale=0.01)
    params = {}
    keys = jax.random.split(key, len(dims) - 1)
    for i, (din, dout) in enumerate(zip(dims[:-1], dims[1:])):
        init = orth001 if i == len(dims) - 2 else orth1
        params[f"w{i}"] = init(keys[i], (din, dout), jnp.float32)
        params[f"b{i}"] = jnp.zeros((1, dout), jnp.float32)  # 2-D, TPU-friendly
    return params


def prepare_kernel_params(params, state_dim, lane=128):
    """One-time conversion of the f32 params into the kernel layout:
    W0 split into obs/noise halves, weights cast to bf16, final layer padded to
    a lane-dense (multiple-of-128) output width.  Biases stay f32."""
    action_dim = params["w4"].shape[1]
    a_pad = _round_up(action_dim, lane)
    kp = {
        "w0a": params["w0"][:state_dim].astype(jnp.bfloat16),
        "w0b": params["w0"][state_dim:].astype(jnp.bfloat16),
        "b0": params["b0"].astype(jnp.float32),
        "w1": params["w1"].astype(jnp.bfloat16),
        "b1": params["b1"].astype(jnp.float32),
        "w2": params["w2"].astype(jnp.bfloat16),
        "b2": params["b2"].astype(jnp.float32),
        "w3": params["w3"].astype(jnp.bfloat16),
        "b3": params["b3"].astype(jnp.float32),
        "w4": jnp.pad(params["w4"],
                      ((0, 0), (0, a_pad - action_dim))).astype(jnp.bfloat16),
        "b4": jnp.pad(params["b4"],
                      ((0, 0), (0, a_pad - action_dim))).astype(jnp.float32),
    }
    return kp


@functools.partial(jax.jit, static_argnames=("action_dim", "block_b"))
def actor_one_step_policy(observations, noises, kernel_params, *,
                          action_dim, block_b=256):
    """observations: (B, state_dim), noises: (B, action_dim) -> actions (B, action_dim)."""
    obs = observations.astype(jnp.float32)
    noi = noises.astype(jnp.float32)
    B, S = obs.shape
    A = noi.shape[1]
    a_pad = kernel_params["w4"].shape[1]

    # Batch tile: multiple of 8 sublanes, capped at block_b; pad B up to a multiple.
    blk = min(block_b, _round_up(B, 8))
    b_pad = _round_up(B, blk)
    if b_pad != B:
        obs = jnp.pad(obs, ((0, b_pad - B), (0, 0)))
        noi = jnp.pad(noi, ((0, b_pad - B), (0, 0)))

    kp = kernel_params
    weight_args = (kp["w0a"], kp["w0b"], kp["b0"],
                   kp["w1"], kp["b1"],
                   kp["w2"], kp["b2"],
                   kp["w3"], kp["b3"],
                   kp["w4"], kp["b4"])

    def const_spec(arr):
        # whole-array block, same block index for every batch tile
        # -> weights/biases stay VMEM-resident across the grid
        return pl.BlockSpec(arr.shape, lambda i: (0, 0))

    out = pl.pallas_call(
        actor_kernel,
        out_shape=jax.ShapeDtypeStruct((b_pad, a_pad), jnp.float32),
        grid=(b_pad // blk,),
        in_specs=[pl.BlockSpec((blk, S), lambda i: (i, 0)),
                  pl.BlockSpec((blk, A), lambda i: (i, 0))]
                 + [const_spec(w) for w in weight_args],
        out_specs=pl.BlockSpec((blk, a_pad), lambda i: (i, 0)),
        compiler_params=pltpu.CompilerParams(
            dimension_semantics=("parallel",),   # megacore sharding
            vmem_limit_bytes=32 << 20,           # actual footprint is only a few MiB
        ),
    )(obs, noi, *weight_args)

    return out[:B, :action_dim]


def reference_forward(observations, noises, params):
    """Pure-JAX f32 reference matching the PyTorch forward exactly."""
    x = jnp.concatenate([observations, noises], axis=-1).astype(jnp.float32)
    for i in range(4):
        x = jax.nn.gelu(x @ params[f"w{i}"] + params[f"b{i}"], approximate=False)
    x = x @ params["w4"] + params["b4"]
    return jnp.tanh(x)


if __name__ == "__main__":
    state_dim, action_dim, batch = 24, 8, 4

    key = jax.random.PRNGKey(0)
    k_obs, k_noise, k_params = jax.random.split(key, 3)

    observations = jax.random.normal(k_obs, (batch, state_dim), jnp.float32)
    noises = jax.random.normal(k_noise, (batch, action_dim), jnp.float32)
    params = init_params(k_params, state_dim, action_dim)
    kernel_params = prepare_kernel_params(params, state_dim)

    actions = actor_one_step_policy(observations, noises, kernel_params,
                                    action_dim=action_dim)
    actions = jax.block_until_ready(actions)

    ref = jax.block_until_ready(reference_forward(observations, noises, params))
    assert actions.shape == (batch, action_dim)
    # bf16 matmuls (f32 accumulation) vs f32 reference: loosened tolerance.
    assert jnp.allclose(actions, ref, atol=1e-2, rtol=1e-2), \
        "mismatch vs pure-JAX f32 reference beyond bf16 tolerance"

    print("KERNEL_OK")
</pallas_src>

<mosaic_0001>
module attributes {stable_mosaic.version = 11 : i64} {
  func.func @actor_kernel(%arg0: i32, %arg1: memref<8x24xf32, #tpu.memory_space<vmem>>, %arg2: memref<8x8xf32, #tpu.memory_space<vmem>>, %arg3: memref<24x512xbf16, #tpu.memory_space<vmem>>, %arg4: memref<8x512xbf16, #tpu.memory_space<vmem>>, %arg5: memref<1x512xf32, #tpu.memory_space<vmem>>, %arg6: memref<512x512xbf16, #tpu.memory_space<vmem>>, %arg7: memref<1x512xf32, #tpu.memory_space<vmem>>, %arg8: memref<512x512xbf16, #tpu.memory_space<vmem>>, %arg9: memref<1x512xf32, #tpu.memory_space<vmem>>, %arg10: memref<512x512xbf16, #tpu.memory_space<vmem>>, %arg11: memref<1x512xf32, #tpu.memory_space<vmem>>, %arg12: memref<512x128xbf16, #tpu.memory_space<vmem>>, %arg13: memref<1x128xf32, #tpu.memory_space<vmem>>, %arg14: memref<8x128xf32, #tpu.memory_space<vmem>>) attributes {dimension_semantics = [#tpu.dimension_semantics<parallel>], iteration_bounds = array<i64: 1>, scalar_prefetch = 0 : i64, scratch_operands = 0 : i64, tpu.core_type = #tpu.core_type<tc>, window_params = [{transform_indices = @transform_0, window_bounds = array<i64: 8, 24>}, {transform_indices = @transform_1, window_bounds = array<i64: 8, 8>}, {pipeline_mode = #tpu.pipeline_mode<synchronous>, transform_indices = @transform_2, window_bounds = array<i64: 24, 512>}, {pipeline_mode = #tpu.pipeline_mode<synchronous>, transform_indices = @transform_3, window_bounds = array<i64: 8, 512>}, {pipeline_mode = #tpu.pipeline_mode<synchronous>, transform_indices = @transform_4, window_bounds = array<i64: 1, 512>}, {pipeline_mode = #tpu.pipeline_mode<synchronous>, transform_indices = @transform_5, window_bounds = array<i64: 512, 512>}, {pipeline_mode = #tpu.pipeline_mode<synchronous>, transform_indices = @transform_6, window_bounds = array<i64: 1, 512>}, {pipeline_mode = #tpu.pipeline_mode<synchronous>, transform_indices = @transform_7, window_bounds = array<i64: 512, 512>}, {pipeline_mode = #tpu.pipeline_mode<synchronous>, transform_indices = @transform_8, window_bounds = array<i64: 1, 512>}, {pipeline_mode = #tpu.pipeline_mode<synchronous>, transform_indices = @transform_9, window_bounds = array<i64: 512, 512>}, {pipeline_mode = #tpu.pipeline_mode<synchronous>, transform_indices = @transform_10, window_bounds = array<i64: 1, 512>}, {pipeline_mode = #tpu.pipeline_mode<synchronous>, transform_indices = @transform_11, window_bounds = array<i64: 512, 128>}, {pipeline_mode = #tpu.pipeline_mode<synchronous>, transform_indices = @transform_12, window_bounds = array<i64: 1, 128>}, {transform_indices = @transform_13, window_bounds = array<i64: 8, 128>}]} {
    %c0 = arith.constant 0 : index
    %c0_0 = arith.constant 0 : index
    %0 = vector.load %arg1[%c0, %c0_0] : memref<8x24xf32, #tpu.memory_space<vmem>>, vector<8x24xf32>
    %1 = arith.truncf %0 : vector<8x24xf32> to vector<8x24xbf16>
    %c0_1 = arith.constant 0 : index
    %c0_2 = arith.constant 0 : index
    %2 = vector.load %arg2[%c0_1, %c0_2] : memref<8x8xf32, #tpu.memory_space<vmem>>, vector<8x8xf32>
    %3 = arith.truncf %2 : vector<8x8xf32> to vector<8x8xbf16>
    %c0_3 = arith.constant 0 : index
    %c0_4 = arith.constant 0 : index
    %4 = vector.load %arg3[%c0_3, %c0_4] : memref<24x512xbf16, #tpu.memory_space<vmem>>, vector<24x512xbf16>
    %cst = arith.constant dense<0.000000e+00> : vector<8x512xf32>
    %5 = tpu.matmul %1, %4, %cst {dimension_numbers = #tpu.dot_dimension_numbers<[1], [0], [0], [1], [0, 0, 1, 1], [], []>} : vector<8x24xbf16>, vector<24x512xbf16>, vector<8x512xf32> -> vector<8x512xf32>
    %c0_5 = arith.constant 0 : index
    %c0_6 = arith.constant 0 : index
    %6 = vector.load %arg4[%c0_5, %c0_6] : memref<8x512xbf16, #tpu.memory_space<vmem>>, vector<8x512xbf16>
    %cst_7 = arith.constant dense<0.000000e+00> : vector<8x512xf32>
    %7 = tpu.matmul %3, %6, %cst_7 {dimension_numbers = #tpu.dot_dimension_numbers<[1], [0], [0], [1], [0, 0, 1, 1], [], []>} : vector<8x8xbf16>, vector<8x512xbf16>, vector<8x512xf32> -> vector<8x512xf32>
    %8 = arith.addf %5, %7 : vector<8x512xf32>
    %c0_8 = arith.constant 0 : index
    %c0_9 = arith.constant 0 : index
    %9 = vector.load %arg5[%c0_8, %c0_9] : memref<1x512xf32, #tpu.memory_space<vmem>>, vector<1x512xf32>
    %10 = vector.broadcast %9 : vector<1x512xf32> to vector<8x512xf32>
    %11 = arith.addf %8, %10 : vector<8x512xf32>
    %cst_10 = arith.constant 5.000000e-01 : f32
    %12 = vector.broadcast %cst_10 : f32 to vector<8x512xf32>
    %13 = arith.mulf %12, %11 : vector<8x512xf32>
    %cst_11 = arith.constant 0.707106769 : f32
    %14 = vector.broadcast %cst_11 : f32 to vector<8x512xf32>
    %15 = arith.mulf %11, %14 : vector<8x512xf32>
    %cst_12 = arith.constant 0.000000e+00 : f32
    %16 = vector.broadcast %cst_12 : f32 to vector<8x512xf32>
    %17 = arith.cmpf olt, %15, %16 : vector<8x512xf32>
    %cst_13 = arith.constant -1.000000e+00 : f32
    %cst_14 = arith.constant 1.000000e+00 : f32
    %18 = vector.broadcast %cst_13 : f32 to vector<8x512xf32>
    %19 = vector.broadcast %cst_14 : f32 to vector<8x512xf32>
    %20 = arith.select %17, %18, %19 : vector<8x512xi1>, vector<8x512xf32>
    %21 = math.absf %15 : vector<8x512xf32>
    %cst_15 = arith.constant 0.327591091 : f32
    %22 = vector.broadcast %cst_15 : f32 to vector<8x512xf32>
    %23 = arith.mulf %22, %21 : vector<8x512xf32>
    %cst_16 = arith.constant 1.000000e+00 : f32
    %24 = vector.broadcast %cst_16 : f32 to vector<8x512xf32>
    %25 = arith.addf %24, %23 : vector<8x512xf32>
    %cst_17 = arith.constant 1.000000e+00 : f32
    %26 = vector.broadcast %cst_17 : f32 to vector<8x512xf32>
    %27 = arith.divf %26, %25 : vector<8x512xf32>
    %cst_18 = arith.constant 1.06140542 : f32
    %28 = vector.broadcast %cst_18 : f32 to vector<8x512xf32>
    %29 = arith.mulf %28, %27 : vector<8x512xf32>
    %cst_19 = arith.constant -1.45315206 : f32
    %30 = vector.broadcast %cst_19 : f32 to vector<8x512xf32>
    %31 = arith.addf %29, %30 : vector<8x512xf32>
    %32 = arith.mulf %31, %27 : vector<8x512xf32>
    %cst_20 = arith.constant 1.42141378 : f32
    %33 = vector.broadcast %cst_20 : f32 to vector<8x512xf32>
    %34 = arith.addf %32, %33 : vector<8x512xf32>
    %35 = arith.mulf %34, %27 : vector<8x512xf32>
    %cst_21 = arith.constant -0.284496725 : f32
    %36 = vector.broadcast %cst_21 : f32 to vector<8x512xf32>
    %37 = arith.addf %35, %36 : vector<8x512xf32>
    %38 = arith.mulf %37, %27 : vector<8x512xf32>
    %cst_22 = arith.constant 0.254829586 : f32
    %39 = vector.broadcast %cst_22 : f32 to vector<8x512xf32>
    %40 = arith.addf %38, %39 : vector<8x512xf32>
    %41 = arith.mulf %40, %27 : vector<8x512xf32>
    %cst_23 = arith.constant 0.000000e+00 : f32
    %42 = vector.broadcast %cst_23 : f32 to vector<8x512xf32>
    %43 = arith.subf %42, %21 : vector<8x512xf32>
    %44 = arith.mulf %43, %21 : vector<8x512xf32>
    %45 = math.exp %44 : vector<8x512xf32>
    %46 = arith.mulf %41, %45 : vector<8x512xf32>
    %cst_24 = arith.constant 1.000000e+00 : f32
    %47 = vector.broadcast %cst_24 : f32 to vector<8x512xf32>
    %48 = arith.subf %47, %46 : vector<8x512xf32>
    %49 = arith.mulf %20, %48 : vector<8x512xf32>
    %cst_25 = arith.constant 1.000000e+00 : f32
    %50 = vector.broadcast %cst_25 : f32 to vector<8x512xf32>
    %51 = arith.addf %50, %49 : vector<8x512xf32>
    %52 = arith.mulf %13, %51 : vector<8x512xf32>
    %53 = arith.truncf %52 : vector<8x512xf32> to vector<8x512xbf16>
    %c0_26 = arith.constant 0 : index
    %c0_27 = arith.constant 0 : index
    %54 = vector.load %arg6[%c0_26, %c0_27] : memref<512x512xbf16, #tpu.memory_space<vmem>>, vector<512x512xbf16>
    %cst_28 = arith.constant dense<0.000000e+00> : vector<8x512xf32>
    %55 = tpu.matmul %53, %54, %cst_28 {dimension_numbers = #tpu.dot_dimension_numbers<[1], [0], [0], [1], [0, 0, 1, 1], [], []>} : vector<8x512xbf16>, vector<512x512xbf16>, vector<8x512xf32> -> vector<8x512xf32>
    %c0_29 = arith.constant 0 : index
    %c0_30 = arith.constant 0 : index
    %56 = vector.load %arg7[%c0_29, %c0_30] : memref<1x512xf32, #tpu.memory_space<vmem>>, vector<1x512xf32>
    %57 = vector.broadcast %56 : vector<1x512xf32> to vector<8x512xf32>
    %58 = arith.addf %55, %57 : vector<8x512xf32>
    %cst_31 = arith.constant 5.000000e-01 : f32
    %59 = vector.broadcast %cst_31 : f32 to vector<8x512xf32>
    %60 = arith.mulf %59, %58 : vector<8x512xf32>
    %cst_32 = arith.constant 0.707106769 : f32
    %61 = vector.broadcast %cst_32 : f32 to vector<8x512xf32>
    %62 = arith.mulf %58, %61 : vector<8x512xf32>
    %cst_33 = arith.constant 0.000000e+00 : f32
    %63 = vector.broadcast %cst_33 : f32 to vector<8x512xf32>
    %64 = arith.cmpf olt, %62, %63 : vector<8x512xf32>
    %cst_34 = arith.constant -1.000000e+00 : f32
    %cst_35 = arith.constant 1.000000e+00 : f32
    %65 = vector.broadcast %cst_34 : f32 to vector<8x512xf32>
    %66 = vector.broadcast %cst_35 : f32 to vector<8x512xf32>
    %67 = arith.select %64, %65, %66 : vector<8x512xi1>, vector<8x512xf32>
    %68 = math.absf %62 : vector<8x512xf32>
    %cst_36 = arith.constant 0.327591091 : f32
    %69 = vector.broadcast %cst_36 : f32 to vector<8x512xf32>
    %70 = arith.mulf %69, %68 : vector<8x512xf32>
    %cst_37 = arith.constant 1.000000e+00 : f32
    %71 = vector.broadcast %cst_37 : f32 to vector<8x512xf32>
    %72 = arith.addf %71, %70 : vector<8x512xf32>
    %cst_38 = arith.constant 1.000000e+00 : f32
    %73 = vector.broadcast %cst_38 : f32 to vector<8x512xf32>
    %74 = arith.divf %73, %72 : vector<8x512xf32>
    %cst_39 = arith.constant 1.06140542 : f32
    %75 = vector.broadcast %cst_39 : f32 to vector<8x512xf32>
    %76 = arith.mulf %75, %74 : vector<8x512xf32>
    %cst_40 = arith.constant -1.45315206 : f32
    %77 = vector.broadcast %cst_40 : f32 to vector<8x512xf32>
    %78 = arith.addf %76, %77 : vector<8x512xf32>
    %79 = arith.mulf %78, %74 : vector<8x512xf32>
    %cst_41 = arith.constant 1.42141378 : f32
    %80 = vector.broadcast %cst_41 : f32 to vector<8x512xf32>
    %81 = arith.addf %79, %80 : vector<8x512xf32>
    %82 = arith.mulf %81, %74 : vector<8x512xf32>
    %cst_42 = arith.constant -0.284496725 : f32
    %83 = vector.broadcast %cst_42 : f32 to vector<8x512xf32>
    %84 = arith.addf %82, %83 : vector<8x512xf32>
    %85 = arith.mulf %84, %74 : vector<8x512xf32>
    %cst_43 = arith.constant 0.254829586 : f32
    %86 = vector.broadcast %cst_43 : f32 to vector<8x512xf32>
    %87 = arith.addf %85, %86 : vector<8x512xf32>
    %88 = arith.mulf %87, %74 : vector<8x512xf32>
    %cst_44 = arith.constant 0.000000e+00 : f32
    %89 = vector.broadcast %cst_44 : f32 to vector<8x512xf32>
    %90 = arith.subf %89, %68 : vector<8x512xf32>
    %91 = arith.mulf %90, %68 : vector<8x512xf32>
    %92 = math.exp %91 : vector<8x512xf32>
    %93 = arith.mulf %88, %92 : vector<8x512xf32>
    %cst_45 = arith.constant 1.000000e+00 : f32
    %94 = vector.broadcast %cst_45 : f32 to vector<8x512xf32>
    %95 = arith.subf %94, %93 : vector<8x512xf32>
    %96 = arith.mulf %67, %95 : vector<8x512xf32>
    %cst_46 = arith.constant 1.000000e+00 : f32
    %97 = vector.broadcast %cst_46 : f32 to vector<8x512xf32>
    %98 = arith.addf %97, %96 : vector<8x512xf32>
    %99 = arith.mulf %60, %98 : vector<8x512xf32>
    %100 = arith.truncf %99 : vector<8x512xf32> to vector<8x512xbf16>
    %c0_47 = arith.constant 0 : index
    %c0_48 = arith.constant 0 : index
    %101 = vector.load %arg8[%c0_47, %c0_48] : memref<512x512xbf16, #tpu.memory_space<vmem>>, vector<512x512xbf16>
    %cst_49 = arith.constant dense<0.000000e+00> : vector<8x512xf32>
    %102 = tpu.matmul %100, %101, %cst_49 {dimension_numbers = #tpu.dot_dimension_numbers<[1], [0], [0], [1], [0, 0, 1, 1], [], []>} : vector<8x512xbf16>, vector<512x512xbf16>, vector<8x512xf32> -> vector<8x512xf32>
    %c0_50 = arith.constant 0 : index
    %c0_51 = arith.constant 0 : index
    %103 = vector.load %arg9[%c0_50, %c0_51] : memref<1x512xf32, #tpu.memory_space<vmem>>, vector<1x512xf32>
    %104 = vector.broadcast %103 : vector<1x512xf32> to vector<8x512xf32>
    %105 = arith.addf %102, %104 : vector<8x512xf32>
    %cst_52 = arith.constant 5.000000e-01 : f32
    %106 = vector.broadcast %cst_52 : f32 to vector<8x512xf32>
    %107 = arith.mulf %106, %105 : vector<8x512xf32>
    %cst_53 = arith.constant 0.707106769 : f32
    %108 = vector.broadcast %cst_53 : f32 to vector<8x512xf32>
    %109 = arith.mulf %105, %108 : vector<8x512xf32>
    %cst_54 = arith.constant 0.000000e+00 : f32
    %110 = vector.broadcast %cst_54 : f32 to vector<8x512xf32>
    %111 = arith.cmpf olt, %109, %110 : vector<8x512xf32>
    %cst_55 = arith.constant -1.000000e+00 : f32
    %cst_56 = arith.constant 1.000000e+00 : f32
    %112 = vector.broadcast %cst_55 : f32 to vector<8x512xf32>
    %113 = vector.broadcast %cst_56 : f32 to vector<8x512xf32>
    %114 = arith.select %111, %112, %113 : vector<8x512xi1>, vector<8x512xf32>
    %115 = math.absf %109 : vector<8x512xf32>
    %cst_57 = arith.constant 0.327591091 : f32
    %116 = vector.broadcast %cst_57 : f32 to vector<8x512xf32>
    %117 = arith.mulf %116, %115 : vector<8x512xf32>
    %cst_58 = arith.constant 1.000000e+00 : f32
    %118 = vector.broadcast %cst_58 : f32 to vector<8x512xf32>
    %119 = arith.addf %118, %117 : vector<8x512xf32>
    %cst_59 = arith.constant 1.000000e+00 : f32
    %120 = vector.broadcast %cst_59 : f32 to vector<8x512xf32>
    %121 = arith.divf %120, %119 : vector<8x512xf32>
    %cst_60 = arith.constant 1.06140542 : f32
    %122 = vector.broadcast %cst_60 : f32 to vector<8x512xf32>
    %123 = arith.mulf %122, %121 : vector<8x512xf32>
    %cst_61 = arith.constant -1.45315206 : f32
    %124 = vector.broadcast %cst_61 : f32 to vector<8x512xf32>
    %125 = arith.addf %123, %124 : vector<8x512xf32>
    %126 = arith.mulf %125, %121 : vector<8x512xf32>
    %cst_62 = arith.constant 1.42141378 : f32
    %127 = vector.broadcast %cst_62 : f32 to vector<8x512xf32>
    %128 = arith.addf %126, %127 : vector<8x512xf32>
    %129 = arith.mulf %128, %121 : vector<8x512xf32>
    %cst_63 = arith.constant -0.284496725 : f32
    %130 = vector.broadcast %cst_63 : f32 to vector<8x512xf32>
    %131 = arith.addf %129, %130 : vector<8x512xf32>
    %132 = arith.mulf %131, %121 : vector<8x512xf32>
    %cst_64 = arith.constant 0.254829586 : f32
    %133 = vector.broadcast %cst_64 : f32 to vector<8x512xf32>
    %134 = arith.addf %132, %133 : vector<8x512xf32>
    %135 = arith.mulf %134, %121 : vector<8x512xf32>
    %cst_65 = arith.constant 0.000000e+00 : f32
    %136 = vector.broadcast %cst_65 : f32 to vector<8x512xf32>
    %137 = arith.subf %136, %115 : vector<8x512xf32>
    %138 = arith.mulf %137, %115 : vector<8x512xf32>
    %139 = math.exp %138 : vector<8x512xf32>
    %140 = arith.mulf %135, %139 : vector<8x512xf32>
    %cst_66 = arith.constant 1.000000e+00 : f32
    %141 = vector.broadcast %cst_66 : f32 to vector<8x512xf32>
    %142 = arith.subf %141, %140 : vector<8x512xf32>
    %143 = arith.mulf %114, %142 : vector<8x512xf32>
    %cst_67 = arith.constant 1.000000e+00 : f32
    %144 = vector.broadcast %cst_67 : f32 to vector<8x512xf32>
    %145 = arith.addf %144, %143 : vector<8x512xf32>
    %146 = arith.mulf %107, %145 : vector<8x512xf32>
    %147 = arith.truncf %146 : vector<8x512xf32> to vector<8x512xbf16>
    %c0_68 = arith.constant 0 : index
    %c0_69 = arith.constant 0 : index
    %148 = vector.load %arg10[%c0_68, %c0_69] : memref<512x512xbf16, #tpu.memory_space<vmem>>, vector<512x512xbf16>
    %cst_70 = arith.constant dense<0.000000e+00> : vector<8x512xf32>
    %149 = tpu.matmul %147, %148, %cst_70 {dimension_numbers = #tpu.dot_dimension_numbers<[1], [0], [0], [1], [0, 0, 1, 1], [], []>} : vector<8x512xbf16>, vector<512x512xbf16>, vector<8x512xf32> -> vector<8x512xf32>
    %c0_71 = arith.constant 0 : index
    %c0_72 = arith.constant 0 : index
    %150 = vector.load %arg11[%c0_71, %c0_72] : memref<1x512xf32, #tpu.memory_space<vmem>>, vector<1x512xf32>
    %151 = vector.broadcast %150 : vector<1x512xf32> to vector<8x512xf32>
    %152 = arith.addf %149, %151 : vector<8x512xf32>
    %cst_73 = arith.constant 5.000000e-01 : f32
    %153 = vector.broadcast %cst_73 : f32 to vector<8x512xf32>
    %154 = arith.mulf %153, %152 : vector<8x512xf32>
    %cst_74 = arith.constant 0.707106769 : f32
    %155 = vector.broadcast %cst_74 : f32 to vector<8x512xf32>
    %156 = arith.mulf %152, %155 : vector<8x512xf32>
    %cst_75 = arith.constant 0.000000e+00 : f32
    %157 = vector.broadcast %cst_75 : f32 to vector<8x512xf32>
    %158 = arith.cmpf olt, %156, %157 : vector<8x512xf32>
    %cst_76 = arith.constant -1.000000e+00 : f32
    %cst_77 = arith.constant 1.000000e+00 : f32
    %159 = vector.broadcast %cst_76 : f32 to vector<8x512xf32>
    %160 = vector.broadcast %cst_77 : f32 to vector<8x512xf32>
    %161 = arith.select %158, %159, %160 : vector<8x512xi1>, vector<8x512xf32>
    %162 = math.absf %156 : vector<8x512xf32>
    %cst_78 = arith.constant 0.327591091 : f32
    %163 = vector.broadcast %cst_78 : f32 to vector<8x512xf32>
    %164 = arith.mulf %163, %162 : vector<8x512xf32>
    %cst_79 = arith.constant 1.000000e+00 : f32
    %165 = vector.broadcast %cst_79 : f32 to vector<8x512xf32>
    %166 = arith.addf %165, %164 : vector<8x512xf32>
    %cst_80 = arith.constant 1.000000e+00 : f32
    %167 = vector.broadcast %cst_80 : f32 to vector<8x512xf32>
    %168 = arith.divf %167, %166 : vector<8x512xf32>
    %cst_81 = arith.constant 1.06140542 : f32
    %169 = vector.broadcast %cst_81 : f32 to vector<8x512xf32>
    %170 = arith.mulf %169, %168 : vector<8x512xf32>
    %cst_82 = arith.constant -1.45315206 : f32
    %171 = vector.broadcast %cst_82 : f32 to vector<8x512xf32>
    %172 = arith.addf %170, %171 : vector<8x512xf32>
    %173 = arith.mulf %172, %168 : vector<8x512xf32>
    %cst_83 = arith.constant 1.42141378 : f32
    %174 = vector.broadcast %cst_83 : f32 to vector<8x512xf32>
    %175 = arith.addf %173, %174 : vector<8x512xf32>
    %176 = arith.mulf %175, %168 : vector<8x512xf32>
    %cst_84 = arith.constant -0.284496725 : f32
    %177 = vector.broadcast %cst_84 : f32 to vector<8x512xf32>
    %178 = arith.addf %176, %177 : vector<8x512xf32>
    %179 = arith.mulf %178, %168 : vector<8x512xf32>
    %cst_85 = arith.constant 0.254829586 : f32
    %180 = vector.broadcast %cst_85 : f32 to vector<8x512xf32>
    %181 = arith.addf %179, %180 : vector<8x512xf32>
    %182 = arith.mulf %181, %168 : vector<8x512xf32>
    %cst_86 = arith.constant 0.000000e+00 : f32
    %183 = vector.broadcast %cst_86 : f32 to vector<8x512xf32>
    %184 = arith.subf %183, %162 : vector<8x512xf32>
    %185 = arith.mulf %184, %162 : vector<8x512xf32>
    %186 = math.exp %185 : vector<8x512xf32>
    %187 = arith.mulf %182, %186 : vector<8x512xf32>
    %cst_87 = arith.constant 1.000000e+00 : f32
    %188 = vector.broadcast %cst_87 : f32 to vector<8x512xf32>
    %189 = arith.subf %188, %187 : vector<8x512xf32>
    %190 = arith.mulf %161, %189 : vector<8x512xf32>
    %cst_88 = arith.constant 1.000000e+00 : f32
    %191 = vector.broadcast %cst_88 : f32 to vector<8x512xf32>
    %192 = arith.addf %191, %190 : vector<8x512xf32>
    %193 = arith.mulf %154, %192 : vector<8x512xf32>
    %194 = arith.truncf %193 : vector<8x512xf32> to vector<8x512xbf16>
    %c0_89 = arith.constant 0 : index
    %c0_90 = arith.constant 0 : index
    %195 = vector.load %arg12[%c0_89, %c0_90] : memref<512x128xbf16, #tpu.memory_space<vmem>>, vector<512x128xbf16>
    %cst_91 = arith.constant dense<0.000000e+00> : vector<8x128xf32>
    %196 = tpu.matmul %194, %195, %cst_91 {dimension_numbers = #tpu.dot_dimension_numbers<[1], [0], [0], [1], [0, 0, 1, 1], [], []>} : vector<8x512xbf16>, vector<512x128xbf16>, vector<8x128xf32> -> vector<8x128xf32>
    %c0_92 = arith.constant 0 : index
    %c0_93 = arith.constant 0 : index
    %197 = vector.load %arg13[%c0_92, %c0_93] : memref<1x128xf32, #tpu.memory_space<vmem>>, vector<1x128xf32>
    %198 = vector.broadcast %197 : vector<1x128xf32> to vector<8x128xf32>
    %199 = arith.addf %196, %198 : vector<8x128xf32>
    %200 = math.tanh %199 : vector<8x128xf32>
    %c0_94 = arith.constant 0 : index
    %c0_95 = arith.constant 0 : index
    %201 = vector.load %arg14[%c0_94, %c0_95] : memref<8x128xf32, #tpu.memory_space<vmem>>, vector<8x128xf32>
    tpu.vector_store %arg14[%c0_94, %c0_95], %200 {strides = array<i32>} : memref<8x128xf32, #tpu.memory_space<vmem>>, vector<8x128xf32>,
    return
  }
  func.func @transform_0(%arg0: i32) -> (i32, i32) {
    %c0_i32 = arith.constant 0 : i32
    %c0_i32_0 = arith.constant 0 : i32
    return %arg0, %c0_i32 : i32, i32
  }
  func.func @transform_1(%arg0: i32) -> (i32, i32) {
    %c0_i32 = arith.constant 0 : i32
    %c0_i32_0 = arith.constant 0 : i32
    return %arg0, %c0_i32 : i32, i32
  }
  func.func @transform_2(%arg0: i32) -> (i32, i32) {
    %c0_i32 = arith.constant 0 : i32
    %c0_i32_0 = arith.constant 0 : i32
    %c0_i32_1 = arith.constant 0 : i32
    return %c0_i32, %c0_i32_0 : i32, i32
  }
  func.func @transform_3(%arg0: i32) -> (i32, i32) {
    %c0_i32 = arith.constant 0 : i32
    %c0_i32_0 = arith.constant 0 : i32
    %c0_i32_1 = arith.constant 0 : i32
    return %c0_i32, %c0_i32_0 : i32, i32
  }
  func.func @transform_4(%arg0: i32) -> (i32, i32) {
    %c0_i32 = arith.constant 0 : i32
    %c0_i32_0 = arith.constant 0 : i32
    %c0_i32_1 = arith.constant 0 : i32
    return %c0_i32, %c0_i32_0 : i32, i32
  }
  func.func @transform_5(%arg0: i32) -> (i32, i32) {
    %c0_i32 = arith.constant 0 : i32
    %c0_i32_0 = arith.constant 0 : i32
    %c0_i32_1 = arith.constant 0 : i32
    return %c0_i32, %c0_i32_0 : i32, i32
  }
  func.func @transform_6(%arg0: i32) -> (i32, i32) {
    %c0_i32 = arith.constant 0 : i32
    %c0_i32_0 = arith.constant 0 : i32
    %c0_i32_1 = arith.constant 0 : i32
    return %c0_i32, %c0_i32_0 : i32, i32
  }
  func.func @transform_7(%arg0: i32) -> (i32, i32) {
    %c0_i32 = arith.constant 0 : i32
    %c0_i32_0 = arith.constant 0 : i32
    %c0_i32_1 = arith.constant 0 : i32
    return %c0_i32, %c0_i32_0 : i32, i32
  }
  func.func @transform_8(%arg0: i32) -> (i32, i32) {
    %c0_i32 = arith.constant 0 : i32
    %c0_i32_0 = arith.constant 0 : i32
    %c0_i32_1 = arith.constant 0 : i32
    return %c0_i32, %c0_i32_0 : i32, i32
  }
  func.func @transform_9(%arg0: i32) -> (i32, i32) {
    %c0_i32 = arith.constant 0 : i32
    %c0_i32_0 = arith.constant 0 : i32
    %c0_i32_1 = arith.constant 0 : i32
    return %c0_i32, %c0_i32_0 : i32, i32
  }
  func.func @transform_10(%arg0: i32) -> (i32, i32) {
    %c0_i32 = arith.constant 0 : i32
    %c0_i32_0 = arith.constant 0 : i32
    %c0_i32_1 = arith.constant 0 : i32
    return %c0_i32, %c0_i32_0 : i32, i32
  }
  func.func @transform_11(%arg0: i32) -> (i32, i32) {
    %c0_i32 = arith.constant 0 : i32
    %c0_i32_0 = arith.constant 0 : i32
    %c0_i32_1 = arith.constant 0 : i32
    return %c0_i32, %c0_i32_0 : i32, i32
  }
  func.func @transform_12(%arg0: i32) -> (i32, i32) {
    %c0_i32 = arith.constant 0 : i32
    %c0_i32_0 = arith.constant 0 : i32
    %c0_i32_1 = arith.constant 0 : i32
    return %c0_i32, %c0_i32_0 : i32, i32
  }
  func.func @transform_13(%arg0: i32) -> (i32, i32) {
    %c0_i32 = arith.constant 0 : i32
    %c0_i32_0 = arith.constant 0 : i32
    return %arg0, %c0_i32 : i32, i32
  }
}

</mosaic_0001>

<llo_original>
// kernel: actor_one_step_policy.1
$region0: #{actor_one_step_policy.1}
  #allocation0 [shape = 'u32[]', space=smem, size = 0x4, offset = 0x4, fixed_abs, tag = 'smem constant byte address 0x4 - core index']
  #allocation1 [shape = 'u32[144,128]{1,0:T(1,128)}', space=vmem, size = 0x12000, scoped, tag = 'internal scratch']
  %s0 = inlined_call_operand.vmem [shape: f32[8,24], index: 0, kind: input, shape index: {}]
  %s1 = inlined_call_operand.vmem [shape: f32[8,8], index: 1, kind: input, shape index: {}]
  %s2 = inlined_call_operand.hbm [shape: bf16[24,512], index: 2, kind: input, shape index: {}]
  %s3 = inlined_call_operand.vmem [shape: bf16[8,512], index: 3, kind: input, shape index: {}]
  %s4 = inlined_call_operand.vmem [shape: f32[1,512], index: 4, kind: input, shape index: {}]
  %s5 = inlined_call_operand.hbm [shape: bf16[512,512], index: 5, kind: input, shape index: {}]
  %s6 = inlined_call_operand.vmem [shape: f32[1,512], index: 6, kind: input, shape index: {}]
  %s7 = inlined_call_operand.hbm [shape: bf16[512,512], index: 7, kind: input, shape index: {}]
  %s8 = inlined_call_operand.vmem [shape: f32[1,512], index: 8, kind: input, shape index: {}]
  %s9 = inlined_call_operand.hbm [shape: bf16[512,512], index: 9, kind: input, shape index: {}]
  %s10 = inlined_call_operand.vmem [shape: f32[1,512], index: 10, kind: input, shape index: {}]
  %s11 = inlined_call_operand.hbm [shape: bf16[512,128], index: 11, kind: input, shape index: {}]
  %s12 = inlined_call_operand.vmem [shape: f32[1,128], index: 12, kind: input, shape index: {}]
  %s13 = inlined_call_operand.vmem [shape: f32[8,128], index: 13, kind: output, shape index: {}]
  %s14 = sld [smem:[#allocation0]]
  $region82: #{actor_one_step_policy.1} parent=0
    _
  %s16 = ssub.s32 1, %s14
  %s17 = scalar_select 0, %s16, %s14
  $region1: #{actor_one_step_policy.1} parent=0
    #allocation2 [shape = 'u8[24576]{0}', space=vmem, size = 0x6000, scoped, tag = 'input window, operand 2, single buffered']
    #allocation3 [shape = 's32[1]{0}', space=sflag, size = 0x4, scoped, tag = 'scoped memory for actor_one_step_policy.1']
    #allocation4 [shape = 'u8[524288]{0}', space=vmem, size = 0x80000, scoped, tag = 'input window, operand 5, single buffered']
    #allocation5 [shape = 's32[1]{0}', space=sflag, size = 0x4, scoped, tag = 'scoped memory for actor_one_step_policy.1']
    #allocation6 [shape = 'u8[524288]{0}', space=vmem, size = 0x80000, scoped, tag = 'input window, operand 7, single buffered']
    #allocation7 [shape = 'u8[524288]{0}', space=vmem, size = 0x80000, scoped, tag = 'input window, operand 9, single buffered']
    #allocation8 [shape = 's32[1]{0}', space=sflag, size = 0x4, scoped, tag = 'scoped memory for actor_one_step_policy.1']
    #allocation9 [shape = 'u8[131072]{0}', space=vmem, size = 0x20000, scoped, tag = 'input window, operand 11, single buffered']
    %18 = vsyncpa [#allocation3], 0
    %19 = vsyncpa [#allocation5], 0
    %20 = vsyncpa [#allocation8], 0
    // Predicated region
    $region2: #{actor_one_step_policy.1} parent=1 // pred_check
      _
    $region3: #{actor_one_step_policy.1} parent=1 // pred_check_branch
      %22 = sbr.rel (0) target = $region5
    $region4: #{actor_one_step_policy.1} parent=1 // pred_region
      _
    $region5: #{actor_one_step_policy.1} parent=1 // pred_fallthru
      _
    // Predicated region
    $region6: #{actor_one_step_policy.1} parent=1 // pred_check
      _
    $region7: #{actor_one_step_policy.1} parent=1 // pred_check_branch
      %24 = sbr.rel (0) target = $region9
    $region8: #{actor_one_step_policy.1} parent=1 // pred_region
      _
    $region9: #{actor_one_step_policy.1} parent=1 // pred_fallthru
      _
    // Predicated region
    $region10: #{actor_one_step_policy.1} parent=1 // pred_check
      _
    $region11: #{actor_one_step_policy.1} parent=1 // pred_check_branch
      %26 = sbr.rel (0) target = $region13
    $region12: #{actor_one_step_policy.1} parent=1 // pred_region
      %s28 = ssub.s32 768, 768
      %29 = vsyncadd [#allocation3], %s28
      %s30 = sshll.u32 [#allocation2], 4
      %s31 = int_to_ptr.vmem [resolvable:$true] %s30
      %36 = dma.hbm_to_vmem [thread:$0]  %s2, 768, %s31, [#allocation3], 256, 256, 16
    $region13: #{actor_one_step_policy.1} parent=1 // pred_fallthru
      _
    // Predicated region
    $region14: #{actor_one_step_policy.1} parent=1 // pred_check
      _
    $region15: #{actor_one_step_policy.1} parent=1 // pred_check_branch
      %38 = sbr.rel (0) target = $region17
    $region16: #{actor_one_step_policy.1} parent=1 // pred_region
      _
    $region17: #{actor_one_step_policy.1} parent=1 // pred_fallthru
      _
    // Predicated region
    $region18: #{actor_one_step_policy.1} parent=1 // pred_check
      _
    $region19: #{actor_one_step_policy.1} parent=1 // pred_check_branch
      %40 = sbr.rel (0) target = $region21
    $region20: #{actor_one_step_policy.1} parent=1 // pred_region
      _
    $region21: #{actor_one_step_policy.1} parent=1 // pred_fallthru
      _
    // Predicated region
    $region22: #{actor_one_step_policy.1} parent=1 // pred_check
      _
    $region23: #{actor_one_step_policy.1} parent=1 // pred_check_branch
      %42 = sbr.rel (0) target = $region25
    $region24: #{actor_one_step_policy.1} parent=1 // pred_region
      %s44 = ssub.s32 16384, 16384
      %45 = vsyncadd [#allocation5], %s44
      %s46 = sshll.u32 [#allocation4], 4
      %s47 = int_to_ptr.vmem [resolvable:$true] %s46
      %52 = dma.hbm_to_vmem [thread:$0]  %s5, 16384, %s47, [#allocation5], 256, 256, 16
    $region25: #{actor_one_step_policy.1} parent=1 // pred_fallthru
      _
    // Predicated region
    $region26: #{actor_one_step_policy.1} parent=1 // pred_check
      _
    $region27: #{actor_one_step_policy.1} parent=1 // pred_check_branch
      %54 = sbr.rel (0) target = $region29
    $region28: #{actor_one_step_policy.1} parent=1 // pred_region
      _
    $region29: #{actor_one_step_policy.1} parent=1 // pred_fallthru
      _
    // Predicated region
    $region30: #{actor_one_step_policy.1} parent=1 // pred_check
      _
    $region31: #{actor_one_step_policy.1} parent=1 // pred_check_branch
      %56 = sbr.rel (0) target = $region33
    $region32: #{actor_one_step_policy.1} parent=1 // pred_region
      %s58 = ssub.s32 16384, 16384
      %59 = vsyncadd [#allocation5], %s58
      %s60 = sshll.u32 [#allocation6], 4
      %s61 = int_to_ptr.vmem [resolvable:$true] %s60
      %66 = dma.hbm_to_vmem [thread:$0]  %s7, 16384, %s61, [#allocation5], 256, 256, 16
    $region33: #{actor_one_step_policy.1} parent=1 // pred_fallthru
      _
    // Predicated region
    $region34: #{actor_one_step_policy.1} parent=1 // pred_check
      _
    $region35: #{actor_one_step_policy.1} parent=1 // pred_check_branch
      %68 = sbr.rel (0) target = $region37
    $region36: #{actor_one_step_policy.1} parent=1 // pred_region
      _
    $region37: #{actor_one_step_policy.1} parent=1 // pred_fallthru
      _
    // Predicated region
    $region38: #{actor_one_step_policy.1} parent=1 // pred_check
      _
    $region39: #{actor_one_step_policy.1} parent=1 // pred_check_branch
      %70 = sbr.rel (0) target = $region41
    $region40: #{actor_one_step_policy.1} parent=1 // pred_region
      %s72 = ssub.s32 16384, 16384
      %73 = vsyncadd [#allocation8], %s72
      %s74 = sshll.u32 [#allocation7], 4
      %s75 = int_to_ptr.vmem [resolvable:$true] %s74
      %80 = dma.hbm_to_vmem [thread:$0]  %s9, 16384, %s75, [#allocation8], 256, 256, 16
    $region41: #{actor_one_step_policy.1} parent=1 // pred_fallthru
      _
    // Predicated region
    $region42: #{actor_one_step_policy.1} parent=1 // pred_check
      _
    $region43: #{actor_one_step_policy.1} parent=1 // pred_check_branch
      %82 = sbr.rel (0) target = $region45
    $region44: #{actor_one_step_policy.1} parent=1 // pred_region
      _
    $region45: #{actor_one_step_policy.1} parent=1 // pred_fallthru
      _
    // Predicated region
    $region46: #{actor_one_step_policy.1} parent=1 // pred_check
      _
    $region47: #{actor_one_step_policy.1} parent=1 // pred_check_branch
      %84 = sbr.rel (0) target = $region49
    $region48: #{actor_one_step_policy.1} parent=1 // pred_region
      %s86 = ssub.s32 4096, 4096
      %87 = vsyncadd [#allocation8], %s86
      %s88 = sshll.u32 [#allocation9], 4
      %s89 = int_to_ptr.vmem [resolvable:$true] %s88
      %94 = dma.hbm_to_vmem [thread:$0]  %s11, 4096, %s89, [#allocation8], 64, 64, 4
    $region49: #{actor_one_step_policy.1} parent=1 // pred_fallthru
      _
    // Predicated region
    $region50: #{actor_one_step_policy.1} parent=1 // pred_check
      _
    $region51: #{actor_one_step_policy.1} parent=1 // pred_check_branch
      %96 = sbr.rel (0) target = $region53
    $region52: #{actor_one_step_policy.1} parent=1 // pred_region
      _
    $region53: #{actor_one_step_policy.1} parent=1 // pred_fallthru
      _
    // Predicated region
    $region54: #{actor_one_step_policy.1} parent=1 // pred_check
      _
    $region55: #{actor_one_step_policy.1} parent=1 // pred_check_branch
      %98 = sbr.rel (0) target = $region57
    $region56: #{actor_one_step_policy.1} parent=1 // pred_region
      %99 = dma.done [#allocation3], 768
    $region57: #{actor_one_step_policy.1} parent=1 // pred_fallthru
      _
    // Predicated region
    $region58: #{actor_one_step_policy.1} parent=1 // pred_check
      _
    $region59: #{actor_one_step_policy.1} parent=1 // pred_check_branch
      %101 = sbr.rel (0) target = $region61
    $region60: #{actor_one_step_policy.1} parent=1 // pred_region
      %102 = dma.done [#allocation5], 16384
    $region61: #{actor_one_step_policy.1} parent=1 // pred_fallthru
      _
    // Predicated region
    $region62: #{actor_one_step_policy.1} parent=1 // pred_check
      _
    $region63: #{actor_one_step_policy.1} parent=1 // pred_check_branch
      %104 = sbr.rel (0) target = $region65
    $region64: #{actor_one_step_policy.1} parent=1 // pred_region
      %105 = dma.done [#allocation5], 16384
    $region65: #{actor_one_step_policy.1} parent=1 // pred_fallthru
      _
    // Predicated region
    $region66: #{actor_one_step_policy.1} parent=1 // pred_check
      _
    $region67: #{actor_one_step_policy.1} parent=1 // pred_check_branch
      %107 = sbr.rel (0) target = $region69
    $region68: #{actor_one_step_policy.1} parent=1 // pred_region
      %108 = dma.done [#allocation8], 16384
    $region69: #{actor_one_step_policy.1} parent=1 // pred_fallthru
      _
    // Predicated region
    $region70: #{actor_one_step_policy.1} parent=1 // pred_check
      _
    $region71: #{actor_one_step_policy.1} parent=1 // pred_check_branch
      %110 = sbr.rel (0) target = $region73
    $region72: #{actor_one_step_policy.1} parent=1 // pred_region
      %111 = dma.done [#allocation8], 4096
    $region73: #{actor_one_step_policy.1} parent=1 // pred_fallthru
      _
    %v113 = vld [vmem:[%s0] sm:$0xff]
    %v114 = vpack.c.bf16 %v113, %v113
    %v115 = vld [vmem:[%s1] sm:$0xff]
    %v116 = vpack.c.bf16 %v115, %v115
    %v117 = vld [vmem:[#allocation2] sm:$0xff]
    %v118 = vld [vmem:[#allocation2 + $0x8] sm:$0xff]
    %v119 = vld [vmem:[#allocation2 + $0x10] sm:$0xff]
    %v120 = vld [vmem:[#allocation2 + $0x18] sm:$0xff]
    %v121 = vld [vmem:[#allocation2 + $0x20] sm:$0xff]
    %v122 = vld [vmem:[#allocation2 + $0x28] sm:$0xff]
    %v123 = vld [vmem:[%s3] sm:$0xff]
    %v124 = vld [vmem:[%s3 + $0x8] sm:$0xff]
    %v127 = vunpack.c.l.b16 %v123
    %v128 = vunpack.c.h.b16 %v123
    %v129 = vunpack.c.l.b16 %v124
    %v130 = vunpack.c.h.b16 %v124
    %v131 = vpack.c.b16 %v127, %v127
    %v132 = vpack.c.b16 %v128, %v128
    %v133 = vpack.c.b16 %v129, %v129
    %v134 = vpack.c.b16 %v130, %v130
    %vm135 = vcmask 64512
    %v137 = vsel %vm135, %v116, 0
    %vm139 = vcmask 1043456
    %v141 = vsel %vm139, %v131, 0
    %v144 = vsel %vm139, %v132, 0
    %v147 = vsel %vm139, %v133, 0
    %v150 = vsel %vm139, %v134, 0
    %152 = vmatprep.subr.bf16.mxu0 0
    %153 = vmatpush1.bf16.msra.mxu0 0
    %154 = vmatprep.subr.bf16.mxu0 0
    %155 = vmatpush1.bf16.msra.mxu0 0
    %156 = vmatprep.subr.bf16.mxu0 0
    %157 = vmatpush1.bf16.msra.mxu0 0
    %158 = vmatprep.subr.bf16.mxu0 0
    %159 = vmatpush1.bf16.msra.mxu0 0
    %160 = vmatprep.subr.bf16.mxu0 0
    %161 = vmatpush1.bf16.msra.mxu0 0
    %162 = vmatprep.subr.bf16.mxu0 0
    %163 = vmatpush1.bf16.msra.mxu0 0
    %164 = vmatprep.subr.bf16.mxu0 0
    %165 = vmatpush1.bf16.msra.mxu0 0
    %166 = vmatprep.subr.bf16.mxu0 %v144
    %167 = vmatpush1.bf16.msra.mxu0 %v141
    %168 = vmatprep.subr.bf16.mxu0 0
    %169 = vmatpush2.bf16.msra.mxu0 0
    %170 = vmatprep.subr.bf16.mxu0 0
    %171 = vmatpush2.bf16.msra.mxu0 0
    %172 = vmatprep.subr.bf16.mxu0 0
    %173 = vmatpush2.bf16.msra.mxu0 0
    %174 = vmatprep.subr.bf16.mxu0 0
    %175 = vmatpush2.bf16.msra.mxu0 0
    %176 = vmatprep.subr.bf16.mxu0 0
    %177 = vmatpush2.bf16.msra.mxu0 0
    %178 = vmatprep.subr.bf16.mxu0 0
    %179 = vmatpush2.bf16.msra.mxu0 0
    %180 = vmatprep.subr.bf16.mxu0 0
    %181 = vmatpush2.bf16.msra.mxu0 0
    %182 = vmatprep.subr.bf16.mxu0 0
    %183 = vmatpush2.bf16.msra.mxu0 0
    %184 = vmatprep.mubr.bf16.mxu0 0
    %185 = vmatmul.mubr.bf16.gmra.mxu0 %v137
    %v186 = vpop.f32.mrf.mxu0
    %v187 = vadd.f32 0.0, %v186
    %v188 = vpop.f32.mrf.mxu0
    %v189 = vadd.f32 0.0, %v188
    %v190 = vpop.f32.mrf.mxu0
    %v191 = vpop.f32.mrf.mxu0
    %192 = vdwg.mxu0
    %193 = vmatprep.subr.bf16.mxu0 0
    %194 = vmatpush1.bf16.msra.mxu0 0
    %195 = vmatprep.subr.bf16.mxu0 0
    %196 = vmatpush1.bf16.msra.mxu0 0
    %197 = vmatprep.subr.bf16.mxu0 0
    %198 = vmatpush1.bf16.msra.mxu0 0
    %199 = vmatprep.subr.bf16.mxu0 0
    %200 = vmatpush1.bf16.msra.mxu0 0
    %201 = vmatprep.subr.bf16.mxu0 0
    %202 = vmatpush1.bf16.msra.mxu0 0
    %203 = vmatprep.subr.bf16.mxu0 0
    %204 = vmatpush1.bf16.msra.mxu0 0
    %205 = vmatprep.subr.bf16.mxu0 0
    %206 = vmatpush1.bf16.msra.mxu0 0
    %207 = vmatprep.subr.bf16.mxu0 %v150
    %208 = vmatpush1.bf16.msra.mxu0 %v147
    %209 = vmatprep.subr.bf16.mxu0 0
    %210 = vmatpush2.bf16.msra.mxu0 0
    %211 = vmatprep.subr.bf16.mxu0 0
    %212 = vmatpush2.bf16.msra.mxu0 0
    %213 = vmatprep.subr.bf16.mxu0 0
    %214 = vmatpush2.bf16.msra.mxu0 0
    %215 = vmatprep.subr.bf16.mxu0 0
    %216 = vmatpush2.bf16.msra.mxu0 0
    %217 = vmatprep.subr.bf16.mxu0 0
    %218 = vmatpush2.bf16.msra.mxu0 0
    %219 = vmatprep.subr.bf16.mxu0 0
    %220 = vmatpush2.bf16.msra.mxu0 0
    %221 = vmatprep.subr.bf16.mxu0 0
    %222 = vmatpush2.bf16.msra.mxu0 0
    %223 = vmatprep.subr.bf16.mxu0 0
    %224 = vmatpush2.bf16.msra.mxu0 0
    %225 = vmatprep.mubr.bf16.mxu0 0
    %226 = vmatmul.mubr.bf16.gmra.mxu0 %v137
    %v227 = vpop.f32.mrf.mxu0
    %v228 = vadd.f32 0.0, %v227
    %v229 = vpop.f32.mrf.mxu0
    %v230 = vadd.f32 0.0, %v229
    %v231 = vpop.f32.mrf.mxu0
    %v232 = vpop.f32.mrf.mxu0
    %233 = vdwg.mxu0
    %v240 = vunpack.c.l.b16 %v117
    %v241 = vunpack.c.h.b16 %v117
    %v242 = vunpack.c.l.b16 %v118
    %v243 = vunpack.c.h.b16 %v118
    %v244 = vunpack.c.l.b16 %v119
    %v245 = vunpack.c.h.b16 %v119
    %v246 = vunpack.c.l.b16 %v120
    %v247 = vunpack.c.h.b16 %v120
    %v248 = vunpack.c.l.b16 %v121
    %v249 = vunpack.c.h.b16 %v121
    %v250 = vunpack.c.l.b16 %v122
    %v251 = vunpack.c.h.b16 %v122
    %v252 = vpack.c.b16 %v244, %v240
    %v253 = vpack.c.b16 %v245, %v241
    %v254 = vpack.c.b16 %v246, %v242
    %v255 = vpack.c.b16 %v247, %v243
    %v256 = vpack.c.b16 %v248, %v248
    %v257 = vpack.c.b16 %v249, %v249
    %v258 = vpack.c.b16 %v250, %v250
    %v259 = vpack.c.b16 %v251, %v251
    %vm264 = vcmask 195584
    %v266 = vsel %vm264, %v114, 0
    %v269 = vsel %vm139, %v256, 0
    %v272 = vsel %vm139, %v257, 0
    %v275 = vsel %vm139, %v258, 0
    %v278 = vsel %vm139, %v259, 0
    %280 = vmatprep.subr.bf16.mxu0 0
    %281 = vmatpush1.bf16.msra.mxu0 0
    %282 = vmatprep.subr.bf16.mxu0 0
    %283 = vmatpush1.bf16.msra.mxu0 0
    %284 = vmatprep.subr.bf16.mxu0 0
    %285 = vmatpush1.bf16.msra.mxu0 0
    %286 = vmatprep.subr.bf16.mxu0 0
    %287 = vmatpush1.bf16.msra.mxu0 0
    %288 = vmatprep.subr.bf16.mxu0 0
    %289 = vmatpush1.bf16.msra.mxu0 0
    %290 = vmatprep.subr.bf16.mxu0 0
    %291 = vmatpush1.bf16.msra.mxu0 0
    %292 = vmatprep.subr.bf16.mxu0 %v272
    %293 = vmatpush1.bf16.msra.mxu0 %v269
    %294 = vmatprep.subr.bf16.mxu0 %v253
    %295 = vmatpush1.bf16.msra.mxu0 %v252
    %296 = vmatprep.subr.bf16.mxu0 0
    %297 = vmatpush2.bf16.msra.mxu0 0
    %298 = vmatprep.subr.bf16.mxu0 0
    %299 = vmatpush2.bf16.msra.mxu0 0
    %300 = vmatprep.subr.bf16.mxu0 0
    %301 = vmatpush2.bf16.msra.mxu0 0
    %302 = vmatprep.subr.bf16.mxu0 0
    %303 = vmatpush2.bf16.msra.mxu0 0
    %304 = vmatprep.subr.bf16.mxu0 0
    %305 = vmatpush2.bf16.msra.mxu0 0
    %306 = vmatprep.subr.bf16.mxu0 0
    %307 = vmatpush2.bf16.msra.mxu0 0
    %308 = vmatprep.subr.bf16.mxu0 0
    %309 = vmatpush2.bf16.msra.mxu0 0
    %310 = vmatprep.subr.bf16.mxu0 0
    %311 = vmatpush2.bf16.msra.mxu0 0
    %312 = vmatprep.mubr.bf16.mxu0 0
    %313 = vmatmul.mubr.bf16.gmra.mxu0 %v266
    %v314 = vpop.f32.mrf.mxu0
    %v315 = vadd.f32 %v187, %v314
    %v316 = vpop.f32.mrf.mxu0
    %v317 = vadd.f32 %v189, %v316
    %v318 = vpop.f32.mrf.mxu0
    %v319 = vpop.f32.mrf.mxu0
    %320 = vdwg.mxu0
    %321 = vmatprep.subr.bf16.mxu0 0
    %322 = vmatpush1.bf16.msra.mxu0 0
    %323 = vmatprep.subr.bf16.mxu0 0
    %324 = vmatpush1.bf16.msra.mxu0 0
    %325 = vmatprep.subr.bf16.mxu0 0
    %326 = vmatpush1.bf16.msra.mxu0 0
    %327 = vmatprep.subr.bf16.mxu0 0
    %328 = vmatpush1.bf16.msra.mxu0 0
    %329 = vmatprep.subr.bf16.mxu0 0
    %330 = vmatpush1.bf16.msra.mxu0 0
    %331 = vmatprep.subr.bf16.mxu0 0
    %332 = vmatpush1.bf16.msra.mxu0 0
    %333 = vmatprep.subr.bf16.mxu0 %v278
    %334 = vmatpush1.bf16.msra.mxu0 %v275
    %335 = vmatprep.subr.bf16.mxu0 %v255
    %336 = vmatpush1.bf16.msra.mxu0 %v254
    %337 = vmatprep.subr.bf16.mxu0 0
    %338 = vmatpush2.bf16.msra.mxu0 0
    %339 = vmatprep.subr.bf16.mxu0 0
    %340 = vmatpush2.bf16.msra.mxu0 0
    %341 = vmatprep.subr.bf16.mxu0 0
    %342 = vmatpush2.bf16.msra.mxu0 0
    %343 = vmatprep.subr.bf16.mxu0 0
    %344 = vmatpush2.bf16.msra.mxu0 0
    %345 = vmatprep.subr.bf16.mxu0 0
    %346 = vmatpush2.bf16.msra.mxu0 0
    %347 = vmatprep.subr.bf16.mxu0 0
    %348 = vmatpush2.bf16.msra.mxu0 0
    %349 = vmatprep.subr.bf16.mxu0 0
    %350 = vmatpush2.bf16.msra.mxu0 0
    %351 = vmatprep.subr.bf16.mxu0 0
    %352 = vmatpush2.bf16.msra.mxu0 0
    %353 = vmatprep.mubr.bf16.mxu0 0
    %354 = vmatmul.mubr.bf16.gmra.mxu0 %v266
    %v355 = vpop.f32.mrf.mxu0
    %v356 = vadd.f32 %v228, %v355
    %v357 = vpop.f32.mrf.mxu0
    %v358 = vadd.f32 %v230, %v357
    %v359 = vpop.f32.mrf.mxu0
    %v360 = vpop.f32.mrf.mxu0
    %361 = vdwg.mxu0
    %v362 = vld [vmem:[%s4] sm:$0xf]
    %v364 = vlaneseq
    %v365 = vshrl.u32 %v364, 7
    %v366 = vsub.s32 0, %v365
    %v367 = vrot.slane %v362, %v366
    %v368 = vlaneseq
    %v369 = vshrl.u32 %v368, 7
    %v370 = vsub.s32 1, %v369
    %v371 = vrot.slane %v362, %v370
    %v372 = vlaneseq
    %v373 = vshrl.u32 %v372, 7
    %v374 = vsub.s32 2, %v373
    %v375 = vrot.slane %v362, %v374
    %v376 = vlaneseq
    %v377 = vshrl.u32 %v376, 7
    %v378 = vsub.s32 3, %v377
    %v379 = vrot.slane %v362, %v378
    %v384 = vadd.f32 %v315, %v367
    %v385 = vadd.f32 %v317, %v371
    %v386 = vadd.f32 %v356, %v375
    %v387 = vadd.f32 %v358, %v379
    %v388 = vmul.f32 %v384, 0.5
    %v389 = vmul.f32 %v385, 0.5
    %v390 = vmul.f32 %v386, 0.5
    %v391 = vmul.f32 %v387, 0.5
    %v392 = vmul.f32 %v384, 0.70710677
    %v393 = vmul.f32 %v385, 0.70710677
    %v394 = vmul.f32 %v386, 0.70710677
    %v395 = vmul.f32 %v387, 0.70710677
    %vm396 = vcmp.lt.f32.partialorder %v392, 0.0
    %vm397 = vcmp.lt.f32.partialorder %v393, 0.0
    %vm398 = vcmp.lt.f32.partialorder %v394, 0.0
    %vm399 = vcmp.lt.f32.partialorder %v395, 0.0
    %v400 = vsel %vm396, -1.0, 1.0
    %v401 = vsel %vm397, -1.0, 1.0
    %v402 = vsel %vm398, -1.0, 1.0
    %v403 = vsel %vm399, -1.0, 1.0
    %v404 = vand.u32 2147483647, %v392
    %v405 = vand.u32 2147483647, %v393
    %v406 = vand.u32 2147483647, %v394
    %v407 = vand.u32 2147483647, %v395
    %v408 = vmul.f32 %v404, 0.3275911
    %v409 = vmul.f32 %v405, 0.3275911
    %v410 = vmul.f32 %v406, 0.3275911
    %v411 = vmul.f32 %v407, 0.3275911
    %v412 = vadd.f32 %v408, 1.0
    %v413 = vadd.f32 %v409, 1.0
    %v414 = vadd.f32 %v410, 1.0
    %v415 = vadd.f32 %v411, 1.0
    %v416 = vrcp.pop %v412
    %v417 = vmul.f32 1.0, %v416
    %v418 = vrcp.pop %v413
    %v419 = vmul.f32 1.0, %v418
    %v420 = vrcp.pop %v414
    %v421 = vmul.f32 1.0, %v420
    %v422 = vrcp.pop %v415
    %v423 = vmul.f32 1.0, %v422
    %v424 = vmul.f32 %v417, 1.0614054
    %v425 = vmul.f32 %v419, 1.0614054
    %v426 = vmul.f32 %v421, 1.0614054
    %v427 = vmul.f32 %v423, 1.0614054
    %v428 = vadd.f32 %v424, -1.4531521
    %v429 = vadd.f32 %v425, -1.4531521
    %v430 = vadd.f32 %v426, -1.4531521
    %v431 = vadd.f32 %v427, -1.4531521
    %v432 = vmul.f32 %v428, %v417
    %v433 = vmul.f32 %v429, %v419
    %v434 = vmul.f32 %v430, %v421
    %v435 = vmul.f32 %v431, %v423
    %v436 = vadd.f32 %v432, 1.4214138
    %v437 = vadd.f32 %v433, 1.4214138
    %v438 = vadd.f32 %v434, 1.4214138
    %v439 = vadd.f32 %v435, 1.4214138
    %v440 = vmul.f32 %v436, %v417
    %v441 = vmul.f32 %v437, %v419
    %v442 = vmul.f32 %v438, %v421
    %v443 = vmul.f32 %v439, %v423
    %v444 = vadd.f32 %v440, -0.28449672
    %v445 = vadd.f32 %v441, -0.28449672
    %v446 = vadd.f32 %v442, -0.28449672
    %v447 = vadd.f32 %v443, -0.28449672
    %v448 = vmul.f32 %v444, %v417
    %v449 = vmul.f32 %v445, %v419
    %v450 = vmul.f32 %v446, %v421
    %v451 = vmul.f32 %v447, %v423
    %v452 = vadd.f32 %v448, 0.2548296
    %v453 = vadd.f32 %v449, 0.2548296
    %v454 = vadd.f32 %v450, 0.2548296
    %v455 = vadd.f32 %v451, 0.2548296
    %v456 = vmul.f32 %v452, %v417
    %v457 = vmul.f32 %v453, %v419
    %v458 = vmul.f32 %v454, %v421
    %v459 = vmul.f32 %v455, %v423
    %v460 = vsub.f32 0.0, %v404
    %v461 = vsub.f32 0.0, %v405
    %v462 = vsub.f32 0.0, %v406
    %v463 = vsub.f32 0.0, %v407
    %v464 = vmul.f32 %v460, %v404
    %v465 = vmul.f32 %v461, %v405
    %v466 = vmul.f32 %v462, %v406
    %v467 = vmul.f32 %v463, %v407
    %v468 = vmul.f32 %v464, 1.442695
    %v469 = vpow.pop %v468
    %v470 = vmul.f32 %v465, 1.442695
    %v471 = vpow.pop %v470
    %v472 = vmul.f32 %v466, 1.442695
    %v473 = vpow.pop %v472
    %v474 = vmul.f32 %v467, 1.442695
    %v475 = vpow.pop %v474
    %v476 = vmul.f32 %v456, %v469
    %v477 = vmul.f32 %v457, %v471
    %v478 = vmul.f32 %v458, %v473
    %v479 = vmul.f32 %v459, %v475
    %v480 = vsub.f32 1.0, %v476
    %v481 = vsub.f32 1.0, %v477
    %v482 = vsub.f32 1.0, %v478
    %v483 = vsub.f32 1.0, %v479
    %v484 = vmul.f32 %v400, %v480
    %v485 = vmul.f32 %v401, %v481
    %v486 = vmul.f32 %v402, %v482
    %v487 = vmul.f32 %v403, %v483
    %v488 = vadd.f32 %v484, 1.0
    %v489 = vadd.f32 %v485, 1.0
    %v490 = vadd.f32 %v486, 1.0
    %v491 = vadd.f32 %v487, 1.0
    %v492 = vmul.f32 %v388, %v488
    %v493 = vmul.f32 %v389, %v489
    %v494 = vmul.f32 %v390, %v490
    %v495 = vmul.f32 %v391, %v491
    %v496 = vpack.c.bf16 %v492, %v492
    %v497 = vpack.c.bf16 %v493, %v493
    %v498 = vpack.c.bf16 %v494, %v494
    %v499 = vpack.c.bf16 %v495, %v495
    %v500 = vld [vmem:[#allocation4] sm:$0xff]
    %v501 = vld [vmem:[#allocation4 + $0x8] sm:$0xff]
    %v502 = vld [vmem:[#allocation4 + $0x10] sm:$0xff]
    %v503 = vld [vmem:[#allocation4 + $0x18] sm:$0xff]
    %v504 = vld [vmem:[#allocation4 + $0x20] sm:$0xff]
    %v505 = vld [vmem:[#allocation4 + $0x28] sm:$0xff]
    %v506 = vld [vmem:[#allocation4 + $0x30] sm:$0xff]
    %v507 = vld [vmem:[#allocation4 + $0x38] sm:$0xff]
    %v508 = vld [vmem:[#allocation4 + $0x40] sm:$0xff]
    %v509 = vld [vmem:[#allocation4 + $0x48] sm:$0xff]
    %v510 = vld [vmem:[#allocation4 + $0x50] sm:$0xff]
    %v511 = vld [vmem:[#allocation4 + $0x58] sm:$0xff]
    %v512 = vld [vmem:[#allocation4 + $0x60] sm:$0xff]
    %v513 = vld [vmem:[#allocation4 + $0x68] sm:$0xff]
    %v514 = vld [vmem:[#allocation4 + $0x70] sm:$0xff]
    %v515 = vld [vmem:[#allocation4 + $0x78] sm:$0xff]
    %v516 = vld [vmem:[#allocation4 + $0x80] sm:$0xff]
    %v517 = vld [vmem:[#allocation4 + $0x88] sm:$0xff]
    %v518 = vld [vmem:[#allocation4 + $0x90] sm:$0xff]
    %v519 = vld [vmem:[#allocation4 + $0x98] sm:$0xff]
    %v520 = vld [vmem:[#allocation4 + $0xa0] sm:$0xff]
    %v521 = vld [vmem:[#allocation4 + $0xa8] sm:$0xff]
    %v522 = vld [vmem:[#allocation4 + $0xb0] sm:$0xff]
    %v523 = vld [vmem:[#allocation4 + $0xb8] sm:$0xff]
    %v524 = vld [vmem:[#allocation4 + $0xc0] sm:$0xff]
    %v525 = vld [vmem:[#allocation4 + $0xc8] sm:$0xff]
    %v526 = vld [vmem:[#allocation4 + $0xd0] sm:$0xff]
    %v527 = vld [vmem:[#allocation4 + $0xd8] sm:$0xff]
    %v528 = vld [vmem:[#allocation4 + $0xe0] sm:$0xff]
    %v529 = vld [vmem:[#allocation4 + $0xe8] sm:$0xff]
    %v530 = vld [vmem:[#allocation4 + $0xf0] sm:$0xff]
    %v531 = vld [vmem:[#allocation4 + $0xf8] sm:$0xff]
    %v532 = vld [vmem:[#allocation4 + $0x100] sm:$0xff]
    %v533 = vld [vmem:[#allocation4 + $0x108] sm:$0xff]
    %v534 = vld [vmem:[#allocation4 + $0x110] sm:$0xff]
    %v535 = vld [vmem:[#allocation4 + $0x118] sm:$0xff]
    %v536 = vld [vmem:[#allocation4 + $0x120] sm:$0xff]
    %v537 = vld [vmem:[#allocation4 + $0x128] sm:$0xff]
    %v538 = vld [vmem:[#allocation4 + $0x130] sm:$0xff]
    %v539 = vld [vmem:[#allocation4 + $0x138] sm:$0xff]
    %v540 = vld [vmem:[#allocation4 + $0x140] sm:$0xff]
    %v541 = vld [vmem:[#allocation4 + $0x148] sm:$0xff]
    %v542 = vld [vmem:[#allocation4 + $0x150] sm:$0xff]
    %v543 = vld [vmem:[#allocation4 + $0x158] sm:$0xff]
    %v544 = vld [vmem:[#allocation4 + $0x160] sm:$0xff]
    %v545 = vld [vmem:[#allocation4 + $0x168] sm:$0xff]
    %v546 = vld [vmem:[#allocation4 + $0x170] sm:$0xff]
    %v547 = vld [vmem:[#allocation4 + $0x178] sm:$0xff]
    %v548 = vld [vmem:[#allocation4 + $0x180] sm:$0xff]
    %v549 = vld [vmem:[#allocation4 + $0x188] sm:$0xff]
    %v550 = vld [vmem:[#allocation4 + $0x190] sm:$0xff]
    %v551 = vld [vmem:[#allocation4 + $0x198] sm:$0xff]
    %v552 = vld [vmem:[#allocation4 + $0x1a0] sm:$0xff]
    %v553 = vld [vmem:[#allocation4 + $0x1a8] sm:$0xff]
    %v554 = vld [vmem:[#allocation4 + $0x1b0] sm:$0xff]
    %v555 = vld [vmem:[#allocation4 + $0x1b8] sm:$0xff]
    %v556 = vld [vmem:[#allocation4 + $0x1c0] sm:$0xff]
    %v557 = vld [vmem:[#allocation4 + $0x1c8] sm:$0xff]
    %v558 = vld [vmem:[#allocation4 + $0x1d0] sm:$0xff]
    %v559 = vld [vmem:[#allocation4 + $0x1d8] sm:$0xff]
    %v560 = vld [vmem:[#allocation4 + $0x1e0] sm:$0xff]
    %v561 = vld [vmem:[#allocation4 + $0x1e8] sm:$0xff]
    %v562 = vld [vmem:[#allocation4 + $0x1f0] sm:$0xff]
    %v563 = vld [vmem:[#allocation4 + $0x1f8] sm:$0xff]
    %v564 = vld [vmem:[#allocation4 + $0x200] sm:$0xff]
    %v565 = vld [vmem:[#allocation4 + $0x208] sm:$0xff]
    %v566 = vld [vmem:[#allocation4 + $0x210] sm:$0xff]
    %v567 = vld [vmem:[#allocation4 + $0x218] sm:$0xff]
    %v568 = vld [vmem:[#allocation4 + $0x220] sm:$0xff]
    %v569 = vld [vmem:[#allocation4 + $0x228] sm:$0xff]
    %v570 = vld [vmem:[#allocation4 + $0x230] sm:$0xff]
    %v571 = vld [vmem:[#allocation4 + $0x238] sm:$0xff]
    %v572 = vld [vmem:[#allocation4 + $0x240] sm:$0xff]
    %v573 = vld [vmem:[#allocation4 + $0x248] sm:$0xff]
    %v574 = vld [vmem:[#allocation4 + $0x250] sm:$0xff]
    %v575 = vld [vmem:[#allocation4 + $0x258] sm:$0xff]
    %v576 = vld [vmem:[#allocation4 + $0x260] sm:$0xff]
    %v577 = vld [vmem:[#allocation4 + $0x268] sm:$0xff]
    %v578 = vld [vmem:[#allocation4 + $0x270] sm:$0xff]
    %v579 = vld [vmem:[#allocation4 + $0x278] sm:$0xff]
    %v580 = vld [vmem:[#allocation4 + $0x280] sm:$0xff]
    %v581 = vld [vmem:[#allocation4 + $0x288] sm:$0xff]
    %v582 = vld [vmem:[#allocation4 + $0x290] sm:$0xff]
    %v583 = vld [vmem:[#allocation4 + $0x298] sm:$0xff]
    %v584 = vld [vmem:[#allocation4 + $0x2a0] sm:$0xff]
    %v585 = vld [vmem:[#allocation4 + $0x2a8] sm:$0xff]
    %v586 = vld [vmem:[#allocation4 + $0x2b0] sm:$0xff]
    %v587 = vld [vmem:[#allocation4 + $0x2b8] sm:$0xff]
    %v588 = vld [vmem:[#allocation4 + $0x2c0] sm:$0xff]
    %v589 = vld [vmem:[#allocation4 + $0x2c8] sm:$0xff]
    %v590 = vld [vmem:[#allocation4 + $0x2d0] sm:$0xff]
    %v591 = vld [vmem:[#allocation4 + $0x2d8] sm:$0xff]
    %v592 = vld [vmem:[#allocation4 + $0x2e0] sm:$0xff]
    %v593 = vld [vmem:[#allocation4 + $0x2e8] sm:$0xff]
    %v594 = vld [vmem:[#allocation4 + $0x2f0] sm:$0xff]
    %v595 = vld [vmem:[#allocation4 + $0x2f8] sm:$0xff]
    %v596 = vld [vmem:[#allocation4 + $0x300] sm:$0xff]
    %v597 = vld [vmem:[#allocation4 + $0x308] sm:$0xff]
    %v598 = vld [vmem:[#allocation4 + $0x310] sm:$0xff]
    %v599 = vld [vmem:[#allocation4 + $0x318] sm:$0xff]
    %v600 = vld [vmem:[#allocation4 + $0x320] sm:$0xff]
    %v601 = vld [vmem:[#allocation4 + $0x328] sm:$0xff]
    %v602 = vld [vmem:[#allocation4 + $0x330] sm:$0xff]
    %v603 = vld [vmem:[#allocation4 + $0x338] sm:$0xff]
    %v604 = vld [vmem:[#allocation4 + $0x340] sm:$0xff]
    %v605 = vld [vmem:[#allocation4 + $0x348] sm:$0xff]
    %v606 = vld [vmem:[#allocation4 + $0x350] sm:$0xff]
    %v607 = vld [vmem:[#allocation4 + $0x358] sm:$0xff]
    %v608 = vld [vmem:[#allocation4 + $0x360] sm:$0xff]
    %v609 = vld [vmem:[#allocation4 + $0x368] sm:$0xff]
    %v610 = vld [vmem:[#allocation4 + $0x370] sm:$0xff]
    %v611 = vld [vmem:[#allocation4 + $0x378] sm:$0xff]
    %v612 = vld [vmem:[#allocation4 + $0x380] sm:$0xff]
    %v613 = vld [vmem:[#allocation4 + $0x388] sm:$0xff]
    %v614 = vld [vmem:[#allocation4 + $0x390] sm:$0xff]
    %v615 = vld [vmem:[#allocation4 + $0x398] sm:$0xff]
    %v616 = vld [vmem:[#allocation4 + $0x3a0] sm:$0xff]
    %v617 = vld [vmem:[#allocation4 + $0x3a8] sm:$0xff]
    %v618 = vld [vmem:[#allocation4 + $0x3b0] sm:$0xff]
    %v619 = vld [vmem:[#allocation4 + $0x3b8] sm:$0xff]
    %v620 = vld [vmem:[#allocation4 + $0x3c0] sm:$0xff]
    %v621 = vld [vmem:[#allocation4 + $0x3c8] sm:$0xff]
    %v622 = vld [vmem:[#allocation4 + $0x3d0] sm:$0xff]
    %v623 = vld [vmem:[#allocation4 + $0x3d8] sm:$0xff]
    %v624 = vld [vmem:[#allocation4 + $0x3e0] sm:$0xff]
    %v625 = vld [vmem:[#allocation4 + $0x3e8] sm:$0xff]
    %v626 = vld [vmem:[#allocation4 + $0x3f0] sm:$0xff]
    %v627 = vld [vmem:[#allocation4 + $0x3f8] sm:$0xff]
    %v628 = vld [vmem:[%s6] sm:$0xf]
    %v630 = vlaneseq
    %v631 = vshrl.u32 %v630, 7
    %v632 = vsub.s32 0, %v631
    %v633 = vrot.slane %v628, %v632
    %v634 = vlaneseq
    %v635 = vshrl.u32 %v634, 7
    %v636 = vsub.s32 1, %v635
    %v637 = vrot.slane %v628, %v636
    %v638 = vlaneseq
    %v639 = vshrl.u32 %v638, 7
    %v640 = vsub.s32 2, %v639
    %v641 = vrot.slane %v628, %v640
    %v642 = vlaneseq
    %v643 = vshrl.u32 %v642, 7
    %v644 = vsub.s32 3, %v643
    %v645 = vrot.slane %v628, %v644
    %v778 = vunpack.c.l.b16 %v500
    %v779 = vunpack.c.h.b16 %v500
    %v780 = vunpack.c.l.b16 %v501
    %v781 = vunpack.c.h.b16 %v501
    %v782 = vunpack.c.l.b16 %v502
    %v783 = vunpack.c.h.b16 %v502
    %v784 = vunpack.c.l.b16 %v503
    %v785 = vunpack.c.h.b16 %v503
    %v786 = vunpack.c.l.b16 %v504
    %v787 = vunpack.c.h.b16 %v504
    %v788 = vunpack.c.l.b16 %v505
    %v789 = vunpack.c.h.b16 %v505
    %v790 = vunpack.c.l.b16 %v506
    %v791 = vunpack.c.h.b16 %v506
    %v792 = vunpack.c.l.b16 %v507
    %v793 = vunpack.c.h.b16 %v507
    %v794 = vunpack.c.l.b16 %v508
    %v795 = vunpack.c.h.b16 %v508
    %v796 = vunpack.c.l.b16 %v509
    %v797 = vunpack.c.h.b16 %v509
    %v798 = vunpack.c.l.b16 %v510
    %v799 = vunpack.c.h.b16 %v510
    %v800 = vunpack.c.l.b16 %v511
    %v801 = vunpack.c.h.b16 %v511
    %v802 = vunpack.c.l.b16 %v512
    %v803 = vunpack.c.h.b16 %v512
    %v804 = vunpack.c.l.b16 %v513
    %v805 = vunpack.c.h.b16 %v513
    %v806 = vunpack.c.l.b16 %v514
    %v807 = vunpack.c.h.b16 %v514
    %v808 = vunpack.c.l.b16 %v515
    %v809 = vunpack.c.h.b16 %v515
    %v810 = vunpack.c.l.b16 %v516
    %v811 = vunpack.c.h.b16 %v516
    %v812 = vunpack.c.l.b16 %v517
    %v813 = vunpack.c.h.b16 %v517
    %v814 = vunpack.c.l.b16 %v518
    %v815 = vunpack.c.h.b16 %v518
    %v816 = vunpack.c.l.b16 %v519
    %v817 = vunpack.c.h.b16 %v519
    %v818 = vunpack.c.l.b16 %v520
    %v819 = vunpack.c.h.b16 %v520
    %v820 = vunpack.c.l.b16 %v521
    %v821 = vunpack.c.h.b16 %v521
    %v822 = vunpack.c.l.b16 %v522
    %v823 = vunpack.c.h.b16 %v522
    %v824 = vunpack.c.l.b16 %v523
    %v825 = vunpack.c.h.b16 %v523
    %v826 = vunpack.c.l.b16 %v524
    %v827 = vunpack.c.h.b16 %v524
    %v828 = vunpack.c.l.b16 %v525
    %v829 = vunpack.c.h.b16 %v525
    %v830 = vunpack.c.l.b16 %v526
    %v831 = vunpack.c.h.b16 %v526
    %v832 = vunpack.c.l.b16 %v527
    %v833 = vunpack.c.h.b16 %v527
    %v834 = vunpack.c.l.b16 %v528
    %v835 = vunpack.c.h.b16 %v528
    %v836 = vunpack.c.l.b16 %v529
    %v837 = vunpack.c.h.b16 %v529
    %v838 = vunpack.c.l.b16 %v530
    %v839 = vunpack.c.h.b16 %v530
    %v840 = vunpack.c.l.b16 %v531
    %v841 = vunpack.c.h.b16 %v531
    %v842 = vunpack.c.l.b16 %v532
    %v843 = vunpack.c.h.b16 %v532
    %v844 = vunpack.c.l.b16 %v533
    %v845 = vunpack.c.h.b16 %v533
    %v846 = vunpack.c.l.b16 %v534
    %v847 = vunpack.c.h.b16 %v534
    %v848 = vunpack.c.l.b16 %v535
    %v849 = vunpack.c.h.b16 %v535
    %v850 = vunpack.c.l.b16 %v536
    %v851 = vunpack.c.h.b16 %v536
    %v852 = vunpack.c.l.b16 %v537
    %v853 = vunpack.c.h.b16 %v537
    %v854 = vunpack.c.l.b16 %v538
    %v855 = vunpack.c.h.b16 %v538
    %v856 = vunpack.c.l.b16 %v539
    %v857 = vunpack.c.h.b16 %v539
    %v858 = vunpack.c.l.b16 %v540
    %v859 = vunpack.c.h.b16 %v540
    %v860 = vunpack.c.l.b16 %v541
    %v861 = vunpack.c.h.b16 %v541
    %v862 = vunpack.c.l.b16 %v542
    %v863 = vunpack.c.h.b16 %v542
    %v864 = vunpack.c.l.b16 %v543
    %v865 = vunpack.c.h.b16 %v543
    %v866 = vunpack.c.l.b16 %v544
    %v867 = vunpack.c.h.b16 %v544
    %v868 = vunpack.c.l.b16 %v545
    %v869 = vunpack.c.h.b16 %v545
    %v870 = vunpack.c.l.b16 %v546
    %v871 = vunpack.c.h.b16 %v546
    %v872 = vunpack.c.l.b16 %v547
    %v873 = vunpack.c.h.b16 %v547
    %v874 = vunpack.c.l.b16 %v548
    %v875 = vunpack.c.h.b16 %v548
    %v876 = vunpack.c.l.b16 %v549
    %v877 = vunpack.c.h.b16 %v549
    %v878 = vunpack.c.l.b16 %v550
    %v879 = vunpack.c.h.b16 %v550
    %v880 = vunpack.c.l.b16 %v551
    %v881 = vunpack.c.h.b16 %v551
    %v882 = vunpack.c.l.b16 %v552
    %v883 = vunpack.c.h.b16 %v552
    %v884 = vunpack.c.l.b16 %v553
    %v885 = vunpack.c.h.b16 %v553
    %v886 = vunpack.c.l.b16 %v554
    %v887 = vunpack.c.h.b16 %v554
    %v888 = vunpack.c.l.b16 %v555
    %v889 = vunpack.c.h.b16 %v555
    %v890 = vunpack.c.l.b16 %v556
    %v891 = vunpack.c.h.b16 %v556
    %v892 = vunpack.c.l.b16 %v557
    %v893 = vunpack.c.h.b16 %v557
    %v894 = vunpack.c.l.b16 %v558
    %v895 = vunpack.c.h.b16 %v558
    %v896 = vunpack.c.l.b16 %v559
    %v897 = vunpack.c.h.b16 %v559
    %v898 = vunpack.c.l.b16 %v560
    %v899 = vunpack.c.h.b16 %v560
    %v900 = vunpack.c.l.b16 %v561
    %v901 = vunpack.c.h.b16 %v561
    %v902 = vunpack.c.l.b16 %v562
    %v903 = vunpack.c.h.b16 %v562
    %v904 = vunpack.c.l.b16 %v563
    %v905 = vunpack.c.h.b16 %v563
    %v906 = vunpack.c.l.b16 %v564
    %v907 = vunpack.c.h.b16 %v564
    %v908 = vunpack.c.l.b16 %v565
    %v909 = vunpack.c.h.b16 %v565
    %v910 = vunpack.c.l.b16 %v566
    %v911 = vunpack.c.h.b16 %v566
    %v912 = vunpack.c.l.b16 %v567
    %v913 = vunpack.c.h.b16 %v567
    %v914 = vunpack.c.l.b16 %v568
    %v915 = vunpack.c.h.b16 %v568
    %v916 = vunpack.c.l.b16 %v569
    %v917 = vunpack.c.h.b16 %v569
    %v918 = vunpack.c.l.b16 %v570
    %v919 = vunpack.c.h.b16 %v570
    %v920 = vunpack.c.l.b16 %v571
    %v921 = vunpack.c.h.b16 %v571
    %v922 = vunpack.c.l.b16 %v572
    %v923 = vunpack.c.h.b16 %v572
    %v924 = vunpack.c.l.b16 %v573
    %v925 = vunpack.c.h.b16 %v573
    %v926 = vunpack.c.l.b16 %v574
    %v927 = vunpack.c.h.b16 %v574
    %v928 = vunpack.c.l.b16 %v575
    %v929 = vunpack.c.h.b16 %v575
    %v930 = vunpack.c.l.b16 %v576
    %v931 = vunpack.c.h.b16 %v576
    %v932 = vunpack.c.l.b16 %v577
    %v933 = vunpack.c.h.b16 %v577
    %v934 = vunpack.c.l.b16 %v578
    %v935 = vunpack.c.h.b16 %v578
    %v936 = vunpack.c.l.b16 %v579
    %v937 = vunpack.c.h.b16 %v579
    %v938 = vunpack.c.l.b16 %v580
    %v939 = vunpack.c.h.b16 %v580
    %v940 = vunpack.c.l.b16 %v581
    %v941 = vunpack.c.h.b16 %v581
    %v942 = vunpack.c.l.b16 %v582
    %v943 = vunpack.c.h.b16 %v582
    %v944 = vunpack.c.l.b16 %v583
    %v945 = vunpack.c.h.b16 %v583
    %v946 = vunpack.c.l.b16 %v584
    %v947 = vunpack.c.h.b16 %v584
    %v948 = vunpack.c.l.b16 %v585
    %v949 = vunpack.c.h.b16 %v585
    %v950 = vunpack.c.l.b16 %v586
    %v951 = vunpack.c.h.b16 %v586
    %v952 = vunpack.c.l.b16 %v587
    %v953 = vunpack.c.h.b16 %v587
    %v954 = vunpack.c.l.b16 %v588
    %v955 = vunpack.c.h.b16 %v588
    %v956 = vunpack.c.l.b16 %v589
    %v957 = vunpack.c.h.b16 %v589
    %v958 = vunpack.c.l.b16 %v590
    %v959 = vunpack.c.h.b16 %v590
    %v960 = vunpack.c.l.b16 %v591
    %v961 = vunpack.c.h.b16 %v591
    %v962 = vunpack.c.l.b16 %v592
    %v963 = vunpack.c.h.b16 %v592
    %v964 = vunpack.c.l.b16 %v593
    %v965 = vunpack.c.h.b16 %v593
    %v966 = vunpack.c.l.b16 %v594
    %v967 = vunpack.c.h.b16 %v594
    %v968 = vunpack.c.l.b16 %v595
    %v969 = vunpack.c.h.b16 %v595
    %v970 = vunpack.c.l.b16 %v596
    %v971 = vunpack.c.h.b16 %v596
    %v972 = vunpack.c.l.b16 %v597
    %v973 = vunpack.c.h.b16 %v597
    %v974 = vunpack.c.l.b16 %v598
    %v975 = vunpack.c.h.b16 %v598
    %v976 = vunpack.c.l.b16 %v599
    %v977 = vunpack.c.h.b16 %v599
    %v978 = vunpack.c.l.b16 %v600
    %v979 = vunpack.c.h.b16 %v600
    %v980 = vunpack.c.l.b16 %v601
    %v981 = vunpack.c.h.b16 %v601
    %v982 = vunpack.c.l.b16 %v602
    %v983 = vunpack.c.h.b16 %v602
    %v984 = vunpack.c.l.b16 %v603
    %v985 = vunpack.c.h.b16 %v603
    %v986 = vunpack.c.l.b16 %v604
    %v987 = vunpack.c.h.b16 %v604
    %v988 = vunpack.c.l.b16 %v605
    %v989 = vunpack.c.h.b16 %v605
    %v990 = vunpack.c.l.b16 %v606
    %v991 = vunpack.c.h.b16 %v606
    %v992 = vunpack.c.l.b16 %v607
    %v993 = vunpack.c.h.b16 %v607
    %v994 = vunpack.c.l.b16 %v608
    %v995 = vunpack.c.h.b16 %v608
    %v996 = vunpack.c.l.b16 %v609
    %v997 = vunpack.c.h.b16 %v609
    %v998 = vunpack.c.l.b16 %v610
    %v999 = vunpack.c.h.b16 %v610
    %v1000 = vunpack.c.l.b16 %v611
    %v1001 = vunpack.c.h.b16 %v611
    %v1002 = vunpack.c.l.b16 %v612
    %v1003 = vunpack.c.h.b16 %v612
    %v1004 = vunpack.c.l.b16 %v613
    %v1005 = vunpack.c.h.b16 %v613
    %v1006 = vunpack.c.l.b16 %v614
    %v1007 = vunpack.c.h.b16 %v614
    %v1008 = vunpack.c.l.b16 %v615
    %v1009 = vunpack.c.h.b16 %v615
    %v1010 = vunpack.c.l.b16 %v616
    %v1011 = vunpack.c.h.b16 %v616
    %v1012 = vunpack.c.l.b16 %v617
    %v1013 = vunpack.c.h.b16 %v617
    %v1014 = vunpack.c.l.b16 %v618
    %v1015 = vunpack.c.h.b16 %v618
    %v1016 = vunpack.c.l.b16 %v619
    %v1017 = vunpack.c.h.b16 %v619
    %v1018 = vunpack.c.l.b16 %v620
    %v1019 = vunpack.c.h.b16 %v620
    %v1020 = vunpack.c.l.b16 %v621
    %v1021 = vunpack.c.h.b16 %v621
    %v1022 = vunpack.c.l.b16 %v622
    %v1023 = vunpack.c.h.b16 %v622
    %v1024 = vunpack.c.l.b16 %v623
    %v1025 = vunpack.c.h.b16 %v623
    %v1026 = vunpack.c.l.b16 %v624
    %v1027 = vunpack.c.h.b16 %v624
    %v1028 = vunpack.c.l.b16 %v625
    %v1029 = vunpack.c.h.b16 %v625
    %v1030 = vunpack.c.l.b16 %v626
    %v1031 = vunpack.c.h.b16 %v626
    %v1032 = vunpack.c.l.b16 %v627
    %v1033 = vunpack.c.h.b16 %v627
    %v1034 = vpack.c.b16 %v782, %v778
    %v1035 = vpack.c.b16 %v783, %v779
    %v1036 = vpack.c.b16 %v784, %v780
    %v1037 = vpack.c.b16 %v785, %v781
    %v1038 = vpack.c.b16 %v790, %v786
    %v1039 = vpack.c.b16 %v791, %v787
    %v1040 = vpack.c.b16 %v792, %v788
    %v1041 = vpack.c.b16 %v793, %v789
    %v1042 = vpack.c.b16 %v798, %v794
    %v1043 = vpack.c.b16 %v799, %v795
    %v1044 = vpack.c.b16 %v800, %v796
    %v1045 = vpack.c.b16 %v801, %v797
    %v1046 = vpack.c.b16 %v806, %v802
    %v1047 = vpack.c.b16 %v807, %v803
    %v1048 = vpack.c.b16 %v808, %v804
    %v1049 = vpack.c.b16 %v809, %v805
    %v1050 = vpack.c.b16 %v814, %v810
    %v1051 = vpack.c.b16 %v815, %v811
    %v1052 = vpack.c.b16 %v816, %v812
    %v1053 = vpack.c.b16 %v817, %v813
    %v1054 = vpack.c.b16 %v822, %v818
    %v1055 = vpack.c.b16 %v823, %v819
    %v1056 = vpack.c.b16 %v824, %v820
    %v1057 = vpack.c.b16 %v825, %v821
    %v1058 = vpack.c.b16 %v830, %v826
    %v1059 = vpack.c.b16 %v831, %v827
    %v1060 = vpack.c.b16 %v832, %v828
    %v1061 = vpack.c.b16 %v833, %v829
    %v1062 = vpack.c.b16 %v838, %v834
    %v1063 = vpack.c.b16 %v839, %v835
    %v1064 = vpack.c.b16 %v840, %v836
    %v1065 = vpack.c.b16 %v841, %v837
    %v1066 = vpack.c.b16 %v846, %v842
    %v1067 = vpack.c.b16 %v847, %v843
    %v1068 = vpack.c.b16 %v848, %v844
    %v1069 = vpack.c.b16 %v849, %v845
    %v1070 = vpack.c.b16 %v854, %v850
    %v1071 = vpack.c.b16 %v855, %v851
    %v1072 = vpack.c.b16 %v856, %v852
    %v1073 = vpack.c.b16 %v857, %v853
    %v1074 = vpack.c.b16 %v862, %v858
    %v1075 = vpack.c.b16 %v863, %v859
    %v1076 = vpack.c.b16 %v864, %v860
    %v1077 = vpack.c.b16 %v865, %v861
    %v1078 = vpack.c.b16 %v870, %v866
    %v1079 = vpack.c.b16 %v871, %v867
    %v1080 = vpack.c.b16 %v872, %v868
    %v1081 = vpack.c.b16 %v873, %v869
    %v1082 = vpack.c.b16 %v878, %v874
    %v1083 = vpack.c.b16 %v879, %v875
    %v1084 = vpack.c.b16 %v880, %v876
    %v1085 = vpack.c.b16 %v881, %v877
    %v1086 = vpack.c.b16 %v886, %v882
    %v1087 = vpack.c.b16 %v887, %v883
    %v1088 = vpack.c.b16 %v888, %v884
    %v1089 = vpack.c.b16 %v889, %v885
    %v1090 = vpack.c.b16 %v894, %v890
    %v1091 = vpack.c.b16 %v895, %v891
    %v1092 = vpack.c.b16 %v896, %v892
    %v1093 = vpack.c.b16 %v897, %v893
    %v1094 = vpack.c.b16 %v902, %v898
    %v1095 = vpack.c.b16 %v903, %v899
    %v1096 = vpack.c.b16 %v904, %v900
    %v1097 = vpack.c.b16 %v905, %v901
    %v1098 = vpack.c.b16 %v910, %v906
    %v1099 = vpack.c.b16 %v911, %v907
    %v1100 = vpack.c.b16 %v912, %v908
    %v1101 = vpack.c.b16 %v913, %v909
    %v1102 = vpack.c.b16 %v918, %v914
    %v1103 = vpack.c.b16 %v919, %v915
    %v1104 = vpack.c.b16 %v920, %v916
    %v1105 = vpack.c.b16 %v921, %v917
    %v1106 = vpack.c.b16 %v926, %v922
    %v1107 = vpack.c.b16 %v927, %v923
    %v1108 = vpack.c.b16 %v928, %v924
    %v1109 = vpack.c.b16 %v929, %v925
    %v1110 = vpack.c.b16 %v934, %v930
    %v1111 = vpack.c.b16 %v935, %v931
    %v1112 = vpack.c.b16 %v936, %v932
    %v1113 = vpack.c.b16 %v937, %v933
    %v1114 = vpack.c.b16 %v942, %v938
    %v1115 = vpack.c.b16 %v943, %v939
    %v1116 = vpack.c.b16 %v944, %v940
    %v1117 = vpack.c.b16 %v945, %v941
    %v1118 = vpack.c.b16 %v950, %v946
    %v1119 = vpack.c.b16 %v951, %v947
    %v1120 = vpack.c.b16 %v952, %v948
    %v1121 = vpack.c.b16 %v953, %v949
    %v1122 = vpack.c.b16 %v958, %v954
    %v1123 = vpack.c.b16 %v959, %v955
    %v1124 = vpack.c.b16 %v960, %v956
    %v1125 = vpack.c.b16 %v961, %v957
    %v1126 = vpack.c.b16 %v966, %v962
    %v1127 = vpack.c.b16 %v967, %v963
    %v1128 = vpack.c.b16 %v968, %v964
    %v1129 = vpack.c.b16 %v969, %v965
    %v1130 = vpack.c.b16 %v974, %v970
    %v1131 = vpack.c.b16 %v975, %v971
    %v1132 = vpack.c.b16 %v976, %v972
    %v1133 = vpack.c.b16 %v977, %v973
    %v1134 = vpack.c.b16 %v982, %v978
    %v1135 = vpack.c.b16 %v983, %v979
    %v1136 = vpack.c.b16 %v984, %v980
    %v1137 = vpack.c.b16 %v985, %v981
    %v1138 = vpack.c.b16 %v990, %v986
    %v1139 = vpack.c.b16 %v991, %v987
    %v1140 = vpack.c.b16 %v992, %v988
    %v1141 = vpack.c.b16 %v993, %v989
    %v1142 = vpack.c.b16 %v998, %v994
    %v1143 = vpack.c.b16 %v999, %v995
    %v1144 = vpack.c.b16 %v1000, %v996
    %v1145 = vpack.c.b16 %v1001, %v997
    %v1146 = vpack.c.b16 %v1006, %v1002
    %v1147 = vpack.c.b16 %v1007, %v1003
    %v1148 = vpack.c.b16 %v1008, %v1004
    %v1149 = vpack.c.b16 %v1009, %v1005
    %v1150 = vpack.c.b16 %v1014, %v1010
    %v1151 = vpack.c.b16 %v1015, %v1011
    %v1152 = vpack.c.b16 %v1016, %v1012
    %v1153 = vpack.c.b16 %v1017, %v1013
    %v1154 = vpack.c.b16 %v1022, %v1018
    %v1155 = vpack.c.b16 %v1023, %v1019
    %v1156 = vpack.c.b16 %v1024, %v1020
    %v1157 = vpack.c.b16 %v1025, %v1021
    %v1158 = vpack.c.b16 %v1030, %v1026
    %v1159 = vpack.c.b16 %v1031, %v1027
    %v1160 = vpack.c.b16 %v1032, %v1028
    %v1161 = vpack.c.b16 %v1033, %v1029
    %1290 = vmatprep.subr.bf16.mxu0 %v1063
    %1291 = vmatpush1.bf16.msra.mxu0 %v1062
    %1292 = vmatprep.subr.bf16.mxu0 %v1059
    %1293 = vmatpush1.bf16.msra.mxu0 %v1058
    %1294 = vmatprep.subr.bf16.mxu0 %v1055
    %1295 = vmatpush1.bf16.msra.mxu0 %v1054
    %1296 = vmatprep.subr.bf16.mxu0 %v1051
    %1297 = vmatpush1.bf16.msra.mxu0 %v1050
    %1298 = vmatprep.subr.bf16.mxu0 %v1047
    %1299 = vmatpush1.bf16.msra.mxu0 %v1046
    %1300 = vmatprep.subr.bf16.mxu0 %v1043
    %1301 = vmatpush1.bf16.msra.mxu0 %v1042
    %1302 = vmatprep.subr.bf16.mxu0 %v1039
    %1303 = vmatpush1.bf16.msra.mxu0 %v1038
    %1304 = vmatprep.subr.bf16.mxu0 %v1035
    %1305 = vmatpush1.bf16.msra.mxu0 %v1034
    %1306 = vmatprep.subr.bf16.mxu0 %v1095
    %1307 = vmatpush2.bf16.msra.mxu0 %v1094
    %1308 = vmatprep.subr.bf16.mxu0 %v1091
    %1309 = vmatpush2.bf16.msra.mxu0 %v1090
    %1310 = vmatprep.subr.bf16.mxu0 %v1087
    %1311 = vmatpush2.bf16.msra.mxu0 %v1086
    %1312 = vmatprep.subr.bf16.mxu0 %v1083
    %1313 = vmatpush2.bf16.msra.mxu0 %v1082
    %1314 = vmatprep.subr.bf16.mxu0 %v1079
    %1315 = vmatpush2.bf16.msra.mxu0 %v1078
    %1316 = vmatprep.subr.bf16.mxu0 %v1075
    %1317 = vmatpush2.bf16.msra.mxu0 %v1074
    %1318 = vmatprep.subr.bf16.mxu0 %v1071
    %1319 = vmatpush2.bf16.msra.mxu0 %v1070
    %1320 = vmatprep.subr.bf16.mxu0 %v1067
    %1321 = vmatpush2.bf16.msra.mxu0 %v1066
    %1322 = vmatprep.mubr.bf16.mxu0 %v497
    %1323 = vmatmul.mubr.bf16.gmra.mxu0 %v496
    %v1324 = vpop.f32.mrf.mxu0
    %v1325 = vadd.f32 %v633, %v1324
    %v1326 = vpop.f32.mrf.mxu0
    %v1327 = vadd.f32 %v637, %v1326
    %v1328 = vpop.f32.mrf.mxu0
    %v1329 = vpop.f32.mrf.mxu0
    %1330 = vdwg.mxu0
    %1331 = vmatprep.subr.bf16.mxu0 %v1127
    %1332 = vmatpush1.bf16.msra.mxu0 %v1126
    %1333 = vmatprep.subr.bf16.mxu0 %v1123
    %1334 = vmatpush1.bf16.msra.mxu0 %v1122
    %1335 = vmatprep.subr.bf16.mxu0 %v1119
    %1336 = vmatpush1.bf16.msra.mxu0 %v1118
    %1337 = vmatprep.subr.bf16.mxu0 %v1115
    %1338 = vmatpush1.bf16.msra.mxu0 %v1114
    %1339 = vmatprep.subr.bf16.mxu0 %v1111
    %1340 = vmatpush1.bf16.msra.mxu0 %v1110
    %1341 = vmatprep.subr.bf16.mxu0 %v1107
    %1342 = vmatpush1.bf16.msra.mxu0 %v1106
    %1343 = vmatprep.subr.bf16.mxu0 %v1103
    %1344 = vmatpush1.bf16.msra.mxu0 %v1102
    %1345 = vmatprep.subr.bf16.mxu0 %v1099
    %1346 = vmatpush1.bf16.msra.mxu0 %v1098
    %1347 = vmatprep.subr.bf16.mxu0 %v1159
    %1348 = vmatpush2.bf16.msra.mxu0 %v1158
    %1349 = vmatprep.subr.bf16.mxu0 %v1155
    %1350 = vmatpush2.bf16.msra.mxu0 %v1154
    %1351 = vmatprep.subr.bf16.mxu0 %v1151
    %1352 = vmatpush2.bf16.msra.mxu0 %v1150
    %1353 = vmatprep.subr.bf16.mxu0 %v1147
    %1354 = vmatpush2.bf16.msra.mxu0 %v1146
    %1355 = vmatprep.subr.bf16.mxu0 %v1143
    %1356 = vmatpush2.bf16.msra.mxu0 %v1142
    %1357 = vmatprep.subr.bf16.mxu0 %v1139
    %1358 = vmatpush2.bf16.msra.mxu0 %v1138
    %1359 = vmatprep.subr.bf16.mxu0 %v1135
    %1360 = vmatpush2.bf16.msra.mxu0 %v1134
    %1361 = vmatprep.subr.bf16.mxu0 %v1131
    %1362 = vmatpush2.bf16.msra.mxu0 %v1130
    %1363 = vmatprep.mubr.bf16.mxu0 %v499
    %1364 = vmatmul.mubr.bf16.gmra.mxu0 %v498
    %v1365 = vpop.f32.mrf.mxu0
    %v1366 = vadd.f32 %v1325, %v1365
    %v1367 = vpop.f32.mrf.mxu0
    %v1368 = vadd.f32 %v1327, %v1367
    %v1369 = vpop.f32.mrf.mxu0
    %v1370 = vpop.f32.mrf.mxu0
    %1371 = vdwg.mxu0
    %1372 = vmatprep.subr.bf16.mxu0 %v1065
    %1373 = vmatpush1.bf16.msra.mxu0 %v1064
    %1374 = vmatprep.subr.bf16.mxu0 %v1061
    %1375 = vmatpush1.bf16.msra.mxu0 %v1060
    %1376 = vmatprep.subr.bf16.mxu0 %v1057
    %1377 = vmatpush1.bf16.msra.mxu0 %v1056
    %1378 = vmatprep.subr.bf16.mxu0 %v1053
    %1379 = vmatpush1.bf16.msra.mxu0 %v1052
    %1380 = vmatprep.subr.bf16.mxu0 %v1049
    %1381 = vmatpush1.bf16.msra.mxu0 %v1048
    %1382 = vmatprep.subr.bf16.mxu0 %v1045
    %1383 = vmatpush1.bf16.msra.mxu0 %v1044
    %1384 = vmatprep.subr.bf16.mxu0 %v1041
    %1385 = vmatpush1.bf16.msra.mxu0 %v1040
    %1386 = vmatprep.subr.bf16.mxu0 %v1037
    %1387 = vmatpush1.bf16.msra.mxu0 %v1036
    %1388 = vmatprep.subr.bf16.mxu0 %v1097
    %1389 = vmatpush2.bf16.msra.mxu0 %v1096
    %1390 = vmatprep.subr.bf16.mxu0 %v1093
    %1391 = vmatpush2.bf16.msra.mxu0 %v1092
    %1392 = vmatprep.subr.bf16.mxu0 %v1089
    %1393 = vmatpush2.bf16.msra.mxu0 %v1088
    %1394 = vmatprep.subr.bf16.mxu0 %v1085
    %1395 = vmatpush2.bf16.msra.mxu0 %v1084
    %1396 = vmatprep.subr.bf16.mxu0 %v1081
    %1397 = vmatpush2.bf16.msra.mxu0 %v1080
    %1398 = vmatprep.subr.bf16.mxu0 %v1077
    %1399 = vmatpush2.bf16.msra.mxu0 %v1076
    %1400 = vmatprep.subr.bf16.mxu0 %v1073
    %1401 = vmatpush2.bf16.msra.mxu0 %v1072
    %1402 = vmatprep.subr.bf16.mxu0 %v1069
    %1403 = vmatpush2.bf16.msra.mxu0 %v1068
    %1404 = vmatprep.mubr.bf16.mxu0 %v497
    %1405 = vmatmul.mubr.bf16.gmra.mxu0 %v496
    %v1406 = vpop.f32.mrf.mxu0
    %v1407 = vadd.f32 %v641, %v1406
    %v1408 = vpop.f32.mrf.mxu0
    %v1409 = vadd.f32 %v645, %v1408
    %v1410 = vpop.f32.mrf.mxu0
    %v1411 = vpop.f32.mrf.mxu0
    %1412 = vdwg.mxu0
    %1413 = vmatprep.subr.bf16.mxu0 %v1129
    %1414 = vmatpush1.bf16.msra.mxu0 %v1128
    %1415 = vmatprep.subr.bf16.mxu0 %v1125
    %1416 = vmatpush1.bf16.msra.mxu0 %v1124
    %1417 = vmatprep.subr.bf16.mxu0 %v1121
    %1418 = vmatpush1.bf16.msra.mxu0 %v1120
    %1419 = vmatprep.subr.bf16.mxu0 %v1117
    %1420 = vmatpush1.bf16.msra.mxu0 %v1116
    %1421 = vmatprep.subr.bf16.mxu0 %v1113
    %1422 = vmatpush1.bf16.msra.mxu0 %v1112
    %1423 = vmatprep.subr.bf16.mxu0 %v1109
    %1424 = vmatpush1.bf16.msra.mxu0 %v1108
    %1425 = vmatprep.subr.bf16.mxu0 %v1105
    %1426 = vmatpush1.bf16.msra.mxu0 %v1104
    %1427 = vmatprep.subr.bf16.mxu0 %v1101
    %1428 = vmatpush1.bf16.msra.mxu0 %v1100
    %1429 = vmatprep.subr.bf16.mxu0 %v1161
    %1430 = vmatpush2.bf16.msra.mxu0 %v1160
    %1431 = vmatprep.subr.bf16.mxu0 %v1157
    %1432 = vmatpush2.bf16.msra.mxu0 %v1156
    %1433 = vmatprep.subr.bf16.mxu0 %v1153
    %1434 = vmatpush2.bf16.msra.mxu0 %v1152
    %1435 = vmatprep.subr.bf16.mxu0 %v1149
    %1436 = vmatpush2.bf16.msra.mxu0 %v1148
    %1437 = vmatprep.subr.bf16.mxu0 %v1145
    %1438 = vmatpush2.bf16.msra.mxu0 %v1144
    %1439 = vmatprep.subr.bf16.mxu0 %v1141
    %1440 = vmatpush2.bf16.msra.mxu0 %v1140
    %1441 = vmatprep.subr.bf16.mxu0 %v1137
    %1442 = vmatpush2.bf16.msra.mxu0 %v1136
    %1443 = vmatprep.subr.bf16.mxu0 %v1133
    %1444 = vmatpush2.bf16.msra.mxu0 %v1132
    %1445 = vmatprep.mubr.bf16.mxu0 %v499
    %1446 = vmatmul.mubr.bf16.gmra.mxu0 %v498
    %v1447 = vpop.f32.mrf.mxu0
    %v1448 = vadd.f32 %v1407, %v1447
    %v1449 = vpop.f32.mrf.mxu0
    %v1450 = vadd.f32 %v1409, %v1449
    %v1451 = vpop.f32.mrf.mxu0
    %v1452 = vpop.f32.mrf.mxu0
    %1453 = vdwg.mxu0
    %v1454 = vmul.f32 %v1366, 0.5
    %v1455 = vmul.f32 %v1368, 0.5
    %v1456 = vmul.f32 %v1448, 0.5
    %v1457 = vmul.f32 %v1450, 0.5
    %v1458 = vmul.f32 %v1366, 0.70710677
    %v1459 = vmul.f32 %v1368, 0.70710677
    %v1460 = vmul.f32 %v1448, 0.70710677
    %v1461 = vmul.f32 %v1450, 0.70710677
    %vm1462 = vcmp.lt.f32.partialorder %v1458, 0.0
    %vm1463 = vcmp.lt.f32.partialorder %v1459, 0.0
    %vm1464 = vcmp.lt.f32.partialorder %v1460, 0.0
    %vm1465 = vcmp.lt.f32.partialorder %v1461, 0.0
    %v1466 = vsel %vm1462, -1.0, 1.0
    %v1467 = vsel %vm1463, -1.0, 1.0
    %v1468 = vsel %vm1464, -1.0, 1.0
    %v1469 = vsel %vm1465, -1.0, 1.0
    %v1470 = vand.u32 2147483647, %v1458
    %v1471 = vand.u32 2147483647, %v1459
    %v1472 = vand.u32 2147483647, %v1460
    %v1473 = vand.u32 2147483647, %v1461
    %v1474 = vmul.f32 %v1470, 0.3275911
    %v1475 = vmul.f32 %v1471, 0.3275911
    %v1476 = vmul.f32 %v1472, 0.3275911
    %v1477 = vmul.f32 %v1473, 0.3275911
    %v1478 = vadd.f32 %v1474, 1.0
    %v1479 = vadd.f32 %v1475, 1.0
    %v1480 = vadd.f32 %v1476, 1.0
    %v1481 = vadd.f32 %v1477, 1.0
    %v1482 = vrcp.pop %v1478
    %v1483 = vmul.f32 1.0, %v1482
    %v1484 = vrcp.pop %v1479
    %v1485 = vmul.f32 1.0, %v1484
    %v1486 = vrcp.pop %v1480
    %v1487 = vmul.f32 1.0, %v1486
    %v1488 = vrcp.pop %v1481
    %v1489 = vmul.f32 1.0, %v1488
    %v1490 = vmul.f32 %v1483, 1.0614054
    %v1491 = vmul.f32 %v1485, 1.0614054
    %v1492 = vmul.f32 %v1487, 1.0614054
    %v1493 = vmul.f32 %v1489, 1.0614054
    %v1494 = vadd.f32 %v1490, -1.4531521
    %v1495 = vadd.f32 %v1491, -1.4531521
    %v1496 = vadd.f32 %v1492, -1.4531521
    %v1497 = vadd.f32 %v1493, -1.4531521
    %v1498 = vmul.f32 %v1494, %v1483
    %v1499 = vmul.f32 %v1495, %v1485
    %v1500 = vmul.f32 %v1496, %v1487
    %v1501 = vmul.f32 %v1497, %v1489
    %v1502 = vadd.f32 %v1498, 1.4214138
    %v1503 = vadd.f32 %v1499, 1.4214138
    %v1504 = vadd.f32 %v1500, 1.4214138
    %v1505 = vadd.f32 %v1501, 1.4214138
    %v1506 = vmul.f32 %v1502, %v1483
    %v1507 = vmul.f32 %v1503, %v1485
    %v1508 = vmul.f32 %v1504, %v1487
    %v1509 = vmul.f32 %v1505, %v1489
    %v1510 = vadd.f32 %v1506, -0.28449672
    %v1511 = vadd.f32 %v1507, -0.28449672
    %v1512 = vadd.f32 %v1508, -0.28449672
    %v1513 = vadd.f32 %v1509, -0.28449672
    %v1514 = vmul.f32 %v1510, %v1483
    %v1515 = vmul.f32 %v1511, %v1485
    %v1516 = vmul.f32 %v1512, %v1487
    %v1517 = vmul.f32 %v1513, %v1489
    %v1518 = vadd.f32 %v1514, 0.2548296
    %v1519 = vadd.f32 %v1515, 0.2548296
    %v1520 = vadd.f32 %v1516, 0.2548296
    %v1521 = vadd.f32 %v1517, 0.2548296
    %v1522 = vmul.f32 %v1518, %v1483
    %v1523 = vmul.f32 %v1519, %v1485
    %v1524 = vmul.f32 %v1520, %v1487
    %v1525 = vmul.f32 %v1521, %v1489
    %v1526 = vsub.f32 0.0, %v1470
    %v1527 = vsub.f32 0.0, %v1471
    %v1528 = vsub.f32 0.0, %v1472
    %v1529 = vsub.f32 0.0, %v1473
    %v1530 = vmul.f32 %v1526, %v1470
    %v1531 = vmul.f32 %v1527, %v1471
    %v1532 = vmul.f32 %v1528, %v1472
    %v1533 = vmul.f32 %v1529, %v1473
    %v1534 = vmul.f32 %v1530, 1.442695
    %v1535 = vpow.pop %v1534
    %v1536 = vmul.f32 %v1531, 1.442695
    %v1537 = vpow.pop %v1536
    %v1538 = vmul.f32 %v1532, 1.442695
    %v1539 = vpow.pop %v1538
    %v1540 = vmul.f32 %v1533, 1.442695
    %v1541 = vpow.pop %v1540
    %v1542 = vmul.f32 %v1522, %v1535
    %v1543 = vmul.f32 %v1523, %v1537
    %v1544 = vmul.f32 %v1524, %v1539
    %v1545 = vmul.f32 %v1525, %v1541
    %v1546 = vsub.f32 1.0, %v1542
    %v1547 = vsub.f32 1.0, %v1543
    %v1548 = vsub.f32 1.0, %v1544
    %v1549 = vsub.f32 1.0, %v1545
    %v1550 = vmul.f32 %v1466, %v1546
    %v1551 = vmul.f32 %v1467, %v1547
    %v1552 = vmul.f32 %v1468, %v1548
    %v1553 = vmul.f32 %v1469, %v1549
    %v1554 = vadd.f32 %v1550, 1.0
    %v1555 = vadd.f32 %v1551, 1.0
    %v1556 = vadd.f32 %v1552, 1.0
    %v1557 = vadd.f32 %v1553, 1.0
    %v1558 = vmul.f32 %v1454, %v1554
    %v1559 = vmul.f32 %v1455, %v1555
    %v1560 = vmul.f32 %v1456, %v1556
    %v1561 = vmul.f32 %v1457, %v1557
    %v1562 = vpack.c.bf16 %v1558, %v1558
    %v1563 = vpack.c.bf16 %v1559, %v1559
    %v1564 = vpack.c.bf16 %v1560, %v1560
    %v1565 = vpack.c.bf16 %v1561, %v1561
    %v1566 = vld [vmem:[#allocation6] sm:$0xff]
    %v1567 = vld [vmem:[#allocation6 + $0x8] sm:$0xff]
    %v1568 = vld [vmem:[#allocation6 + $0x10] sm:$0xff]
    %v1569 = vld [vmem:[#allocation6 + $0x18] sm:$0xff]
    %v1570 = vld [vmem:[#allocation6 + $0x20] sm:$0xff]
    %v1571 = vld [vmem:[#allocation6 + $0x28] sm:$0xff]
    %v1572 = vld [vmem:[#allocation6 + $0x30] sm:$0xff]
    %v1573 = vld [vmem:[#allocation6 + $0x38] sm:$0xff]
    %v1574 = vld [vmem:[#allocation6 + $0x40] sm:$0xff]
    %v1575 = vld [vmem:[#allocation6 + $0x48] sm:$0xff]
    %v1576 = vld [vmem:[#allocation6 + $0x50] sm:$0xff]
    %v1577 = vld [vmem:[#allocation6 + $0x58] sm:$0xff]
    %v1578 = vld [vmem:[#allocation6 + $0x60] sm:$0xff]
    %v1579 = vld [vmem:[#allocation6 + $0x68] sm:$0xff]
    %v1580 = vld [vmem:[#allocation6 + $0x70] sm:$0xff]
    %v1581 = vld [vmem:[#allocation6 + $0x78] sm:$0xff]
    %v1582 = vld [vmem:[#allocation6 + $0x80] sm:$0xff]
    %v1583 = vld [vmem:[#allocation6 + $0x88] sm:$0xff]
    %v1584 = vld [vmem:[#allocation6 + $0x90] sm:$0xff]
    %v1585 = vld [vmem:[#allocation6 + $0x98] sm:$0xff]
    %v1586 = vld [vmem:[#allocation6 + $0xa0] sm:$0xff]
    %v1587 = vld [vmem:[#allocation6 + $0xa8] sm:$0xff]
    %v1588 = vld [vmem:[#allocation6 + $0xb0] sm:$0xff]
    %v1589 = vld [vmem:[#allocation6 + $0xb8] sm:$0xff]
    %v1590 = vld [vmem:[#allocation6 + $0xc0] sm:$0xff]
    %v1591 = vld [vmem:[#allocation6 + $0xc8] sm:$0xff]
    %v1592 = vld [vmem:[#allocation6 + $0xd0] sm:$0xff]
    %v1593 = vld [vmem:[#allocation6 + $0xd8] sm:$0xff]
    %v1594 = vld [vmem:[#allocation6 + $0xe0] sm:$0xff]
    %v1595 = vld [vmem:[#allocation6 + $0xe8] sm:$0xff]
    %v1596 = vld [vmem:[#allocation6 + $0xf0] sm:$0xff]
    %v1597 = vld [vmem:[#allocation6 + $0xf8] sm:$0xff]
    %v1598 = vld [vmem:[#allocation6 + $0x100] sm:$0xff]
    %v1599 = vld [vmem:[#allocation6 + $0x108] sm:$0xff]
    %v1600 = vld [vmem:[#allocation6 + $0x110] sm:$0xff]
    %v1601 = vld [vmem:[#allocation6 + $0x118] sm:$0xff]
    %v1602 = vld [vmem:[#allocation6 + $0x120] sm:$0xff]
    %v1603 = vld [vmem:[#allocation6 + $0x128] sm:$0xff]
    %v1604 = vld [vmem:[#allocation6 + $0x130] sm:$0xff]
    %v1605 = vld [vmem:[#allocation6 + $0x138] sm:$0xff]
    %v1606 = vld [vmem:[#allocation6 + $0x140] sm:$0xff]
    %v1607 = vld [vmem:[#allocation6 + $0x148] sm:$0xff]
    %v1608 = vld [vmem:[#allocation6 + $0x150] sm:$0xff]
    %v1609 = vld [vmem:[#allocation6 + $0x158] sm:$0xff]
    %v1610 = vld [vmem:[#allocation6 + $0x160] sm:$0xff]
    %v1611 = vld [vmem:[#allocation6 + $0x168] sm:$0xff]
    %v1612 = vld [vmem:[#allocation6 + $0x170] sm:$0xff]
    %v1613 = vld [vmem:[#allocation6 + $0x178] sm:$0xff]
    %v1614 = vld [vmem:[#allocation6 + $0x180] sm:$0xff]
    %v1615 = vld [vmem:[#allocation6 + $0x188] sm:$0xff]
    %v1616 = vld [vmem:[#allocation6 + $0x190] sm:$0xff]
    %v1617 = vld [vmem:[#allocation6 + $0x198] sm:$0xff]
    %v1618 = vld [vmem:[#allocation6 + $0x1a0] sm:$0xff]
    %v1619 = vld [vmem:[#allocation6 + $0x1a8] sm:$0xff]
    %v1620 = vld [vmem:[#allocation6 + $0x1b0] sm:$0xff]
    %v1621 = vld [vmem:[#allocation6 + $0x1b8] sm:$0xff]
    %v1622 = vld [vmem:[#allocation6 + $0x1c0] sm:$0xff]
    %v1623 = vld [vmem:[#allocation6 + $0x1c8] sm:$0xff]
    %v1624 = vld [vmem:[#allocation6 + $0x1d0] sm:$0xff]
    %v1625 = vld [vmem:[#allocation6 + $0x1d8] sm:$0xff]
    %v1626 = vld [vmem:[#allocation6 + $0x1e0] sm:$0xff]
    %v1627 = vld [vmem:[#allocation6 + $0x1e8] sm:$0xff]
    %v1628 = vld [vmem:[#allocation6 + $0x1f0] sm:$0xff]
    %v1629 = vld [vmem:[#allocation6 + $0x1f8] sm:$0xff]
    %v1630 = vld [vmem:[#allocation6 + $0x200] sm:$0xff]
    %v1631 = vld [vmem:[#allocation6 + $0x208] sm:$0xff]
    %v1632 = vld [vmem:[#allocation6 + $0x210] sm:$0xff]
    %v1633 = vld [vmem:[#allocation6 + $0x218] sm:$0xff]
    %v1634 = vld [vmem:[#allocation6 + $0x220] sm:$0xff]
    %v1635 = vld [vmem:[#allocation6 + $0x228] sm:$0xff]
    %v1636 = vld [vmem:[#allocation6 + $0x230] sm:$0xff]
    %v1637 = vld [vmem:[#allocation6 + $0x238] sm:$0xff]
    %v1638 = vld [vmem:[#allocation6 + $0x240] sm:$0xff]
    %v1639 = vld [vmem:[#allocation6 + $0x248] sm:$0xff]
    %v1640 = vld [vmem:[#allocation6 + $0x250] sm:$0xff]
    %v1641 = vld [vmem:[#allocation6 + $0x258] sm:$0xff]
    %v1642 = vld [vmem:[#allocation6 + $0x260] sm:$0xff]
    %v1643 = vld [vmem:[#allocation6 + $0x268] sm:$0xff]
    %v1644 = vld [vmem:[#allocation6 + $0x270] sm:$0xff]
    %v1645 = vld [vmem:[#allocation6 + $0x278] sm:$0xff]
    %v1646 = vld [vmem:[#allocation6 + $0x280] sm:$0xff]
    %v1647 = vld [vmem:[#allocation6 + $0x288] sm:$0xff]
    %v1648 = vld [vmem:[#allocation6 + $0x290] sm:$0xff]
    %v1649 = vld [vmem:[#allocation6 + $0x298] sm:$0xff]
    %v1650 = vld [vmem:[#allocation6 + $0x2a0] sm:$0xff]
    %v1651 = vld [vmem:[#allocation6 + $0x2a8] sm:$0xff]
    %v1652 = vld [vmem:[#allocation6 + $0x2b0] sm:$0xff]
    %v1653 = vld [vmem:[#allocation6 + $0x2b8] sm:$0xff]
    %v1654 = vld [vmem:[#allocation6 + $0x2c0] sm:$0xff]
    %v1655 = vld [vmem:[#allocation6 + $0x2c8] sm:$0xff]
    %v1656 = vld [vmem:[#allocation6 + $0x2d0] sm:$0xff]
    %v1657 = vld [vmem:[#allocation6 + $0x2d8] sm:$0xff]
    %v1658 = vld [vmem:[#allocation6 + $0x2e0] sm:$0xff]
    %v1659 = vld [vmem:[#allocation6 + $0x2e8] sm:$0xff]
    %v1660 = vld [vmem:[#allocation6 + $0x2f0] sm:$0xff]
    %v1661 = vld [vmem:[#allocation6 + $0x2f8] sm:$0xff]
    %v1662 = vld [vmem:[#allocation6 + $0x300] sm:$0xff]
    %v1663 = vld [vmem:[#allocation6 + $0x308] sm:$0xff]
    %v1664 = vld [vmem:[#allocation6 + $0x310] sm:$0xff]
    %v1665 = vld [vmem:[#allocation6 + $0x318] sm:$0xff]
    %v1666 = vld [vmem:[#allocation6 + $0x320] sm:$0xff]
    %v1667 = vld [vmem:[#allocation6 + $0x328] sm:$0xff]
    %v1668 = vld [vmem:[#allocation6 + $0x330] sm:$0xff]
    %v1669 = vld [vmem:[#allocation6 + $0x338] sm:$0xff]
    %v1670 = vld [vmem:[#allocation6 + $0x340] sm:$0xff]
    %v1671 = vld [vmem:[#allocation6 + $0x348] sm:$0xff]
    %v1672 = vld [vmem:[#allocation6 + $0x350] sm:$0xff]
    %v1673 = vld [vmem:[#allocation6 + $0x358] sm:$0xff]
    %v1674 = vld [vmem:[#allocation6 + $0x360] sm:$0xff]
    %v1675 = vld [vmem:[#allocation6 + $0x368] sm:$0xff]
    %v1676 = vld [vmem:[#allocation6 + $0x370] sm:$0xff]
    %v1677 = vld [vmem:[#allocation6 + $0x378] sm:$0xff]
    %v1678 = vld [vmem:[#allocation6 + $0x380] sm:$0xff]
    %v1679 = vld [vmem:[#allocation6 + $0x388] sm:$0xff]
    %v1680 = vld [vmem:[#allocation6 + $0x390] sm:$0xff]
    %v1681 = vld [vmem:[#allocation6 + $0x398] sm:$0xff]
    %v1682 = vld [vmem:[#allocation6 + $0x3a0] sm:$0xff]
    %v1683 = vld [vmem:[#allocation6 + $0x3a8] sm:$0xff]
    %v1684 = vld [vmem:[#allocation6 + $0x3b0] sm:$0xff]
    %v1685 = vld [vmem:[#allocation6 + $0x3b8] sm:$0xff]
    %v1686 = vld [vmem:[#allocation6 + $0x3c0] sm:$0xff]
    %v1687 = vld [vmem:[#allocation6 + $0x3c8] sm:$0xff]
    %v1688 = vld [vmem:[#allocation6 + $0x3d0] sm:$0xff]
    %v1689 = vld [vmem:[#allocation6 + $0x3d8] sm:$0xff]
    %v1690 = vld [vmem:[#allocation6 + $0x3e0] sm:$0xff]
    %v1691 = vld [vmem:[#allocation6 + $0x3e8] sm:$0xff]
    %v1692 = vld [vmem:[#allocation6 + $0x3f0] sm:$0xff]
    %v1693 = vld [vmem:[#allocation6 + $0x3f8] sm:$0xff]
    %v1694 = vld [vmem:[%s8] sm:$0xf]
    %v1696 = vlaneseq
    %v1697 = vshrl.u32 %v1696, 7
    %v1698 = vsub.s32 0, %v1697
    %v1699 = vrot.slane %v1694, %v1698
    %v1700 = vlaneseq
    %v1701 = vshrl.u32 %v1700, 7
    %v1702 = vsub.s32 1, %v1701
    %v1703 = vrot.slane %v1694, %v1702
    %v1704 = vlaneseq
    %v1705 = vshrl.u32 %v1704, 7
    %v1706 = vsub.s32 2, %v1705
    %v1707 = vrot.slane %v1694, %v1706
    %v1708 = vlaneseq
    %v1709 = vshrl.u32 %v1708, 7
    %v1710 = vsub.s32 3, %v1709
    %v1711 = vrot.slane %v1694, %v1710
    %v1844 = vunpack.c.l.b16 %v1566
    %v1845 = vunpack.c.h.b16 %v1566
    %v1846 = vunpack.c.l.b16 %v1567
    %v1847 = vunpack.c.h.b16 %v1567
    %v1848 = vunpack.c.l.b16 %v1568
    %v1849 = vunpack.c.h.b16 %v1568
    %v1850 = vunpack.c.l.b16 %v1569
    %v1851 = vunpack.c.h.b16 %v1569
    %v1852 = vunpack.c.l.b16 %v1570
    %v1853 = vunpack.c.h.b16 %v1570
    %v1854 = vunpack.c.l.b16 %v1571
    %v1855 = vunpack.c.h.b16 %v1571
    %v1856 = vunpack.c.l.b16 %v1572
    %v1857 = vunpack.c.h.b16 %v1572
    %v1858 = vunpack.c.l.b16 %v1573
    %v1859 = vunpack.c.h.b16 %v1573
    %v1860 = vunpack.c.l.b16 %v1574
    %v1861 = vunpack.c.h.b16 %v1574
    %v1862 = vunpack.c.l.b16 %v1575
    %v1863 = vunpack.c.h.b16 %v1575
    %v1864 = vunpack.c.l.b16 %v1576
    %v1865 = vunpack.c.h.b16 %v1576
    %v1866 = vunpack.c.l.b16 %v1577
    %v1867 = vunpack.c.h.b16 %v1577
    %v1868 = vunpack.c.l.b16 %v1578
    %v1869 = vunpack.c.h.b16 %v1578
    %v1870 = vunpack.c.l.b16 %v1579
    %v1871 = vunpack.c.h.b16 %v1579
    %v1872 = vunpack.c.l.b16 %v1580
    %v1873 = vunpack.c.h.b16 %v1580
    %v1874 = vunpack.c.l.b16 %v1581
    %v1875 = vunpack.c.h.b16 %v1581
    %v1876 = vunpack.c.l.b16 %v1582
    %v1877 = vunpack.c.h.b16 %v1582
    %v1878 = vunpack.c.l.b16 %v1583
    %v1879 = vunpack.c.h.b16 %v1583
    %v1880 = vunpack.c.l.b16 %v1584
    %v1881 = vunpack.c.h.b16 %v1584
    %v1882 = vunpack.c.l.b16 %v1585
    %v1883 = vunpack.c.h.b16 %v1585
    %v1884 = vunpack.c.l.b16 %v1586
    %v1885 = vunpack.c.h.b16 %v1586
    %v1886 = vunpack.c.l.b16 %v1587
    %v1887 = vunpack.c.h.b16 %v1587
    %v1888 = vunpack.c.l.b16 %v1588
    %v1889 = vunpack.c.h.b16 %v1588
    %v1890 = vunpack.c.l.b16 %v1589
    %v1891 = vunpack.c.h.b16 %v1589
    %v1892 = vunpack.c.l.b16 %v1590
    %v1893 = vunpack.c.h.b16 %v1590
    %v1894 = vunpack.c.l.b16 %v1591
    %v1895 = vunpack.c.h.b16 %v1591
    %v1896 = vunpack.c.l.b16 %v1592
    %v1897 = vunpack.c.h.b16 %v1592
    %v1898 = vunpack.c.l.b16 %v1593
    %v1899 = vunpack.c.h.b16 %v1593
    %v1900 = vunpack.c.l.b16 %v1594
    %v1901 = vunpack.c.h.b16 %v1594
    %v1902 = vunpack.c.l.b16 %v1595
    %v1903 = vunpack.c.h.b16 %v1595
    %v1904 = vunpack.c.l.b16 %v1596
    %v1905 = vunpack.c.h.b16 %v1596
    %v1906 = vunpack.c.l.b16 %v1597
    %v1907 = vunpack.c.h.b16 %v1597
    %v1908 = vunpack.c.l.b16 %v1598
    %v1909 = vunpack.c.h.b16 %v1598
    %v1910 = vunpack.c.l.b16 %v1599
    %v1911 = vunpack.c.h.b16 %v1599
    %v1912 = vunpack.c.l.b16 %v1600
    %v1913 = vunpack.c.h.b16 %v1600
    %v1914 = vunpack.c.l.b16 %v1601
    %v1915 = vunpack.c.h.b16 %v1601
    %v1916 = vunpack.c.l.b16 %v1602
    %v1917 = vunpack.c.h.b16 %v1602
    %v1918 = vunpack.c.l.b16 %v1603
    %v1919 = vunpack.c.h.b16 %v1603
    %v1920 = vunpack.c.l.b16 %v1604
    %v1921 = vunpack.c.h.b16 %v1604
    %v1922 = vunpack.c.l.b16 %v1605
    %v1923 = vunpack.c.h.b16 %v1605
    %v1924 = vunpack.c.l.b16 %v1606
    %v1925 = vunpack.c.h.b16 %v1606
    %v1926 = vunpack.c.l.b16 %v1607
    %v1927 = vunpack.c.h.b16 %v1607
    %v1928 = vunpack.c.l.b16 %v1608
    %v1929 = vunpack.c.h.b16 %v1608
    %v1930 = vunpack.c.l.b16 %v1609
    %v1931 = vunpack.c.h.b16 %v1609
    %v1932 = vunpack.c.l.b16 %v1610
    %v1933 = vunpack.c.h.b16 %v1610
    %v1934 = vunpack.c.l.b16 %v1611
    %v1935 = vunpack.c.h.b16 %v1611
    %v1936 = vunpack.c.l.b16 %v1612
    %v1937 = vunpack.c.h.b16 %v1612
    %v1938 = vunpack.c.l.b16 %v1613
    %v1939 = vunpack.c.h.b16 %v1613
    %v1940 = vunpack.c.l.b16 %v1614
    %v1941 = vunpack.c.h.b16 %v1614
    %v1942 = vunpack.c.l.b16 %v1615
    %v1943 = vunpack.c.h.b16 %v1615
    %v1944 = vunpack.c.l.b16 %v1616
    %v1945 = vunpack.c.h.b16 %v1616
    %v1946 = vunpack.c.l.b16 %v1617
    %v1947 = vunpack.c.h.b16 %v1617
    %v1948 = vunpack.c.l.b16 %v1618
    %v1949 = vunpack.c.h.b16 %v1618
    %v1950 = vunpack.c.l.b16 %v1619
    %v1951 = vunpack.c.h.b16 %v1619
    %v1952 = vunpack.c.l.b16 %v1620
    %v1953 = vunpack.c.h.b16 %v1620
    %v1954 = vunpack.c.l.b16 %v1621
    %v1955 = vunpack.c.h.b16 %v1621
    %v1956 = vunpack.c.l.b16 %v1622
    %v1957 = vunpack.c.h.b16 %v1622
    %v1958 = vunpack.c.l.b16 %v1623
    %v1959 = vunpack.c.h.b16 %v1623
    %v1960 = vunpack.c.l.b16 %v1624
    %v1961 = vunpack.c.h.b16 %v1624
    %v1962 = vunpack.c.l.b16 %v1625
    %v1963 = vunpack.c.h.b16 %v1625
    %v1964 = vunpack.c.l.b16 %v1626
    %v1965 = vunpack.c.h.b16 %v1626
    %v1966 = vunpack.c.l.b16 %v1627
    %v1967 = vunpack.c.h.b16 %v1627
    %v1968 = vunpack.c.l.b16 %v1628
    %v1969 = vunpack.c.h.b16 %v1628
    %v1970 = vunpack.c.l.b16 %v1629
    %v1971 = vunpack.c.h.b16 %v1629
    %v1972 = vunpack.c.l.b16 %v1630
    %v1973 = vunpack.c.h.b16 %v1630
    %v1974 = vunpack.c.l.b16 %v1631
    %v1975 = vunpack.c.h.b16 %v1631
    %v1976 = vunpack.c.l.b16 %v1632
    %v1977 = vunpack.c.h.b16 %v1632
    %v1978 = vunpack.c.l.b16 %v1633
    %v1979 = vunpack.c.h.b16 %v1633
    %v1980 = vunpack.c.l.b16 %v1634
    %v1981 = vunpack.c.h.b16 %v1634
    %v1982 = vunpack.c.l.b16 %v1635
    %v1983 = vunpack.c.h.b16 %v1635
    %v1984 = vunpack.c.l.b16 %v1636
    %v1985 = vunpack.c.h.b16 %v1636
    %v1986 = vunpack.c.l.b16 %v1637
    %v1987 = vunpack.c.h.b16 %v1637
    %v1988 = vunpack.c.l.b16 %v1638
    %v1989 = vunpack.c.h.b16 %v1638
    %v1990 = vunpack.c.l.b16 %v1639
    %v1991 = vunpack.c.h.b16 %v1639
    %v1992 = vunpack.c.l.b16 %v1640
    %v1993 = vunpack.c.h.b16 %v1640
    %v1994 = vunpack.c.l.b16 %v1641
    %v1995 = vunpack.c.h.b16 %v1641
    %v1996 = vunpack.c.l.b16 %v1642
    %v1997 = vunpack.c.h.b16 %v1642
    %v1998 = vunpack.c.l.b16 %v1643
    %v1999 = vunpack.c.h.b16 %v1643
    %v2000 = vunpack.c.l.b16 %v1644
    %v2001 = vunpack.c.h.b16 %v1644
    %v2002 = vunpack.c.l.b16 %v1645
    %v2003 = vunpack.c.h.b16 %v1645
    %v2004 = vunpack.c.l.b16 %v1646
    %v2005 = vunpack.c.h.b16 %v1646
    %v2006 = vunpack.c.l.b16 %v1647
    %v2007 = vunpack.c.h.b16 %v1647
    %v2008 = vunpack.c.l.b16 %v1648
    %v2009 = vunpack.c.h.b16 %v1648
    %v2010 = vunpack.c.l.b16 %v1649
    %v2011 = vunpack.c.h.b16 %v1649
    %v2012 = vunpack.c.l.b16 %v1650
    %v2013 = vunpack.c.h.b16 %v1650
    %v2014 = vunpack.c.l.b16 %v1651
    %v2015 = vunpack.c.h.b16 %v1651
    %v2016 = vunpack.c.l.b16 %v1652
    %v2017 = vunpack.c.h.b16 %v1652
    %v2018 = vunpack.c.l.b16 %v1653
    %v2019 = vunpack.c.h.b16 %v1653
    %v2020 = vunpack.c.l.b16 %v1654
    %v2021 = vunpack.c.h.b16 %v1654
    %v2022 = vunpack.c.l.b16 %v1655
    %v2023 = vunpack.c.h.b16 %v1655
    %v2024 = vunpack.c.l.b16 %v1656
    %v2025 = vunpack.c.h.b16 %v1656
    %v2026 = vunpack.c.l.b16 %v1657
    %v2027 = vunpack.c.h.b16 %v1657
    %v2028 = vunpack.c.l.b16 %v1658
    %v2029 = vunpack.c.h.b16 %v1658
    %v2030 = vunpack.c.l.b16 %v1659
    %v2031 = vunpack.c.h.b16 %v1659
    %v2032 = vunpack.c.l.b16 %v1660
    %v2033 = vunpack.c.h.b16 %v1660
    %v2034 = vunpack.c.l.b16 %v1661
    %v2035 = vunpack.c.h.b16 %v1661
    %v2036 = vunpack.c.l.b16 %v1662
    %v2037 = vunpack.c.h.b16 %v1662
    %v2038 = vunpack.c.l.b16 %v1663
    %v2039 = vunpack.c.h.b16 %v1663
    %v2040 = vunpack.c.l.b16 %v1664
    %v2041 = vunpack.c.h.b16 %v1664
    %v2042 = vunpack.c.l.b16 %v1665
    %v2043 = vunpack.c.h.b16 %v1665
    %v2044 = vunpack.c.l.b16 %v1666
    %v2045 = vunpack.c.h.b16 %v1666
    %v2046 = vunpack.c.l.b16 %v1667
    %v2047 = vunpack.c.h.b16 %v1667
    %v2048 = vunpack.c.l.b16 %v1668
    %v2049 = vunpack.c.h.b16 %v1668
    %v2050 = vunpack.c.l.b16 %v1669
    %v2051 = vunpack.c.h.b16 %v1669
    %v2052 = vunpack.c.l.b16 %v1670
    %v2053 = vunpack.c.h.b16 %v1670
    %v2054 = vunpack.c.l.b16 %v1671
    %v2055 = vunpack.c.h.b16 %v1671
    %v2056 = vunpack.c.l.b16 %v1672
    %v2057 = vunpack.c.h.b16 %v1672
    %v2058 = vunpack.c.l.b16 %v1673
    %v2059 = vunpack.c.h.b16 %v1673
    %v2060 = vunpack.c.l.b16 %v1674
    %v2061 = vunpack.c.h.b16 %v1674
    %v2062 = vunpack.c.l.b16 %v1675
    %v2063 = vunpack.c.h.b16 %v1675
    %v2064 = vunpack.c.l.b16 %v1676
    %v2065 = vunpack.c.h.b16 %v1676
    %v2066 = vunpack.c.l.b16 %v1677
    %v2067 = vunpack.c.h.b16 %v1677
    %v2068 = vunpack.c.l.b16 %v1678
    %v2069 = vunpack.c.h.b16 %v1678
    %v2070 = vunpack.c.l.b16 %v1679
    %v2071 = vunpack.c.h.b16 %v1679
    %v2072 = vunpack.c.l.b16 %v1680
    %v2073 = vunpack.c.h.b16 %v1680
    %v2074 = vunpack.c.l.b16 %v1681
    %v2075 = vunpack.c.h.b16 %v1681
    %v2076 = vunpack.c.l.b16 %v1682
    %v2077 = vunpack.c.h.b16 %v1682
    %v2078 = vunpack.c.l.b16 %v1683
    %v2079 = vunpack.c.h.b16 %v1683
    %v2080 = vunpack.c.l.b16 %v1684
    %v2081 = vunpack.c.h.b16 %v1684
    %v2082 = vunpack.c.l.b16 %v1685
    %v2083 = vunpack.c.h.b16 %v1685
    %v2084 = vunpack.c.l.b16 %v1686
    %v2085 = vunpack.c.h.b16 %v1686
    %v2086 = vunpack.c.l.b16 %v1687
    %v2087 = vunpack.c.h.b16 %v1687
    %v2088 = vunpack.c.l.b16 %v1688
    %v2089 = vunpack.c.h.b16 %v1688
    %v2090 = vunpack.c.l.b16 %v1689
    %v2091 = vunpack.c.h.b16 %v1689
    %v2092 = vunpack.c.l.b16 %v1690
    %v2093 = vunpack.c.h.b16 %v1690
    %v2094 = vunpack.c.l.b16 %v1691
    %v2095 = vunpack.c.h.b16 %v1691
    %v2096 = vunpack.c.l.b16 %v1692
    %v2097 = vunpack.c.h.b16 %v1692
    %v2098 = vunpack.c.l.b16 %v1693
    %v2099 = vunpack.c.h.b16 %v1693
    %v2100 = vpack.c.b16 %v1848, %v1844
    %v2101 = vpack.c.b16 %v1849, %v1845
    %v2102 = vpack.c.b16 %v1850, %v1846
    %v2103 = vpack.c.b16 %v1851, %v1847
    %v2104 = vpack.c.b16 %v1856, %v1852
    %v2105 = vpack.c.b16 %v1857, %v1853
    %v2106 = vpack.c.b16 %v1858, %v1854
    %v2107 = vpack.c.b16 %v1859, %v1855
    %v2108 = vpack.c.b16 %v1864, %v1860
    %v2109 = vpack.c.b16 %v1865, %v1861
    %v2110 = vpack.c.b16 %v1866, %v1862
    %v2111 = vpack.c.b16 %v1867, %v1863
    %v2112 = vpack.c.b16 %v1872, %v1868
    %v2113 = vpack.c.b16 %v1873, %v1869
    %v2114 = vpack.c.b16 %v1874, %v1870
    %v2115 = vpack.c.b16 %v1875, %v1871
    %v2116 = vpack.c.b16 %v1880, %v1876
    %v2117 = vpack.c.b16 %v1881, %v1877
    %v2118 = vpack.c.b16 %v1882, %v1878
    %v2119 = vpack.c.b16 %v1883, %v1879
    %v2120 = vpack.c.b16 %v1888, %v1884
    %v2121 = vpack.c.b16 %v1889, %v1885
    %v2122 = vpack.c.b16 %v1890, %v1886
    %v2123 = vpack.c.b16 %v1891, %v1887
    %v2124 = vpack.c.b16 %v1896, %v1892
    %v2125 = vpack.c.b16 %v1897, %v1893
    %v2126 = vpack.c.b16 %v1898, %v1894
    %v2127 = vpack.c.b16 %v1899, %v1895
    %v2128 = vpack.c.b16 %v1904, %v1900
    %v2129 = vpack.c.b16 %v1905, %v1901
    %v2130 = vpack.c.b16 %v1906, %v1902
    %v2131 = vpack.c.b16 %v1907, %v1903
    %v2132 = vpack.c.b16 %v1912, %v1908
    %v2133 = vpack.c.b16 %v1913, %v1909
    %v2134 = vpack.c.b16 %v1914, %v1910
    %v2135 = vpack.c.b16 %v1915, %v1911
    %v2136 = vpack.c.b16 %v1920, %v1916
    %v2137 = vpack.c.b16 %v1921, %v1917
    %v2138 = vpack.c.b16 %v1922, %v1918
    %v2139 = vpack.c.b16 %v1923, %v1919
    %v2140 = vpack.c.b16 %v1928, %v1924
    %v2141 = vpack.c.b16 %v1929, %v1925
    %v2142 = vpack.c.b16 %v1930, %v1926
    %v2143 = vpack.c.b16 %v1931, %v1927
    %v2144 = vpack.c.b16 %v1936, %v1932
    %v2145 = vpack.c.b16 %v1937, %v1933
    %v2146 = vpack.c.b16 %v1938, %v1934
    %v2147 = vpack.c.b16 %v1939, %v1935
    %v2148 = vpack.c.b16 %v1944, %v1940
    %v2149 = vpack.c.b16 %v1945, %v1941
    %v2150 = vpack.c.b16 %v1946, %v1942
    %v2151 = vpack.c.b16 %v1947, %v1943
    %v2152 = vpack.c.b16 %v1952, %v1948
    %v2153 = vpack.c.b16 %v1953, %v1949
    %v2154 = vpack.c.b16 %v1954, %v1950
    %v2155 = vpack.c.b16 %v1955, %v1951
    %v2156 = vpack.c.b16 %v1960, %v1956
    %v2157 = vpack.c.b16 %v1961, %v1957
    %v2158 = vpack.c.b16 %v1962, %v1958
    %v2159 = vpack.c.b16 %v1963, %v1959
    %v2160 = vpack.c.b16 %v1968, %v1964
    %v2161 = vpack.c.b16 %v1969, %v1965
    %v2162 = vpack.c.b16 %v1970, %v1966
    %v2163 = vpack.c.b16 %v1971, %v1967
    %v2164 = vpack.c.b16 %v1976, %v1972
    %v2165 = vpack.c.b16 %v1977, %v1973
    %v2166 = vpack.c.b16 %v1978, %v1974
    %v2167 = vpack.c.b16 %v1979, %v1975
    %v2168 = vpack.c.b16 %v1984, %v1980
    %v2169 = vpack.c.b16 %v1985, %v1981
    %v2170 = vpack.c.b16 %v1986, %v1982
    %v2171 = vpack.c.b16 %v1987, %v1983
    %v2172 = vpack.c.b16 %v1992, %v1988
    %v2173 = vpack.c.b16 %v1993, %v1989
    %v2174 = vpack.c.b16 %v1994, %v1990
    %v2175 = vpack.c.b16 %v1995, %v1991
    %v2176 = vpack.c.b16 %v2000, %v1996
    %v2177 = vpack.c.b16 %v2001, %v1997
    %v2178 = vpack.c.b16 %v2002, %v1998
    %v2179 = vpack.c.b16 %v2003, %v1999
    %v2180 = vpack.c.b16 %v2008, %v2004
    %v2181 = vpack.c.b16 %v2009, %v2005
    %v2182 = vpack.c.b16 %v2010, %v2006
    %v2183 = vpack.c.b16 %v2011, %v2007
    %v2184 = vpack.c.b16 %v2016, %v2012
    %v2185 = vpack.c.b16 %v2017, %v2013
    %v2186 = vpack.c.b16 %v2018, %v2014
    %v2187 = vpack.c.b16 %v2019, %v2015
    %v2188 = vpack.c.b16 %v2024, %v2020
    %v2189 = vpack.c.b16 %v2025, %v2021
    %v2190 = vpack.c.b16 %v2026, %v2022
    %v2191 = vpack.c.b16 %v2027, %v2023
    %v2192 = vpack.c.b16 %v2032, %v2028
    %v2193 = vpack.c.b16 %v2033, %v2029
    %v2194 = vpack.c.b16 %v2034, %v2030
    %v2195 = vpack.c.b16 %v2035, %v2031
    %v2196 = vpack.c.b16 %v2040, %v2036
    %v2197 = vpack.c.b16 %v2041, %v2037
    %v2198 = vpack.c.b16 %v2042, %v2038
    %v2199 = vpack.c.b16 %v2043, %v2039
    %v2200 = vpack.c.b16 %v2048, %v2044
    %v2201 = vpack.c.b16 %v2049, %v2045
    %v2202 = vpack.c.b16 %v2050, %v2046
    %v2203 = vpack.c.b16 %v2051, %v2047
    %v2204 = vpack.c.b16 %v2056, %v2052
    %v2205 = vpack.c.b16 %v2057, %v2053
    %v2206 = vpack.c.b16 %v2058, %v2054
    %v2207 = vpack.c.b16 %v2059, %v2055
    %v2208 = vpack.c.b16 %v2064, %v2060
    %v2209 = vpack.c.b16 %v2065, %v2061
    %v2210 = vpack.c.b16 %v2066, %v2062
    %v2211 = vpack.c.b16 %v2067, %v2063
    %v2212 = vpack.c.b16 %v2072, %v2068
    %v2213 = vpack.c.b16 %v2073, %v2069
    %v2214 = vpack.c.b16 %v2074, %v2070
    %v2215 = vpack.c.b16 %v2075, %v2071
    %v2216 = vpack.c.b16 %v2080, %v2076
    %v2217 = vpack.c.b16 %v2081, %v2077
    %v2218 = vpack.c.b16 %v2082, %v2078
    %v2219 = vpack.c.b16 %v2083, %v2079
    %v2220 = vpack.c.b16 %v2088, %v2084
    %v2221 = vpack.c.b16 %v2089, %v2085
    %v2222 = vpack.c.b16 %v2090, %v2086
    %v2223 = vpack.c.b16 %v2091, %v2087
    %v2224 = vpack.c.b16 %v2096, %v2092
    %v2225 = vpack.c.b16 %v2097, %v2093
    %v2226 = vpack.c.b16 %v2098, %v2094
    %v2227 = vpack.c.b16 %v2099, %v2095
    %2356 = vmatprep.subr.bf16.mxu0 %v2129
    %2357 = vmatpush1.bf16.msra.mxu0 %v2128
    %2358 = vmatprep.subr.bf16.mxu0 %v2125
    %2359 = vmatpush1.bf16.msra.mxu0 %v2124
    %2360 = vmatprep.subr.bf16.mxu0 %v2121
    %2361 = vmatpush1.bf16.msra.mxu0 %v2120
    %2362 = vmatprep.subr.bf16.mxu0 %v2117
    %2363 = vmatpush1.bf16.msra.mxu0 %v2116
    %2364 = vmatprep.subr.bf16.mxu0 %v2113
    %2365 = vmatpush1.bf16.msra.mxu0 %v2112
    %2366 = vmatprep.subr.bf16.mxu0 %v2109
    %2367 = vmatpush1.bf16.msra.mxu0 %v2108
    %2368 = vmatprep.subr.bf16.mxu0 %v2105
    %2369 = vmatpush1.bf16.msra.mxu0 %v2104
    %2370 = vmatprep.subr.bf16.mxu0 %v2101
    %2371 = vmatpush1.bf16.msra.mxu0 %v2100
    %2372 = vmatprep.subr.bf16.mxu0 %v2161
    %2373 = vmatpush2.bf16.msra.mxu0 %v2160
    %2374 = vmatprep.subr.bf16.mxu0 %v2157
    %2375 = vmatpush2.bf16.msra.mxu0 %v2156
    %2376 = vmatprep.subr.bf16.mxu0 %v2153
    %2377 = vmatpush2.bf16.msra.mxu0 %v2152
    %2378 = vmatprep.subr.bf16.mxu0 %v2149
    %2379 = vmatpush2.bf16.msra.mxu0 %v2148
    %2380 = vmatprep.subr.bf16.mxu0 %v2145
    %2381 = vmatpush2.bf16.msra.mxu0 %v2144
    %2382 = vmatprep.subr.bf16.mxu0 %v2141
    %2383 = vmatpush2.bf16.msra.mxu0 %v2140
    %2384 = vmatprep.subr.bf16.mxu0 %v2137
    %2385 = vmatpush2.bf16.msra.mxu0 %v2136
    %2386 = vmatprep.subr.bf16.mxu0 %v2133
    %2387 = vmatpush2.bf16.msra.mxu0 %v2132
    %2388 = vmatprep.mubr.bf16.mxu0 %v1563
    %2389 = vmatmul.mubr.bf16.gmra.mxu0 %v1562
    %v2390 = vpop.f32.mrf.mxu0
    %v2391 = vadd.f32 %v1699, %v2390
    %v2392 = vpop.f32.mrf.mxu0
    %v2393 = vadd.f32 %v1703, %v2392
    %v2394 = vpop.f32.mrf.mxu0
    %v2395 = vpop.f32.mrf.mxu0
    %2396 = vdwg.mxu0
    %2397 = vmatprep.subr.bf16.mxu0 %v2193
    %2398 = vmatpush1.bf16.msra.mxu0 %v2192
    %2399 = vmatprep.subr.bf16.mxu0 %v2189
    %2400 = vmatpush1.bf16.msra.mxu0 %v2188
    %2401 = vmatprep.subr.bf16.mxu0 %v2185
    %2402 = vmatpush1.bf16.msra.mxu0 %v2184
    %2403 = vmatprep.subr.bf16.mxu0 %v2181
    %2404 = vmatpush1.bf16.msra.mxu0 %v2180
    %2405 = vmatprep.subr.bf16.mxu0 %v2177
    %2406 = vmatpush1.bf16.msra.mxu0 %v2176
    %2407 = vmatprep.subr.bf16.mxu0 %v2173
    %2408 = vmatpush1.bf16.msra.mxu0 %v2172
    %2409 = vmatprep.subr.bf16.mxu0 %v2169
    %2410 = vmatpush1.bf16.msra.mxu0 %v2168
    %2411 = vmatprep.subr.bf16.mxu0 %v2165
    %2412 = vmatpush1.bf16.msra.mxu0 %v2164
    %2413 = vmatprep.subr.bf16.mxu0 %v2225
    %2414 = vmatpush2.bf16.msra.mxu0 %v2224
    %2415 = vmatprep.subr.bf16.mxu0 %v2221
    %2416 = vmatpush2.bf16.msra.mxu0 %v2220
    %2417 = vmatprep.subr.bf16.mxu0 %v2217
    %2418 = vmatpush2.bf16.msra.mxu0 %v2216
    %2419 = vmatprep.subr.bf16.mxu0 %v2213
    %2420 = vmatpush2.bf16.msra.mxu0 %v2212
    %2421 = vmatprep.subr.bf16.mxu0 %v2209
    %2422 = vmatpush2.bf16.msra.mxu0 %v2208
    %2423 = vmatprep.subr.bf16.mxu0 %v2205
    %2424 = vmatpush2.bf16.msra.mxu0 %v2204
    %2425 = vmatprep.subr.bf16.mxu0 %v2201
    %2426 = vmatpush2.bf16.msra.mxu0 %v2200
    %2427 = vmatprep.subr.bf16.mxu0 %v2197
    %2428 = vmatpush2.bf16.msra.mxu0 %v2196
    %2429 = vmatprep.mubr.bf16.mxu0 %v1565
    %2430 = vmatmul.mubr.bf16.gmra.mxu0 %v1564
    %v2431 = vpop.f32.mrf.mxu0
    %v2432 = vadd.f32 %v2391, %v2431
    %v2433 = vpop.f32.mrf.mxu0
    %v2434 = vadd.f32 %v2393, %v2433
    %v2435 = vpop.f32.mrf.mxu0
    %v2436 = vpop.f32.mrf.mxu0
    %2437 = vdwg.mxu0
    %2438 = vmatprep.subr.bf16.mxu0 %v2131
    %2439 = vmatpush1.bf16.msra.mxu0 %v2130
    %2440 = vmatprep.subr.bf16.mxu0 %v2127
    %2441 = vmatpush1.bf16.msra.mxu0 %v2126
    %2442 = vmatprep.subr.bf16.mxu0 %v2123
    %2443 = vmatpush1.bf16.msra.mxu0 %v2122
    %2444 = vmatprep.subr.bf16.mxu0 %v2119
    %2445 = vmatpush1.bf16.msra.mxu0 %v2118
    %2446 = vmatprep.subr.bf16.mxu0 %v2115
    %2447 = vmatpush1.bf16.msra.mxu0 %v2114
    %2448 = vmatprep.subr.bf16.mxu0 %v2111
    %2449 = vmatpush1.bf16.msra.mxu0 %v2110
    %2450 = vmatprep.subr.bf16.mxu0 %v2107
    %2451 = vmatpush1.bf16.msra.mxu0 %v2106
    %2452 = vmatprep.subr.bf16.mxu0 %v2103
    %2453 = vmatpush1.bf16.msra.mxu0 %v2102
    %2454 = vmatprep.subr.bf16.mxu0 %v2163
    %2455 = vmatpush2.bf16.msra.mxu0 %v2162
    %2456 = vmatprep.subr.bf16.mxu0 %v2159
    %2457 = vmatpush2.bf16.msra.mxu0 %v2158
    %2458 = vmatprep.subr.bf16.mxu0 %v2155
    %2459 = vmatpush2.bf16.msra.mxu0 %v2154
    %2460 = vmatprep.subr.bf16.mxu0 %v2151
    %2461 = vmatpush2.bf16.msra.mxu0 %v2150
    %2462 = vmatprep.subr.bf16.mxu0 %v2147
    %2463 = vmatpush2.bf16.msra.mxu0 %v2146
    %2464 = vmatprep.subr.bf16.mxu0 %v2143
    %2465 = vmatpush2.bf16.msra.mxu0 %v2142
    %2466 = vmatprep.subr.bf16.mxu0 %v2139
    %2467 = vmatpush2.bf16.msra.mxu0 %v2138
    %2468 = vmatprep.subr.bf16.mxu0 %v2135
    %2469 = vmatpush2.bf16.msra.mxu0 %v2134
    %2470 = vmatprep.mubr.bf16.mxu0 %v1563
    %2471 = vmatmul.mubr.bf16.gmra.mxu0 %v1562
    %v2472 = vpop.f32.mrf.mxu0
    %v2473 = vadd.f32 %v1707, %v2472
    %v2474 = vpop.f32.mrf.mxu0
    %v2475 = vadd.f32 %v1711, %v2474
    %v2476 = vpop.f32.mrf.mxu0
    %v2477 = vpop.f32.mrf.mxu0
    %2478 = vdwg.mxu0
    %2479 = vmatprep.subr.bf16.mxu0 %v2195
    %2480 = vmatpush1.bf16.msra.mxu0 %v2194
    %2481 = vmatprep.subr.bf16.mxu0 %v2191
    %2482 = vmatpush1.bf16.msra.mxu0 %v2190
    %2483 = vmatprep.subr.bf16.mxu0 %v2187
    %2484 = vmatpush1.bf16.msra.mxu0 %v2186
    %2485 = vmatprep.subr.bf16.mxu0 %v2183
    %2486 = vmatpush1.bf16.msra.mxu0 %v2182
    %2487 = vmatprep.subr.bf16.mxu0 %v2179
    %2488 = vmatpush1.bf16.msra.mxu0 %v2178
    %2489 = vmatprep.subr.bf16.mxu0 %v2175
    %2490 = vmatpush1.bf16.msra.mxu0 %v2174
    %2491 = vmatprep.subr.bf16.mxu0 %v2171
    %2492 = vmatpush1.bf16.msra.mxu0 %v2170
    %2493 = vmatprep.subr.bf16.mxu0 %v2167
    %2494 = vmatpush1.bf16.msra.mxu0 %v2166
    %2495 = vmatprep.subr.bf16.mxu0 %v2227
    %2496 = vmatpush2.bf16.msra.mxu0 %v2226
    %2497 = vmatprep.subr.bf16.mxu0 %v2223
    %2498 = vmatpush2.bf16.msra.mxu0 %v2222
    %2499 = vmatprep.subr.bf16.mxu0 %v2219
    %2500 = vmatpush2.bf16.msra.mxu0 %v2218
    %2501 = vmatprep.subr.bf16.mxu0 %v2215
    %2502 = vmatpush2.bf16.msra.mxu0 %v2214
    %2503 = vmatprep.subr.bf16.mxu0 %v2211
    %2504 = vmatpush2.bf16.msra.mxu0 %v2210
    %2505 = vmatprep.subr.bf16.mxu0 %v2207
    %2506 = vmatpush2.bf16.msra.mxu0 %v2206
    %2507 = vmatprep.subr.bf16.mxu0 %v2203
    %2508 = vmatpush2.bf16.msra.mxu0 %v2202
    %2509 = vmatprep.subr.bf16.mxu0 %v2199
    %2510 = vmatpush2.bf16.msra.mxu0 %v2198
    %2511 = vmatprep.mubr.bf16.mxu0 %v1565
    %2512 = vmatmul.mubr.bf16.gmra.mxu0 %v1564
    %v2513 = vpop.f32.mrf.mxu0
    %v2514 = vadd.f32 %v2473, %v2513
    %v2515 = vpop.f32.mrf.mxu0
    %v2516 = vadd.f32 %v2475, %v2515
    %v2517 = vpop.f32.mrf.mxu0
    %v2518 = vpop.f32.mrf.mxu0
    %2519 = vdwg.mxu0
    %v2520 = vmul.f32 %v2432, 0.5
    %v2521 = vmul.f32 %v2434, 0.5
    %v2522 = vmul.f32 %v2514, 0.5
    %v2523 = vmul.f32 %v2516, 0.5
    %v2524 = vmul.f32 %v2432, 0.70710677
    %v2525 = vmul.f32 %v2434, 0.70710677
    %v2526 = vmul.f32 %v2514, 0.70710677
    %v2527 = vmul.f32 %v2516, 0.70710677
    %vm2528 = vcmp.lt.f32.partialorder %v2524, 0.0
    %vm2529 = vcmp.lt.f32.partialorder %v2525, 0.0
    %vm2530 = vcmp.lt.f32.partialorder %v2526, 0.0
    %vm2531 = vcmp.lt.f32.partialorder %v2527, 0.0
    %v2532 = vsel %vm2528, -1.0, 1.0
    %v2533 = vsel %vm2529, -1.0, 1.0
    %v2534 = vsel %vm2530, -1.0, 1.0
    %v2535 = vsel %vm2531, -1.0, 1.0
    %v2536 = vand.u32 2147483647, %v2524
    %v2537 = vand.u32 2147483647, %v2525
    %v2538 = vand.u32 2147483647, %v2526
    %v2539 = vand.u32 2147483647, %v2527
    %v2540 = vmul.f32 %v2536, 0.3275911
    %v2541 = vmul.f32 %v2537, 0.3275911
    %v2542 = vmul.f32 %v2538, 0.3275911
    %v2543 = vmul.f32 %v2539, 0.3275911
    %v2544 = vadd.f32 %v2540, 1.0
    %v2545 = vadd.f32 %v2541, 1.0
    %v2546 = vadd.f32 %v2542, 1.0
    %v2547 = vadd.f32 %v2543, 1.0
    %v2548 = vrcp.pop %v2544
    %v2549 = vmul.f32 1.0, %v2548
    %v2550 = vrcp.pop %v2545
    %v2551 = vmul.f32 1.0, %v2550
    %v2552 = vrcp.pop %v2546
    %v2553 = vmul.f32 1.0, %v2552
    %v2554 = vrcp.pop %v2547
    %v2555 = vmul.f32 1.0, %v2554
    %v2556 = vmul.f32 %v2549, 1.0614054
    %v2557 = vmul.f32 %v2551, 1.0614054
    %v2558 = vmul.f32 %v2553, 1.0614054
    %v2559 = vmul.f32 %v2555, 1.0614054
    %v2560 = vadd.f32 %v2556, -1.4531521
    %v2561 = vadd.f32 %v2557, -1.4531521
    %v2562 = vadd.f32 %v2558, -1.4531521
    %v2563 = vadd.f32 %v2559, -1.4531521
    %v2564 = vmul.f32 %v2560, %v2549
    %v2565 = vmul.f32 %v2561, %v2551
    %v2566 = vmul.f32 %v2562, %v2553
    %v2567 = vmul.f32 %v2563, %v2555
    %v2568 = vadd.f32 %v2564, 1.4214138
    %v2569 = vadd.f32 %v2565, 1.4214138
    %v2570 = vadd.f32 %v2566, 1.4214138
    %v2571 = vadd.f32 %v2567, 1.4214138
    %v2572 = vmul.f32 %v2568, %v2549
    %v2573 = vmul.f32 %v2569, %v2551
    %v2574 = vmul.f32 %v2570, %v2553
    %v2575 = vmul.f32 %v2571, %v2555
    %v2576 = vadd.f32 %v2572, -0.28449672
    %v2577 = vadd.f32 %v2573, -0.28449672
    %v2578 = vadd.f32 %v2574, -0.28449672
    %v2579 = vadd.f32 %v2575, -0.28449672
    %v2580 = vmul.f32 %v2576, %v2549
    %v2581 = vmul.f32 %v2577, %v2551
    %v2582 = vmul.f32 %v2578, %v2553
    %v2583 = vmul.f32 %v2579, %v2555
    %v2584 = vadd.f32 %v2580, 0.2548296
    %v2585 = vadd.f32 %v2581, 0.2548296
    %v2586 = vadd.f32 %v2582, 0.2548296
    %v2587 = vadd.f32 %v2583, 0.2548296
    %v2588 = vmul.f32 %v2584, %v2549
    %v2589 = vmul.f32 %v2585, %v2551
    %v2590 = vmul.f32 %v2586, %v2553
    %v2591 = vmul.f32 %v2587, %v2555
    %v2592 = vsub.f32 0.0, %v2536
    %v2593 = vsub.f32 0.0, %v2537
    %v2594 = vsub.f32 0.0, %v2538
    %v2595 = vsub.f32 0.0, %v2539
    %v2596 = vmul.f32 %v2592, %v2536
    %v2597 = vmul.f32 %v2593, %v2537
    %v2598 = vmul.f32 %v2594, %v2538
    %v2599 = vmul.f32 %v2595, %v2539
    %v2600 = vmul.f32 %v2596, 1.442695
    %v2601 = vpow.pop %v2600
    %v2602 = vmul.f32 %v2597, 1.442695
    %v2603 = vpow.pop %v2602
    %v2604 = vmul.f32 %v2598, 1.442695
    %v2605 = vpow.pop %v2604
    %v2606 = vmul.f32 %v2599, 1.442695
    %v2607 = vpow.pop %v2606
    %v2608 = vmul.f32 %v2588, %v2601
    %v2609 = vmul.f32 %v2589, %v2603
    %v2610 = vmul.f32 %v2590, %v2605
    %v2611 = vmul.f32 %v2591, %v2607
    %v2612 = vsub.f32 1.0, %v2608
    %v2613 = vsub.f32 1.0, %v2609
    %v2614 = vsub.f32 1.0, %v2610
    %v2615 = vsub.f32 1.0, %v2611
    %v2616 = vmul.f32 %v2532, %v2612
    %v2617 = vmul.f32 %v2533, %v2613
    %v2618 = vmul.f32 %v2534, %v2614
    %v2619 = vmul.f32 %v2535, %v2615
    %v2620 = vadd.f32 %v2616, 1.0
    %v2621 = vadd.f32 %v2617, 1.0
    %v2622 = vadd.f32 %v2618, 1.0
    %v2623 = vadd.f32 %v2619, 1.0
    %v2624 = vmul.f32 %v2520, %v2620
    %v2625 = vmul.f32 %v2521, %v2621
    %v2626 = vmul.f32 %v2522, %v2622
    %v2627 = vmul.f32 %v2523, %v2623
    %v2628 = vpack.c.bf16 %v2624, %v2624
    %v2629 = vpack.c.bf16 %v2625, %v2625
    %v2630 = vpack.c.bf16 %v2626, %v2626
    %v2631 = vpack.c.bf16 %v2627, %v2627
    %v2632 = vld [vmem:[#allocation7] sm:$0xff]
    %v2633 = vld [vmem:[#allocation7 + $0x8] sm:$0xff]
    %v2634 = vld [vmem:[#allocation7 + $0x10] sm:$0xff]
    %v2635 = vld [vmem:[#allocation7 + $0x18] sm:$0xff]
    %v2636 = vld [vmem:[#allocation7 + $0x20] sm:$0xff]
    %v2637 = vld [vmem:[#allocation7 + $0x28] sm:$0xff]
    %v2638 = vld [vmem:[#allocation7 + $0x30] sm:$0xff]
    %v2639 = vld [vmem:[#allocation7 + $0x38] sm:$0xff]
    %v2640 = vld [vmem:[#allocation7 + $0x40] sm:$0xff]
    %v2641 = vld [vmem:[#allocation7 + $0x48] sm:$0xff]
    %v2642 = vld [vmem:[#allocation7 + $0x50] sm:$0xff]
    %v2643 = vld [vmem:[#allocation7 + $0x58] sm:$0xff]
    %v2644 = vld [vmem:[#allocation7 + $0x60] sm:$0xff]
    %v2645 = vld [vmem:[#allocation7 + $0x68] sm:$0xff]
    %v2646 = vld [vmem:[#allocation7 + $0x70] sm:$0xff]
    %v2647 = vld [vmem:[#allocation7 + $0x78] sm:$0xff]
    %v2648 = vld [vmem:[#allocation7 + $0x80] sm:$0xff]
    %v2649 = vld [vmem:[#allocation7 + $0x88] sm:$0xff]
    %v2650 = vld [vmem:[#allocation7 + $0x90] sm:$0xff]
    %v2651 = vld [vmem:[#allocation7 + $0x98] sm:$0xff]
    %v2652 = vld [vmem:[#allocation7 + $0xa0] sm:$0xff]
    %v2653 = vld [vmem:[#allocation7 + $0xa8] sm:$0xff]
    %v2654 = vld [vmem:[#allocation7 + $0xb0] sm:$0xff]
    %v2655 = vld [vmem:[#allocation7 + $0xb8] sm:$0xff]
    %v2656 = vld [vmem:[#allocation7 + $0xc0] sm:$0xff]
    %v2657 = vld [vmem:[#allocation7 + $0xc8] sm:$0xff]
    %v2658 = vld [vmem:[#allocation7 + $0xd0] sm:$0xff]
    %v2659 = vld [vmem:[#allocation7 + $0xd8] sm:$0xff]
    %v2660 = vld [vmem:[#allocation7 + $0xe0] sm:$0xff]
    %v2661 = vld [vmem:[#allocation7 + $0xe8] sm:$0xff]
    %v2662 = vld [vmem:[#allocation7 + $0xf0] sm:$0xff]
    %v2663 = vld [vmem:[#allocation7 + $0xf8] sm:$0xff]
    %v2664 = vld [vmem:[#allocation7 + $0x100] sm:$0xff]
    %v2665 = vld [vmem:[#allocation7 + $0x108] sm:$0xff]
    %v2666 = vld [vmem:[#allocation7 + $0x110] sm:$0xff]
    %v2667 = vld [vmem:[#allocation7 + $0x118] sm:$0xff]
    %v2668 = vld [vmem:[#allocation7 + $0x120] sm:$0xff]
    %v2669 = vld [vmem:[#allocation7 + $0x128] sm:$0xff]
    %v2670 = vld [vmem:[#allocation7 + $0x130] sm:$0xff]
    %v2671 = vld [vmem:[#allocation7 + $0x138] sm:$0xff]
    %v2672 = vld [vmem:[#allocation7 + $0x140] sm:$0xff]
    %v2673 = vld [vmem:[#allocation7 + $0x148] sm:$0xff]
    %v2674 = vld [vmem:[#allocation7 + $0x150] sm:$0xff]
    %v2675 = vld [vmem:[#allocation7 + $0x158] sm:$0xff]
    %v2676 = vld [vmem:[#allocation7 + $0x160] sm:$0xff]
    %v2677 = vld [vmem:[#allocation7 + $0x168] sm:$0xff]
    %v2678 = vld [vmem:[#allocation7 + $0x170] sm:$0xff]
    %v2679 = vld [vmem:[#allocation7 + $0x178] sm:$0xff]
    %v2680 = vld [vmem:[#allocation7 + $0x180] sm:$0xff]
    %v2681 = vld [vmem:[#allocation7 + $0x188] sm:$0xff]
    %v2682 = vld [vmem:[#allocation7 + $0x190] sm:$0xff]
    %v2683 = vld [vmem:[#allocation7 + $0x198] sm:$0xff]
    %v2684 = vld [vmem:[#allocation7 + $0x1a0] sm:$0xff]
    %v2685 = vld [vmem:[#allocation7 + $0x1a8] sm:$0xff]
    %v2686 = vld [vmem:[#allocation7 + $0x1b0] sm:$0xff]
    %v2687 = vld [vmem:[#allocation7 + $0x1b8] sm:$0xff]
    %v2688 = vld [vmem:[#allocation7 + $0x1c0] sm:$0xff]
    %v2689 = vld [vmem:[#allocation7 + $0x1c8] sm:$0xff]
    %v2690 = vld [vmem:[#allocation7 + $0x1d0] sm:$0xff]
    %v2691 = vld [vmem:[#allocation7 + $0x1d8] sm:$0xff]
    %v2692 = vld [vmem:[#allocation7 + $0x1e0] sm:$0xff]
    %v2693 = vld [vmem:[#allocation7 + $0x1e8] sm:$0xff]
    %v2694 = vld [vmem:[#allocation7 + $0x1f0] sm:$0xff]
    %v2695 = vld [vmem:[#allocation7 + $0x1f8] sm:$0xff]
    %v2696 = vld [vmem:[#allocation7 + $0x200] sm:$0xff]
    %v2697 = vld [vmem:[#allocation7 + $0x208] sm:$0xff]
    %v2698 = vld [vmem:[#allocation7 + $0x210] sm:$0xff]
    %v2699 = vld [vmem:[#allocation7 + $0x218] sm:$0xff]
    %v2700 = vld [vmem:[#allocation7 + $0x220] sm:$0xff]
    %v2701 = vld [vmem:[#allocation7 + $0x228] sm:$0xff]
    %v2702 = vld [vmem:[#allocation7 + $0x230] sm:$0xff]
    %v2703 = vld [vmem:[#allocation7 + $0x238] sm:$0xff]
    %v2704 = vld [vmem:[#allocation7 + $0x240] sm:$0xff]
    %v2705 = vld [vmem:[#allocation7 + $0x248] sm:$0xff]
    %v2706 = vld [vmem:[#allocation7 + $0x250] sm:$0xff]
    %v2707 = vld [vmem:[#allocation7 + $0x258] sm:$0xff]
    %v2708 = vld [vmem:[#allocation7 + $0x260] sm:$0xff]
    %v2709 = vld [vmem:[#allocation7 + $0x268] sm:$0xff]
    %v2710 = vld [vmem:[#allocation7 + $0x270] sm:$0xff]
    %v2711 = vld [vmem:[#allocation7 + $0x278] sm:$0xff]
    %v2712 = vld [vmem:[#allocation7 + $0x280] sm:$0xff]
    %v2713 = vld [vmem:[#allocation7 + $0x288] sm:$0xff]
    %v2714 = vld [vmem:[#allocation7 + $0x290] sm:$0xff]
    %v2715 = vld [vmem:[#allocation7 + $0x298] sm:$0xff]
    %v2716 = vld [vmem:[#allocation7 + $0x2a0] sm:$0xff]
    %v2717 = vld [vmem:[#allocation7 + $0x2a8] sm:$0xff]
    %v2718 = vld [vmem:[#allocation7 + $0x2b0] sm:$0xff]
    %v2719 = vld [vmem:[#allocation7 + $0x2b8] sm:$0xff]
    %v2720 = vld [vmem:[#allocation7 + $0x2c0] sm:$0xff]
    %v2721 = vld [vmem:[#allocation7 + $0x2c8] sm:$0xff]
    %v2722 = vld [vmem:[#allocation7 + $0x2d0] sm:$0xff]
    %v2723 = vld [vmem:[#allocation7 + $0x2d8] sm:$0xff]
    %v2724 = vld [vmem:[#allocation7 + $0x2e0] sm:$0xff]
    %v2725 = vld [vmem:[#allocation7 + $0x2e8] sm:$0xff]
    %v2726 = vld [vmem:[#allocation7 + $0x2f0] sm:$0xff]
    %v2727 = vld [vmem:[#allocation7 + $0x2f8] sm:$0xff]
    %v2728 = vld [vmem:[#allocation7 + $0x300] sm:$0xff]
    %v2729 = vld [vmem:[#allocation7 + $0x308] sm:$0xff]
    %v2730 = vld [vmem:[#allocation7 + $0x310] sm:$0xff]
    %v2731 = vld [vmem:[#allocation7 + $0x318] sm:$0xff]
    %v2732 = vld [vmem:[#allocation7 + $0x320] sm:$0xff]
    %v2733 = vld [vmem:[#allocation7 + $0x328] sm:$0xff]
    %v2734 = vld [vmem:[#allocation7 + $0x330] sm:$0xff]
    %v2735 = vld [vmem:[#allocation7 + $0x338] sm:$0xff]
    %v2736 = vld [vmem:[#allocation7 + $0x340] sm:$0xff]
    %v2737 = vld [vmem:[#allocation7 + $0x348] sm:$0xff]
    %v2738 = vld [vmem:[#allocation7 + $0x350] sm:$0xff]
    %v2739 = vld [vmem:[#allocation7 + $0x358] sm:$0xff]
    %v2740 = vld [vmem:[#allocation7 + $0x360] sm:$0xff]
    %v2741 = vld [vmem:[#allocation7 + $0x368] sm:$0xff]
    %v2742 = vld [vmem:[#allocation7 + $0x370] sm:$0xff]
    %v2743 = vld [vmem:[#allocation7 + $0x378] sm:$0xff]
    %v2744 = vld [vmem:[#allocation7 + $0x380] sm:$0xff]
    %v2745 = vld [vmem:[#allocation7 + $0x388] sm:$0xff]
    %v2746 = vld [vmem:[#allocation7 + $0x390] sm:$0xff]
    %v2747 = vld [vmem:[#allocation7 + $0x398] sm:$0xff]
    %v2748 = vld [vmem:[#allocation7 + $0x3a0] sm:$0xff]
    %v2749 = vld [vmem:[#allocation7 + $0x3a8] sm:$0xff]
    %v2750 = vld [vmem:[#allocation7 + $0x3b0] sm:$0xff]
    %v2751 = vld [vmem:[#allocation7 + $0x3b8] sm:$0xff]
    %v2752 = vld [vmem:[#allocation7 + $0x3c0] sm:$0xff]
    %v2753 = vld [vmem:[#allocation7 + $0x3c8] sm:$0xff]
    %v2754 = vld [vmem:[#allocation7 + $0x3d0] sm:$0xff]
    %v2755 = vld [vmem:[#allocation7 + $0x3d8] sm:$0xff]
    %v2756 = vld [vmem:[#allocation7 + $0x3e0] sm:$0xff]
    %v2757 = vld [vmem:[#allocation7 + $0x3e8] sm:$0xff]
    %v2758 = vld [vmem:[#allocation7 + $0x3f0] sm:$0xff]
    %v2759 = vld [vmem:[#allocation7 + $0x3f8] sm:$0xff]
    %v2760 = vld [vmem:[%s10] sm:$0xf]
    %v2762 = vlaneseq
    %v2763 = vshrl.u32 %v2762, 7
    %v2764 = vsub.s32 0, %v2763
    %v2765 = vrot.slane %v2760, %v2764
    %v2766 = vlaneseq
    %v2767 = vshrl.u32 %v2766, 7
    %v2768 = vsub.s32 1, %v2767
    %v2769 = vrot.slane %v2760, %v2768
    %v2770 = vlaneseq
    %v2771 = vshrl.u32 %v2770, 7
    %v2772 = vsub.s32 2, %v2771
    %v2773 = vrot.slane %v2760, %v2772
    %v2774 = vlaneseq
    %v2775 = vshrl.u32 %v2774, 7
    %v2776 = vsub.s32 3, %v2775
    %v2777 = vrot.slane %v2760, %v2776
    %v2910 = vunpack.c.l.b16 %v2632
    %v2911 = vunpack.c.h.b16 %v2632
    %v2912 = vunpack.c.l.b16 %v2633
    %v2913 = vunpack.c.h.b16 %v2633
    %v2914 = vunpack.c.l.b16 %v2634
    %v2915 = vunpack.c.h.b16 %v2634
    %v2916 = vunpack.c.l.b16 %v2635
    %v2917 = vunpack.c.h.b16 %v2635
    %v2918 = vunpack.c.l.b16 %v2636
    %v2919 = vunpack.c.h.b16 %v2636
    %v2920 = vunpack.c.l.b16 %v2637
    %v2921 = vunpack.c.h.b16 %v2637
    %v2922 = vunpack.c.l.b16 %v2638
    %v2923 = vunpack.c.h.b16 %v2638
    %v2924 = vunpack.c.l.b16 %v2639
    %v2925 = vunpack.c.h.b16 %v2639
    %v2926 = vunpack.c.l.b16 %v2640
    %v2927 = vunpack.c.h.b16 %v2640
    %v2928 = vunpack.c.l.b16 %v2641
    %v2929 = vunpack.c.h.b16 %v2641
    %v2930 = vunpack.c.l.b16 %v2642
    %v2931 = vunpack.c.h.b16 %v2642
    %v2932 = vunpack.c.l.b16 %v2643
    %v2933 = vunpack.c.h.b16 %v2643
    %v2934 = vunpack.c.l.b16 %v2644
    %v2935 = vunpack.c.h.b16 %v2644
    %v2936 = vunpack.c.l.b16 %v2645
    %v2937 = vunpack.c.h.b16 %v2645
    %v2938 = vunpack.c.l.b16 %v2646
    %v2939 = vunpack.c.h.b16 %v2646
    %v2940 = vunpack.c.l.b16 %v2647
    %v2941 = vunpack.c.h.b16 %v2647
    %v2942 = vunpack.c.l.b16 %v2648
    %v2943 = vunpack.c.h.b16 %v2648
    %v2944 = vunpack.c.l.b16 %v2649
    %v2945 = vunpack.c.h.b16 %v2649
    %v2946 = vunpack.c.l.b16 %v2650
    %v2947 = vunpack.c.h.b16 %v2650
    %v2948 = vunpack.c.l.b16 %v2651
    %v2949 = vunpack.c.h.b16 %v2651
    %v2950 = vunpack.c.l.b16 %v2652
    %v2951 = vunpack.c.h.b16 %v2652
    %v2952 = vunpack.c.l.b16 %v2653
    %v2953 = vunpack.c.h.b16 %v2653
    %v2954 = vunpack.c.l.b16 %v2654
    %v2955 = vunpack.c.h.b16 %v2654
    %v2956 = vunpack.c.l.b16 %v2655
    %v2957 = vunpack.c.h.b16 %v2655
    %v2958 = vunpack.c.l.b16 %v2656
    %v2959 = vunpack.c.h.b16 %v2656
    %v2960 = vunpack.c.l.b16 %v2657
    %v2961 = vunpack.c.h.b16 %v2657
    %v2962 = vunpack.c.l.b16 %v2658
    %v2963 = vunpack.c.h.b16 %v2658
    %v2964 = vunpack.c.l.b16 %v2659
    %v2965 = vunpack.c.h.b16 %v2659
    %v2966 = vunpack.c.l.b16 %v2660
    %v2967 = vunpack.c.h.b16 %v2660
    %v2968 = vunpack.c.l.b16 %v2661
    %v2969 = vunpack.c.h.b16 %v2661
    %v2970 = vunpack.c.l.b16 %v2662
    %v2971 = vunpack.c.h.b16 %v2662
    %v2972 = vunpack.c.l.b16 %v2663
    %v2973 = vunpack.c.h.b16 %v2663
    %v2974 = vunpack.c.l.b16 %v2664
    %v2975 = vunpack.c.h.b16 %v2664
    %v2976 = vunpack.c.l.b16 %v2665
    %v2977 = vunpack.c.h.b16 %v2665
    %v2978 = vunpack.c.l.b16 %v2666
    %v2979 = vunpack.c.h.b16 %v2666
    %v2980 = vunpack.c.l.b16 %v2667
    %v2981 = vunpack.c.h.b16 %v2667
    %v2982 = vunpack.c.l.b16 %v2668
    %v2983 = vunpack.c.h.b16 %v2668
    %v2984 = vunpack.c.l.b16 %v2669
    %v2985 = vunpack.c.h.b16 %v2669
    %v2986 = vunpack.c.l.b16 %v2670
    %v2987 = vunpack.c.h.b16 %v2670
    %v2988 = vunpack.c.l.b16 %v2671
    %v2989 = vunpack.c.h.b16 %v2671
    %v2990 = vunpack.c.l.b16 %v2672
    %v2991 = vunpack.c.h.b16 %v2672
    %v2992 = vunpack.c.l.b16 %v2673
    %v2993 = vunpack.c.h.b16 %v2673
    %v2994 = vunpack.c.l.b16 %v2674
    %v2995 = vunpack.c.h.b16 %v2674
    %v2996 = vunpack.c.l.b16 %v2675
    %v2997 = vunpack.c.h.b16 %v2675
    %v2998 = vunpack.c.l.b16 %v2676
    %v2999 = vunpack.c.h.b16 %v2676
    %v3000 = vunpack.c.l.b16 %v2677
    %v3001 = vunpack.c.h.b16 %v2677
    %v3002 = vunpack.c.l.b16 %v2678
    %v3003 = vunpack.c.h.b16 %v2678
    %v3004 = vunpack.c.l.b16 %v2679
    %v3005 = vunpack.c.h.b16 %v2679
    %v3006 = vunpack.c.l.b16 %v2680
    %v3007 = vunpack.c.h.b16 %v2680
    %v3008 = vunpack.c.l.b16 %v2681
    %v3009 = vunpack.c.h.b16 %v2681
    %v3010 = vunpack.c.l.b16 %v2682
    %v3011 = vunpack.c.h.b16 %v2682
    %v3012 = vunpack.c.l.b16 %v2683
    %v3013 = vunpack.c.h.b16 %v2683
    %v3014 = vunpack.c.l.b16 %v2684
    %v3015 = vunpack.c.h.b16 %v2684
    %v3016 = vunpack.c.l.b16 %v2685
    %v3017 = vunpack.c.h.b16 %v2685
    %v3018 = vunpack.c.l.b16 %v2686
    %v3019 = vunpack.c.h.b16 %v2686
    %v3020 = vunpack.c.l.b16 %v2687
    %v3021 = vunpack.c.h.b16 %v2687
    %v3022 = vunpack.c.l.b16 %v2688
    %v3023 = vunpack.c.h.b16 %v2688
    %v3024 = vunpack.c.l.b16 %v2689
    %v3025 = vunpack.c.h.b16 %v2689
    %v3026 = vunpack.c.l.b16 %v2690
    %v3027 = vunpack.c.h.b16 %v2690
    %v3028 = vunpack.c.l.b16 %v2691
    %v3029 = vunpack.c.h.b16 %v2691
    %v3030 = vunpack.c.l.b16 %v2692
    %v3031 = vunpack.c.h.b16 %v2692
    %v3032 = vunpack.c.l.b16 %v2693
    %v3033 = vunpack.c.h.b16 %v2693
    %v3034 = vunpack.c.l.b16 %v2694
    %v3035 = vunpack.c.h.b16 %v2694
    %v3036 = vunpack.c.l.b16 %v2695
    %v3037 = vunpack.c.h.b16 %v2695
    %v3038 = vunpack.c.l.b16 %v2696
    %v3039 = vunpack.c.h.b16 %v2696
    %v3040 = vunpack.c.l.b16 %v2697
    %v3041 = vunpack.c.h.b16 %v2697
    %v3042 = vunpack.c.l.b16 %v2698
    %v3043 = vunpack.c.h.b16 %v2698
    %v3044 = vunpack.c.l.b16 %v2699
    %v3045 = vunpack.c.h.b16 %v2699
    %v3046 = vunpack.c.l.b16 %v2700
    %v3047 = vunpack.c.h.b16 %v2700
    %v3048 = vunpack.c.l.b16 %v2701
    %v3049 = vunpack.c.h.b16 %v2701
    %v3050 = vunpack.c.l.b16 %v2702
    %v3051 = vunpack.c.h.b16 %v2702
    %v3052 = vunpack.c.l.b16 %v2703
    %v3053 = vunpack.c.h.b16 %v2703
    %v3054 = vunpack.c.l.b16 %v2704
    %v3055 = vunpack.c.h.b16 %v2704
    %v3056 = vunpack.c.l.b16 %v2705
    %v3057 = vunpack.c.h.b16 %v2705
    %v3058 = vunpack.c.l.b16 %v2706
    %v3059 = vunpack.c.h.b16 %v2706
    %v3060 = vunpack.c.l.b16 %v2707
    %v3061 = vunpack.c.h.b16 %v2707
    %v3062 = vunpack.c.l.b16 %v2708
    %v3063 = vunpack.c.h.b16 %v2708
    %v3064 = vunpack.c.l.b16 %v2709
    %v3065 = vunpack.c.h.b16 %v2709
    %v3066 = vunpack.c.l.b16 %v2710
    %v3067 = vunpack.c.h.b16 %v2710
    %v3068 = vunpack.c.l.b16 %v2711
    %v3069 = vunpack.c.h.b16 %v2711
    %v3070 = vunpack.c.l.b16 %v2712
    %v3071 = vunpack.c.h.b16 %v2712
    %v3072 = vunpack.c.l.b16 %v2713
    %v3073 = vunpack.c.h.b16 %v2713
    %v3074 = vunpack.c.l.b16 %v2714
    %v3075 = vunpack.c.h.b16 %v2714
    %v3076 = vunpack.c.l.b16 %v2715
    %v3077 = vunpack.c.h.b16 %v2715
    %v3078 = vunpack.c.l.b16 %v2716
    %v3079 = vunpack.c.h.b16 %v2716
    %v3080 = vunpack.c.l.b16 %v2717
    %v3081 = vunpack.c.h.b16 %v2717
    %v3082 = vunpack.c.l.b16 %v2718
    %v3083 = vunpack.c.h.b16 %v2718
    %v3084 = vunpack.c.l.b16 %v2719
    %v3085 = vunpack.c.h.b16 %v2719
    %v3086 = vunpack.c.l.b16 %v2720
    %v3087 = vunpack.c.h.b16 %v2720
    %v3088 = vunpack.c.l.b16 %v2721
    %v3089 = vunpack.c.h.b16 %v2721
    %v3090 = vunpack.c.l.b16 %v2722
    %v3091 = vunpack.c.h.b16 %v2722
    %v3092 = vunpack.c.l.b16 %v2723
    %v3093 = vunpack.c.h.b16 %v2723
    %v3094 = vunpack.c.l.b16 %v2724
    %v3095 = vunpack.c.h.b16 %v2724
    %v3096 = vunpack.c.l.b16 %v2725
    %v3097 = vunpack.c.h.b16 %v2725
    %v3098 = vunpack.c.l.b16 %v2726
    %v3099 = vunpack.c.h.b16 %v2726
    %v3100 = vunpack.c.l.b16 %v2727
    %v3101 = vunpack.c.h.b16 %v2727
    %v3102 = vunpack.c.l.b16 %v2728
    %v3103 = vunpack.c.h.b16 %v2728
    %v3104 = vunpack.c.l.b16 %v2729
    %v3105 = vunpack.c.h.b16 %v2729
    %v3106 = vunpack.c.l.b16 %v2730
    %v3107 = vunpack.c.h.b16 %v2730
    %v3108 = vunpack.c.l.b16 %v2731
    %v3109 = vunpack.c.h.b16 %v2731
    %v3110 = vunpack.c.l.b16 %v2732
    %v3111 = vunpack.c.h.b16 %v2732
    %v3112 = vunpack.c.l.b16 %v2733
    %v3113 = vunpack.c.h.b16 %v2733
    %v3114 = vunpack.c.l.b16 %v2734
    %v3115 = vunpack.c.h.b16 %v2734
    %v3116 = vunpack.c.l.b16 %v2735
    %v3117 = vunpack.c.h.b16 %v2735
    %v3118 = vunpack.c.l.b16 %v2736
    %v3119 = vunpack.c.h.b16 %v2736
    %v3120 = vunpack.c.l.b16 %v2737
    %v3121 = vunpack.c.h.b16 %v2737
    %v3122 = vunpack.c.l.b16 %v2738
    %v3123 = vunpack.c.h.b16 %v2738
    %v3124 = vunpack.c.l.b16 %v2739
    %v3125 = vunpack.c.h.b16 %v2739
    %v3126 = vunpack.c.l.b16 %v2740
    %v3127 = vunpack.c.h.b16 %v2740
    %v3128 = vunpack.c.l.b16 %v2741
    %v3129 = vunpack.c.h.b16 %v2741
    %v3130 = vunpack.c.l.b16 %v2742
    %v3131 = vunpack.c.h.b16 %v2742
    %v3132 = vunpack.c.l.b16 %v2743
    %v3133 = vunpack.c.h.b16 %v2743
    %v3134 = vunpack.c.l.b16 %v2744
    %v3135 = vunpack.c.h.b16 %v2744
    %v3136 = vunpack.c.l.b16 %v2745
    %v3137 = vunpack.c.h.b16 %v2745
    %v3138 = vunpack.c.l.b16 %v2746
    %v3139 = vunpack.c.h.b16 %v2746
    %v3140 = vunpack.c.l.b16 %v2747
    %v3141 = vunpack.c.h.b16 %v2747
    %v3142 = vunpack.c.l.b16 %v2748
    %v3143 = vunpack.c.h.b16 %v2748
    %v3144 = vunpack.c.l.b16 %v2749
    %v3145 = vunpack.c.h.b16 %v2749
    %v3146 = vunpack.c.l.b16 %v2750
    %v3147 = vunpack.c.h.b16 %v2750
    %v3148 = vunpack.c.l.b16 %v2751
    %v3149 = vunpack.c.h.b16 %v2751
    %v3150 = vunpack.c.l.b16 %v2752
    %v3151 = vunpack.c.h.b16 %v2752
    %v3152 = vunpack.c.l.b16 %v2753
    %v3153 = vunpack.c.h.b16 %v2753
    %v3154 = vunpack.c.l.b16 %v2754
    %v3155 = vunpack.c.h.b16 %v2754
    %v3156 = vunpack.c.l.b16 %v2755
    %v3157 = vunpack.c.h.b16 %v2755
    %v3158 = vunpack.c.l.b16 %v2756
    %v3159 = vunpack.c.h.b16 %v2756
    %v3160 = vunpack.c.l.b16 %v2757
    %v3161 = vunpack.c.h.b16 %v2757
    %v3162 = vunpack.c.l.b16 %v2758
    %v3163 = vunpack.c.h.b16 %v2758
    %v3164 = vunpack.c.l.b16 %v2759
    %v3165 = vunpack.c.h.b16 %v2759
    %v3166 = vpack.c.b16 %v2914, %v2910
    %v3167 = vpack.c.b16 %v2915, %v2911
    %v3168 = vpack.c.b16 %v2916, %v2912
    %v3169 = vpack.c.b16 %v2917, %v2913
    %v3170 = vpack.c.b16 %v2922, %v2918
    %v3171 = vpack.c.b16 %v2923, %v2919
    %v3172 = vpack.c.b16 %v2924, %v2920
    %v3173 = vpack.c.b16 %v2925, %v2921
    %v3174 = vpack.c.b16 %v2930, %v2926
    %v3175 = vpack.c.b16 %v2931, %v2927
    %v3176 = vpack.c.b16 %v2932, %v2928
    %v3177 = vpack.c.b16 %v2933, %v2929
    %v3178 = vpack.c.b16 %v2938, %v2934
    %v3179 = vpack.c.b16 %v2939, %v2935
    %v3180 = vpack.c.b16 %v2940, %v2936
    %v3181 = vpack.c.b16 %v2941, %v2937
    %v3182 = vpack.c.b16 %v2946, %v2942
    %v3183 = vpack.c.b16 %v2947, %v2943
    %v3184 = vpack.c.b16 %v2948, %v2944
    %v3185 = vpack.c.b16 %v2949, %v2945
    %v3186 = vpack.c.b16 %v2954, %v2950
    %v3187 = vpack.c.b16 %v2955, %v2951
    %v3188 = vpack.c.b16 %v2956, %v2952
    %v3189 = vpack.c.b16 %v2957, %v2953
    %v3190 = vpack.c.b16 %v2962, %v2958
    %v3191 = vpack.c.b16 %v2963, %v2959
    %v3192 = vpack.c.b16 %v2964, %v2960
    %v3193 = vpack.c.b16 %v2965, %v2961
    %v3194 = vpack.c.b16 %v2970, %v2966
    %v3195 = vpack.c.b16 %v2971, %v2967
    %v3196 = vpack.c.b16 %v2972, %v2968
    %v3197 = vpack.c.b16 %v2973, %v2969
    %v3198 = vpack.c.b16 %v2978, %v2974
    %v3199 = vpack.c.b16 %v2979, %v2975
    %v3200 = vpack.c.b16 %v2980, %v2976
    %v3201 = vpack.c.b16 %v2981, %v2977
    %v3202 = vpack.c.b16 %v2986, %v2982
    %v3203 = vpack.c.b16 %v2987, %v2983
    %v3204 = vpack.c.b16 %v2988, %v2984
    %v3205 = vpack.c.b16 %v2989, %v2985
    %v3206 = vpack.c.b16 %v2994, %v2990
    %v3207 = vpack.c.b16 %v2995, %v2991
    %v3208 = vpack.c.b16 %v2996, %v2992
    %v3209 = vpack.c.b16 %v2997, %v2993
    %v3210 = vpack.c.b16 %v3002, %v2998
    %v3211 = vpack.c.b16 %v3003, %v2999
    %v3212 = vpack.c.b16 %v3004, %v3000
    %v3213 = vpack.c.b16 %v3005, %v3001
    %v3214 = vpack.c.b16 %v3010, %v3006
    %v3215 = vpack.c.b16 %v3011, %v3007
    %v3216 = vpack.c.b16 %v3012, %v3008
    %v3217 = vpack.c.b16 %v3013, %v3009
    %v3218 = vpack.c.b16 %v3018, %v3014
    %v3219 = vpack.c.b16 %v3019, %v3015
    %v3220 = vpack.c.b16 %v3020, %v3016
    %v3221 = vpack.c.b16 %v3021, %v3017
    %v3222 = vpack.c.b16 %v3026, %v3022
    %v3223 = vpack.c.b16 %v3027, %v3023
    %v3224 = vpack.c.b16 %v3028, %v3024
    %v3225 = vpack.c.b16 %v3029, %v3025
    %v3226 = vpack.c.b16 %v3034, %v3030
    %v3227 = vpack.c.b16 %v3035, %v3031
    %v3228 = vpack.c.b16 %v3036, %v3032
    %v3229 = vpack.c.b16 %v3037, %v3033
    %v3230 = vpack.c.b16 %v3042, %v3038
    %v3231 = vpack.c.b16 %v3043, %v3039
    %v3232 = vpack.c.b16 %v3044, %v3040
    %v3233 = vpack.c.b16 %v3045, %v3041
    %v3234 = vpack.c.b16 %v3050, %v3046
    %v3235 = vpack.c.b16 %v3051, %v3047
    %v3236 = vpack.c.b16 %v3052, %v3048
    %v3237 = vpack.c.b16 %v3053, %v3049
    %v3238 = vpack.c.b16 %v3058, %v3054
    %v3239 = vpack.c.b16 %v3059, %v3055
    %v3240 = vpack.c.b16 %v3060, %v3056
    %v3241 = vpack.c.b16 %v3061, %v3057
    %v3242 = vpack.c.b16 %v3066, %v3062
    %v3243 = vpack.c.b16 %v3067, %v3063
    %v3244 = vpack.c.b16 %v3068, %v3064
    %v3245 = vpack.c.b16 %v3069, %v3065
    %v3246 = vpack.c.b16 %v3074, %v3070
    %v3247 = vpack.c.b16 %v3075, %v3071
    %v3248 = vpack.c.b16 %v3076, %v3072
    %v3249 = vpack.c.b16 %v3077, %v3073
    %v3250 = vpack.c.b16 %v3082, %v3078
    %v3251 = vpack.c.b16 %v3083, %v3079
    %v3252 = vpack.c.b16 %v3084, %v3080
    %v3253 = vpack.c.b16 %v3085, %v3081
    %v3254 = vpack.c.b16 %v3090, %v3086
    %v3255 = vpack.c.b16 %v3091, %v3087
    %v3256 = vpack.c.b16 %v3092, %v3088
    %v3257 = vpack.c.b16 %v3093, %v3089
    %v3258 = vpack.c.b16 %v3098, %v3094
    %v3259 = vpack.c.b16 %v3099, %v3095
    %v3260 = vpack.c.b16 %v3100, %v3096
    %v3261 = vpack.c.b16 %v3101, %v3097
    %v3262 = vpack.c.b16 %v3106, %v3102
    %v3263 = vpack.c.b16 %v3107, %v3103
    %v3264 = vpack.c.b16 %v3108, %v3104
    %v3265 = vpack.c.b16 %v3109, %v3105
    %v3266 = vpack.c.b16 %v3114, %v3110
    %v3267 = vpack.c.b16 %v3115, %v3111
    %v3268 = vpack.c.b16 %v3116, %v3112
    %v3269 = vpack.c.b16 %v3117, %v3113
    %v3270 = vpack.c.b16 %v3122, %v3118
    %v3271 = vpack.c.b16 %v3123, %v3119
    %v3272 = vpack.c.b16 %v3124, %v3120
    %v3273 = vpack.c.b16 %v3125, %v3121
    %v3274 = vpack.c.b16 %v3130, %v3126
    %v3275 = vpack.c.b16 %v3131, %v3127
    %v3276 = vpack.c.b16 %v3132, %v3128
    %v3277 = vpack.c.b16 %v3133, %v3129
    %v3278 = vpack.c.b16 %v3138, %v3134
    %v3279 = vpack.c.b16 %v3139, %v3135
    %v3280 = vpack.c.b16 %v3140, %v3136
    %v3281 = vpack.c.b16 %v3141, %v3137
    %v3282 = vpack.c.b16 %v3146, %v3142
    %v3283 = vpack.c.b16 %v3147, %v3143
    %v3284 = vpack.c.b16 %v3148, %v3144
    %v3285 = vpack.c.b16 %v3149, %v3145
    %v3286 = vpack.c.b16 %v3154, %v3150
    %v3287 = vpack.c.b16 %v3155, %v3151
    %v3288 = vpack.c.b16 %v3156, %v3152
    %v3289 = vpack.c.b16 %v3157, %v3153
    %v3290 = vpack.c.b16 %v3162, %v3158
    %v3291 = vpack.c.b16 %v3163, %v3159
    %v3292 = vpack.c.b16 %v3164, %v3160
    %v3293 = vpack.c.b16 %v3165, %v3161
    %3422 = vmatprep.subr.bf16.mxu0 %v3195
    %3423 = vmatpush1.bf16.msra.mxu0 %v3194
    %3424 = vmatprep.subr.bf16.mxu0 %v3191
    %3425 = vmatpush1.bf16.msra.mxu0 %v3190
    %3426 = vmatprep.subr.bf16.mxu0 %v3187
    %3427 = vmatpush1.bf16.msra.mxu0 %v3186
    %3428 = vmatprep.subr.bf16.mxu0 %v3183
    %3429 = vmatpush1.bf16.msra.mxu0 %v3182
    %3430 = vmatprep.subr.bf16.mxu0 %v3179
    %3431 = vmatpush1.bf16.msra.mxu0 %v3178
    %3432 = vmatprep.subr.bf16.mxu0 %v3175
    %3433 = vmatpush1.bf16.msra.mxu0 %v3174
    %3434 = vmatprep.subr.bf16.mxu0 %v3171
    %3435 = vmatpush1.bf16.msra.mxu0 %v3170
    %3436 = vmatprep.subr.bf16.mxu0 %v3167
    %3437 = vmatpush1.bf16.msra.mxu0 %v3166
    %3438 = vmatprep.subr.bf16.mxu0 %v3227
    %3439 = vmatpush2.bf16.msra.mxu0 %v3226
    %3440 = vmatprep.subr.bf16.mxu0 %v3223
    %3441 = vmatpush2.bf16.msra.mxu0 %v3222
    %3442 = vmatprep.subr.bf16.mxu0 %v3219
    %3443 = vmatpush2.bf16.msra.mxu0 %v3218
    %3444 = vmatprep.subr.bf16.mxu0 %v3215
    %3445 = vmatpush2.bf16.msra.mxu0 %v3214
    %3446 = vmatprep.subr.bf16.mxu0 %v3211
    %3447 = vmatpush2.bf16.msra.mxu0 %v3210
    %3448 = vmatprep.subr.bf16.mxu0 %v3207
    %3449 = vmatpush2.bf16.msra.mxu0 %v3206
    %3450 = vmatprep.subr.bf16.mxu0 %v3203
    %3451 = vmatpush2.bf16.msra.mxu0 %v3202
    %3452 = vmatprep.subr.bf16.mxu0 %v3199
    %3453 = vmatpush2.bf16.msra.mxu0 %v3198
    %3454 = vmatprep.mubr.bf16.mxu0 %v2629
    %3455 = vmatmul.mubr.bf16.gmra.mxu0 %v2628
    %v3456 = vpop.f32.mrf.mxu0
    %v3457 = vadd.f32 %v2765, %v3456
    %v3458 = vpop.f32.mrf.mxu0
    %v3459 = vadd.f32 %v2769, %v3458
    %v3460 = vpop.f32.mrf.mxu0
    %v3461 = vpop.f32.mrf.mxu0
    %3462 = vdwg.mxu0
    %3463 = vmatprep.subr.bf16.mxu0 %v3259
    %3464 = vmatpush1.bf16.msra.mxu0 %v3258
    %3465 = vmatprep.subr.bf16.mxu0 %v3255
    %3466 = vmatpush1.bf16.msra.mxu0 %v3254
    %3467 = vmatprep.subr.bf16.mxu0 %v3251
    %3468 = vmatpush1.bf16.msra.mxu0 %v3250
    %3469 = vmatprep.subr.bf16.mxu0 %v3247
    %3470 = vmatpush1.bf16.msra.mxu0 %v3246
    %3471 = vmatprep.subr.bf16.mxu0 %v3243
    %3472 = vmatpush1.bf16.msra.mxu0 %v3242
    %3473 = vmatprep.subr.bf16.mxu0 %v3239
    %3474 = vmatpush1.bf16.msra.mxu0 %v3238
    %3475 = vmatprep.subr.bf16.mxu0 %v3235
    %3476 = vmatpush1.bf16.msra.mxu0 %v3234
    %3477 = vmatprep.subr.bf16.mxu0 %v3231
    %3478 = vmatpush1.bf16.msra.mxu0 %v3230
    %3479 = vmatprep.subr.bf16.mxu0 %v3291
    %3480 = vmatpush2.bf16.msra.mxu0 %v3290
    %3481 = vmatprep.subr.bf16.mxu0 %v3287
    %3482 = vmatpush2.bf16.msra.mxu0 %v3286
    %3483 = vmatprep.subr.bf16.mxu0 %v3283
    %3484 = vmatpush2.bf16.msra.mxu0 %v3282
    %3485 = vmatprep.subr.bf16.mxu0 %v3279
    %3486 = vmatpush2.bf16.msra.mxu0 %v3278
    %3487 = vmatprep.subr.bf16.mxu0 %v3275
    %3488 = vmatpush2.bf16.msra.mxu0 %v3274
    %3489 = vmatprep.subr.bf16.mxu0 %v3271
    %3490 = vmatpush2.bf16.msra.mxu0 %v3270
    %3491 = vmatprep.subr.bf16.mxu0 %v3267
    %3492 = vmatpush2.bf16.msra.mxu0 %v3266
    %3493 = vmatprep.subr.bf16.mxu0 %v3263
    %3494 = vmatpush2.bf16.msra.mxu0 %v3262
    %3495 = vmatprep.mubr.bf16.mxu0 %v2631
    %3496 = vmatmul.mubr.bf16.gmra.mxu0 %v2630
    %v3497 = vpop.f32.mrf.mxu0
    %v3498 = vadd.f32 %v3457, %v3497
    %v3499 = vpop.f32.mrf.mxu0
    %v3500 = vadd.f32 %v3459, %v3499
    %v3501 = vpop.f32.mrf.mxu0
    %v3502 = vpop.f32.mrf.mxu0
    %3503 = vdwg.mxu0
    %3504 = vmatprep.subr.bf16.mxu0 %v3197
    %3505 = vmatpush1.bf16.msra.mxu0 %v3196
    %3506 = vmatprep.subr.bf16.mxu0 %v3193
    %3507 = vmatpush1.bf16.msra.mxu0 %v3192
    %3508 = vmatprep.subr.bf16.mxu0 %v3189
    %3509 = vmatpush1.bf16.msra.mxu0 %v3188
    %3510 = vmatprep.subr.bf16.mxu0 %v3185
    %3511 = vmatpush1.bf16.msra.mxu0 %v3184
    %3512 = vmatprep.subr.bf16.mxu0 %v3181
    %3513 = vmatpush1.bf16.msra.mxu0 %v3180
    %3514 = vmatprep.subr.bf16.mxu0 %v3177
    %3515 = vmatpush1.bf16.msra.mxu0 %v3176
    %3516 = vmatprep.subr.bf16.mxu0 %v3173
    %3517 = vmatpush1.bf16.msra.mxu0 %v3172
    %3518 = vmatprep.subr.bf16.mxu0 %v3169
    %3519 = vmatpush1.bf16.msra.mxu0 %v3168
    %3520 = vmatprep.subr.bf16.mxu0 %v3229
    %3521 = vmatpush2.bf16.msra.mxu0 %v3228
    %3522 = vmatprep.subr.bf16.mxu0 %v3225
    %3523 = vmatpush2.bf16.msra.mxu0 %v3224
    %3524 = vmatprep.subr.bf16.mxu0 %v3221
    %3525 = vmatpush2.bf16.msra.mxu0 %v3220
    %3526 = vmatprep.subr.bf16.mxu0 %v3217
    %3527 = vmatpush2.bf16.msra.mxu0 %v3216
    %3528 = vmatprep.subr.bf16.mxu0 %v3213
    %3529 = vmatpush2.bf16.msra.mxu0 %v3212
    %3530 = vmatprep.subr.bf16.mxu0 %v3209
    %3531 = vmatpush2.bf16.msra.mxu0 %v3208
    %3532 = vmatprep.subr.bf16.mxu0 %v3205
    %3533 = vmatpush2.bf16.msra.mxu0 %v3204
    %3534 = vmatprep.subr.bf16.mxu0 %v3201
    %3535 = vmatpush2.bf16.msra.mxu0 %v3200
    %3536 = vmatprep.mubr.bf16.mxu0 %v2629
    %3537 = vmatmul.mubr.bf16.gmra.mxu0 %v2628
    %v3538 = vpop.f32.mrf.mxu0
    %v3539 = vadd.f32 %v2773, %v3538
    %v3540 = vpop.f32.mrf.mxu0
    %v3541 = vadd.f32 %v2777, %v3540
    %v3542 = vpop.f32.mrf.mxu0
    %v3543 = vpop.f32.mrf.mxu0
    %3544 = vdwg.mxu0
    %3545 = vmatprep.subr.bf16.mxu0 %v3261
    %3546 = vmatpush1.bf16.msra.mxu0 %v3260
    %3547 = vmatprep.subr.bf16.mxu0 %v3257
    %3548 = vmatpush1.bf16.msra.mxu0 %v3256
    %3549 = vmatprep.subr.bf16.mxu0 %v3253
    %3550 = vmatpush1.bf16.msra.mxu0 %v3252
    %3551 = vmatprep.subr.bf16.mxu0 %v3249
    %3552 = vmatpush1.bf16.msra.mxu0 %v3248
    %3553 = vmatprep.subr.bf16.mxu0 %v3245
    %3554 = vmatpush1.bf16.msra.mxu0 %v3244
    %3555 = vmatprep.subr.bf16.mxu0 %v3241
    %3556 = vmatpush1.bf16.msra.mxu0 %v3240
    %3557 = vmatprep.subr.bf16.mxu0 %v3237
    %3558 = vmatpush1.bf16.msra.mxu0 %v3236
    %3559 = vmatprep.subr.bf16.mxu0 %v3233
    %3560 = vmatpush1.bf16.msra.mxu0 %v3232
    %3561 = vmatprep.subr.bf16.mxu0 %v3293
    %3562 = vmatpush2.bf16.msra.mxu0 %v3292
    %3563 = vmatprep.subr.bf16.mxu0 %v3289
    %3564 = vmatpush2.bf16.msra.mxu0 %v3288
    %3565 = vmatprep.subr.bf16.mxu0 %v3285
    %3566 = vmatpush2.bf16.msra.mxu0 %v3284
    %3567 = vmatprep.subr.bf16.mxu0 %v3281
    %3568 = vmatpush2.bf16.msra.mxu0 %v3280
    %3569 = vmatprep.subr.bf16.mxu0 %v3277
    %3570 = vmatpush2.bf16.msra.mxu0 %v3276
    %3571 = vmatprep.subr.bf16.mxu0 %v3273
    %3572 = vmatpush2.bf16.msra.mxu0 %v3272
    %3573 = vmatprep.subr.bf16.mxu0 %v3269
    %3574 = vmatpush2.bf16.msra.mxu0 %v3268
    %3575 = vmatprep.subr.bf16.mxu0 %v3265
    %3576 = vmatpush2.bf16.msra.mxu0 %v3264
    %3577 = vmatprep.mubr.bf16.mxu0 %v2631
    %3578 = vmatmul.mubr.bf16.gmra.mxu0 %v2630
    %v3579 = vpop.f32.mrf.mxu0
    %v3580 = vadd.f32 %v3539, %v3579
    %v3581 = vpop.f32.mrf.mxu0
    %v3582 = vadd.f32 %v3541, %v3581
    %v3583 = vpop.f32.mrf.mxu0
    %v3584 = vpop.f32.mrf.mxu0
    %3585 = vdwg.mxu0
    %v3586 = vmul.f32 %v3498, 0.5
    %v3587 = vmul.f32 %v3500, 0.5
    %v3588 = vmul.f32 %v3580, 0.5
    %v3589 = vmul.f32 %v3582, 0.5
    %v3590 = vmul.f32 %v3498, 0.70710677
    %v3591 = vmul.f32 %v3500, 0.70710677
    %v3592 = vmul.f32 %v3580, 0.70710677
    %v3593 = vmul.f32 %v3582, 0.70710677
    %vm3594 = vcmp.lt.f32.partialorder %v3590, 0.0
    %vm3595 = vcmp.lt.f32.partialorder %v3591, 0.0
    %vm3596 = vcmp.lt.f32.partialorder %v3592, 0.0
    %vm3597 = vcmp.lt.f32.partialorder %v3593, 0.0
    %v3598 = vsel %vm3594, -1.0, 1.0
    %v3599 = vsel %vm3595, -1.0, 1.0
    %v3600 = vsel %vm3596, -1.0, 1.0
    %v3601 = vsel %vm3597, -1.0, 1.0
    %v3602 = vand.u32 2147483647, %v3590
    %v3603 = vand.u32 2147483647, %v3591
    %v3604 = vand.u32 2147483647, %v3592
    %v3605 = vand.u32 2147483647, %v3593
    %v3606 = vmul.f32 %v3602, 0.3275911
    %v3607 = vmul.f32 %v3603, 0.3275911
    %v3608 = vmul.f32 %v3604, 0.3275911
    %v3609 = vmul.f32 %v3605, 0.3275911
    %v3610 = vadd.f32 %v3606, 1.0
    %v3611 = vadd.f32 %v3607, 1.0
    %v3612 = vadd.f32 %v3608, 1.0
    %v3613 = vadd.f32 %v3609, 1.0
    %v3614 = vrcp.pop %v3610
    %v3615 = vmul.f32 1.0, %v3614
    %v3616 = vrcp.pop %v3611
    %v3617 = vmul.f32 1.0, %v3616
    %v3618 = vrcp.pop %v3612
    %v3619 = vmul.f32 1.0, %v3618
    %v3620 = vrcp.pop %v3613
    %v3621 = vmul.f32 1.0, %v3620
    %v3622 = vmul.f32 %v3615, 1.0614054
    %v3623 = vmul.f32 %v3617, 1.0614054
    %v3624 = vmul.f32 %v3619, 1.0614054
    %v3625 = vmul.f32 %v3621, 1.0614054
    %v3626 = vadd.f32 %v3622, -1.4531521
    %v3627 = vadd.f32 %v3623, -1.4531521
    %v3628 = vadd.f32 %v3624, -1.4531521
    %v3629 = vadd.f32 %v3625, -1.4531521
    %v3630 = vmul.f32 %v3626, %v3615
    %v3631 = vmul.f32 %v3627, %v3617
    %v3632 = vmul.f32 %v3628, %v3619
    %v3633 = vmul.f32 %v3629, %v3621
    %v3634 = vadd.f32 %v3630, 1.4214138
    %v3635 = vadd.f32 %v3631, 1.4214138
    %v3636 = vadd.f32 %v3632, 1.4214138
    %v3637 = vadd.f32 %v3633, 1.4214138
    %v3638 = vmul.f32 %v3634, %v3615
    %v3639 = vmul.f32 %v3635, %v3617
    %v3640 = vmul.f32 %v3636, %v3619
    %v3641 = vmul.f32 %v3637, %v3621
    %v3642 = vadd.f32 %v3638, -0.28449672
    %v3643 = vadd.f32 %v3639, -0.28449672
    %v3644 = vadd.f32 %v3640, -0.28449672
    %v3645 = vadd.f32 %v3641, -0.28449672
    %v3646 = vmul.f32 %v3642, %v3615
    %v3647 = vmul.f32 %v3643, %v3617
    %v3648 = vmul.f32 %v3644, %v3619
    %v3649 = vmul.f32 %v3645, %v3621
    %v3650 = vadd.f32 %v3646, 0.2548296
    %v3651 = vadd.f32 %v3647, 0.2548296
    %v3652 = vadd.f32 %v3648, 0.2548296
    %v3653 = vadd.f32 %v3649, 0.2548296
    %v3654 = vmul.f32 %v3650, %v3615
    %v3655 = vmul.f32 %v3651, %v3617
    %v3656 = vmul.f32 %v3652, %v3619
    %v3657 = vmul.f32 %v3653, %v3621
    %v3658 = vsub.f32 0.0, %v3602
    %v3659 = vsub.f32 0.0, %v3603
    %v3660 = vsub.f32 0.0, %v3604
    %v3661 = vsub.f32 0.0, %v3605
    %v3662 = vmul.f32 %v3658, %v3602
    %v3663 = vmul.f32 %v3659, %v3603
    %v3664 = vmul.f32 %v3660, %v3604
    %v3665 = vmul.f32 %v3661, %v3605
    %v3666 = vmul.f32 %v3662, 1.442695
    %v3667 = vpow.pop %v3666
    %v3668 = vmul.f32 %v3663, 1.442695
    %v3669 = vpow.pop %v3668
    %v3670 = vmul.f32 %v3664, 1.442695
    %v3671 = vpow.pop %v3670
    %v3672 = vmul.f32 %v3665, 1.442695
    %v3673 = vpow.pop %v3672
    %v3674 = vmul.f32 %v3654, %v3667
    %v3675 = vmul.f32 %v3655, %v3669
    %v3676 = vmul.f32 %v3656, %v3671
    %v3677 = vmul.f32 %v3657, %v3673
    %v3678 = vsub.f32 1.0, %v3674
    %v3679 = vsub.f32 1.0, %v3675
    %v3680 = vsub.f32 1.0, %v3676
    %v3681 = vsub.f32 1.0, %v3677
    %v3682 = vmul.f32 %v3598, %v3678
    %v3683 = vmul.f32 %v3599, %v3679
    %v3684 = vmul.f32 %v3600, %v3680
    %v3685 = vmul.f32 %v3601, %v3681
    %v3686 = vadd.f32 %v3682, 1.0
    %v3687 = vadd.f32 %v3683, 1.0
    %v3688 = vadd.f32 %v3684, 1.0
    %v3689 = vadd.f32 %v3685, 1.0
    %v3690 = vmul.f32 %v3586, %v3686
    %v3691 = vmul.f32 %v3587, %v3687
    %v3692 = vmul.f32 %v3588, %v3688
    %v3693 = vmul.f32 %v3589, %v3689
    %v3694 = vpack.c.bf16 %v3690, %v3690
    %v3695 = vpack.c.bf16 %v3691, %v3691
    %v3696 = vpack.c.bf16 %v3692, %v3692
    %v3697 = vpack.c.bf16 %v3693, %v3693
    %v3698 = vld [vmem:[#allocation9] sm:$0xf]
    %v3699 = vld [vmem:[#allocation9 + $0x4] sm:$0xf]
    %v3700 = vld [vmem:[#allocation9 + $0x8] sm:$0xf]
    %v3701 = vld [vmem:[#allocation9 + $0xc] sm:$0xf]
    %v3702 = vld [vmem:[#allocation9 + $0x10] sm:$0xf]
    %v3703 = vld [vmem:[#allocation9 + $0x14] sm:$0xf]
    %v3704 = vld [vmem:[#allocation9 + $0x18] sm:$0xf]
    %v3705 = vld [vmem:[#allocation9 + $0x1c] sm:$0xf]
    %v3706 = vld [vmem:[#allocation9 + $0x20] sm:$0xf]
    %v3707 = vld [vmem:[#allocation9 + $0x24] sm:$0xf]
    %v3708 = vld [vmem:[#allocation9 + $0x28] sm:$0xf]
    %v3709 = vld [vmem:[#allocation9 + $0x2c] sm:$0xf]
    %v3710 = vld [vmem:[#allocation9 + $0x30] sm:$0xf]
    %v3711 = vld [vmem:[#allocation9 + $0x34] sm:$0xf]
    %v3712 = vld [vmem:[#allocation9 + $0x38] sm:$0xf]
    %v3713 = vld [vmem:[#allocation9 + $0x3c] sm:$0xf]
    %v3714 = vld [vmem:[#allocation9 + $0x40] sm:$0xf]
    %v3715 = vld [vmem:[#allocation9 + $0x44] sm:$0xf]
    %v3716 = vld [vmem:[#allocation9 + $0x48] sm:$0xf]
    %v3717 = vld [vmem:[#allocation9 + $0x4c] sm:$0xf]
    %v3718 = vld [vmem:[#allocation9 + $0x50] sm:$0xf]
    %v3719 = vld [vmem:[#allocation9 + $0x54] sm:$0xf]
    %v3720 = vld [vmem:[#allocation9 + $0x58] sm:$0xf]
    %v3721 = vld [vmem:[#allocation9 + $0x5c] sm:$0xf]
    %v3722 = vld [vmem:[#allocation9 + $0x60] sm:$0xf]
    %v3723 = vld [vmem:[#allocation9 + $0x64] sm:$0xf]
    %v3724 = vld [vmem:[#allocation9 + $0x68] sm:$0xf]
    %v3725 = vld [vmem:[#allocation9 + $0x6c] sm:$0xf]
    %v3726 = vld [vmem:[#allocation9 + $0x70] sm:$0xf]
    %v3727 = vld [vmem:[#allocation9 + $0x74] sm:$0xf]
    %v3728 = vld [vmem:[#allocation9 + $0x78] sm:$0xf]
    %v3729 = vld [vmem:[#allocation9 + $0x7c] sm:$0xf]
    %v3730 = vld [vmem:[#allocation9 + $0x80] sm:$0xf]
    %v3731 = vld [vmem:[#allocation9 + $0x84] sm:$0xf]
    %v3732 = vld [vmem:[#allocation9 + $0x88] sm:$0xf]
    %v3733 = vld [vmem:[#allocation9 + $0x8c] sm:$0xf]
    %v3734 = vld [vmem:[#allocation9 + $0x90] sm:$0xf]
    %v3735 = vld [vmem:[#allocation9 + $0x94] sm:$0xf]
    %v3736 = vld [vmem:[#allocation9 + $0x98] sm:$0xf]
    %v3737 = vld [vmem:[#allocation9 + $0x9c] sm:$0xf]
    %v3738 = vld [vmem:[#allocation9 + $0xa0] sm:$0xf]
    %v3739 = vld [vmem:[#allocation9 + $0xa4] sm:$0xf]
    %v3740 = vld [vmem:[#allocation9 + $0xa8] sm:$0xf]
    %v3741 = vld [vmem:[#allocation9 + $0xac] sm:$0xf]
    %v3742 = vld [vmem:[#allocation9 + $0xb0] sm:$0xf]
    %v3743 = vld [vmem:[#allocation9 + $0xb4] sm:$0xf]
    %v3744 = vld [vmem:[#allocation9 + $0xb8] sm:$0xf]
    %v3745 = vld [vmem:[#allocation9 + $0xbc] sm:$0xf]
    %v3746 = vld [vmem:[#allocation9 + $0xc0] sm:$0xf]
    %v3747 = vld [vmem:[#allocation9 + $0xc4] sm:$0xf]
    %v3748 = vld [vmem:[#allocation9 + $0xc8] sm:$0xf]
    %v3749 = vld [vmem:[#allocation9 + $0xcc] sm:$0xf]
    %v3750 = vld [vmem:[#allocation9 + $0xd0] sm:$0xf]
    %v3751 = vld [vmem:[#allocation9 + $0xd4] sm:$0xf]
    %v3752 = vld [vmem:[#allocation9 + $0xd8] sm:$0xf]
    %v3753 = vld [vmem:[#allocation9 + $0xdc] sm:$0xf]
    %v3754 = vld [vmem:[#allocation9 + $0xe0] sm:$0xf]
    %v3755 = vld [vmem:[#allocation9 + $0xe4] sm:$0xf]
    %v3756 = vld [vmem:[#allocation9 + $0xe8] sm:$0xf]
    %v3757 = vld [vmem:[#allocation9 + $0xec] sm:$0xf]
    %v3758 = vld [vmem:[#allocation9 + $0xf0] sm:$0xf]
    %v3759 = vld [vmem:[#allocation9 + $0xf4] sm:$0xf]
    %v3760 = vld [vmem:[#allocation9 + $0xf8] sm:$0xf]
    %v3761 = vld [vmem:[#allocation9 + $0xfc] sm:$0xf]
    %v3762 = vld [vmem:[%s12] sm:$0x1]
    %v3764 = vlaneseq
    %v3765 = vshrl.u32 %v3764, 7
    %v3766 = vsub.s32 0, %v3765
    %v3767 = vrot.slane %v3762, %v3766
    %v3833 = vunpack.c.l.b16 %v3698
    %v3834 = vunpack.c.l.b16 %v3699
    %v3835 = vunpack.c.l.b16 %v3700
    %v3836 = vunpack.c.l.b16 %v3701
    %v3837 = vunpack.c.l.b16 %v3702
    %v3838 = vunpack.c.l.b16 %v3703
    %v3839 = vunpack.c.l.b16 %v3704
    %v3840 = vunpack.c.l.b16 %v3705
    %v3841 = vunpack.c.l.b16 %v3706
    %v3842 = vunpack.c.l.b16 %v3707
    %v3843 = vunpack.c.l.b16 %v3708
    %v3844 = vunpack.c.l.b16 %v3709
    %v3845 = vunpack.c.l.b16 %v3710
    %v3846 = vunpack.c.l.b16 %v3711
    %v3847 = vunpack.c.l.b16 %v3712
    %v3848 = vunpack.c.l.b16 %v3713
    %v3849 = vunpack.c.l.b16 %v3714
    %v3850 = vunpack.c.l.b16 %v3715
    %v3851 = vunpack.c.l.b16 %v3716
    %v3852 = vunpack.c.l.b16 %v3717
    %v3853 = vunpack.c.l.b16 %v3718
    %v3854 = vunpack.c.l.b16 %v3719
    %v3855 = vunpack.c.l.b16 %v3720
    %v3856 = vunpack.c.l.b16 %v3721
    %v3857 = vunpack.c.l.b16 %v3722
    %v3858 = vunpack.c.l.b16 %v3723
    %v3859 = vunpack.c.l.b16 %v3724
    %v3860 = vunpack.c.l.b16 %v3725
    %v3861 = vunpack.c.l.b16 %v3726
    %v3862 = vunpack.c.l.b16 %v3727
    %v3863 = vunpack.c.l.b16 %v3728
    %v3864 = vunpack.c.l.b16 %v3729
    %v3865 = vunpack.c.l.b16 %v3730
    %v3866 = vunpack.c.l.b16 %v3731
    %v3867 = vunpack.c.l.b16 %v3732
    %v3868 = vunpack.c.l.b16 %v3733
    %v3869 = vunpack.c.l.b16 %v3734
    %v3870 = vunpack.c.l.b16 %v3735
    %v3871 = vunpack.c.l.b16 %v3736
    %v3872 = vunpack.c.l.b16 %v3737
    %v3873 = vunpack.c.l.b16 %v3738
    %v3874 = vunpack.c.l.b16 %v3739
    %v3875 = vunpack.c.l.b16 %v3740
    %v3876 = vunpack.c.l.b16 %v3741
    %v3877 = vunpack.c.l.b16 %v3742
    %v3878 = vunpack.c.l.b16 %v3743
    %v3879 = vunpack.c.l.b16 %v3744
    %v3880 = vunpack.c.l.b16 %v3745
    %v3881 = vunpack.c.l.b16 %v3746
    %v3882 = vunpack.c.l.b16 %v3747
    %v3883 = vunpack.c.l.b16 %v3748
    %v3884 = vunpack.c.l.b16 %v3749
    %v3885 = vunpack.c.l.b16 %v3750
    %v3886 = vunpack.c.l.b16 %v3751
    %v3887 = vunpack.c.l.b16 %v3752
    %v3888 = vunpack.c.l.b16 %v3753
    %v3889 = vunpack.c.l.b16 %v3754
    %v3890 = vunpack.c.l.b16 %v3755
    %v3891 = vunpack.c.l.b16 %v3756
    %v3892 = vunpack.c.l.b16 %v3757
    %v3893 = vunpack.c.l.b16 %v3758
    %v3894 = vunpack.c.l.b16 %v3759
    %v3895 = vunpack.c.l.b16 %v3760
    %v3896 = vunpack.c.l.b16 %v3761
    %v3897 = vpack.c.b16 %v3834, %v3833
    %v3898 = vpack.c.b16 %v3836, %v3835
    %v3899 = vpack.c.b16 %v3838, %v3837
    %v3900 = vpack.c.b16 %v3840, %v3839
    %v3901 = vpack.c.b16 %v3842, %v3841
    %v3902 = vpack.c.b16 %v3844, %v3843
    %v3903 = vpack.c.b16 %v3846, %v3845
    %v3904 = vpack.c.b16 %v3848, %v3847
    %v3905 = vpack.c.b16 %v3850, %v3849
    %v3906 = vpack.c.b16 %v3852, %v3851
    %v3907 = vpack.c.b16 %v3854, %v3853
    %v3908 = vpack.c.b16 %v3856, %v3855
    %v3909 = vpack.c.b16 %v3858, %v3857
    %v3910 = vpack.c.b16 %v3860, %v3859
    %v3911 = vpack.c.b16 %v3862, %v3861
    %v3912 = vpack.c.b16 %v3864, %v3863
    %v3913 = vpack.c.b16 %v3866, %v3865
    %v3914 = vpack.c.b16 %v3868, %v3867
    %v3915 = vpack.c.b16 %v3870, %v3869
    %v3916 = vpack.c.b16 %v3872, %v3871
    %v3917 = vpack.c.b16 %v3874, %v3873
    %v3918 = vpack.c.b16 %v3876, %v3875
    %v3919 = vpack.c.b16 %v3878, %v3877
    %v3920 = vpack.c.b16 %v3880, %v3879
    %v3921 = vpack.c.b16 %v3882, %v3881
    %v3922 = vpack.c.b16 %v3884, %v3883
    %v3923 = vpack.c.b16 %v3886, %v3885
    %v3924 = vpack.c.b16 %v3888, %v3887
    %v3925 = vpack.c.b16 %v3890, %v3889
    %v3926 = vpack.c.b16 %v3892, %v3891
    %v3927 = vpack.c.b16 %v3894, %v3893
    %v3928 = vpack.c.b16 %v3896, %v3895
    %3961 = vmatprep.subr.bf16.mxu0 0
    %3962 = vmatpush1.bf16.msra.mxu0 %v3904
    %3963 = vmatprep.subr.bf16.mxu0 0
    %3964 = vmatpush1.bf16.msra.mxu0 %v3903
    %3965 = vmatprep.subr.bf16.mxu0 0
    %3966 = vmatpush1.bf16.msra.mxu0 %v3902
    %3967 = vmatprep.subr.bf16.mxu0 0
    %3968 = vmatpush1.bf16.msra.mxu0 %v3901
    %3969 = vmatprep.subr.bf16.mxu0 0
    %3970 = vmatpush1.bf16.msra.mxu0 %v3900
    %3971 = vmatprep.subr.bf16.mxu0 0
    %3972 = vmatpush1.bf16.msra.mxu0 %v3899
    %3973 = vmatprep.subr.bf16.mxu0 0
    %3974 = vmatpush1.bf16.msra.mxu0 %v3898
    %3975 = vmatprep.subr.bf16.mxu0 0
    %3976 = vmatpush1.bf16.msra.mxu0 %v3897
    %3977 = vmatprep.subr.bf16.mxu0 0
    %3978 = vmatpush2.bf16.msra.mxu0 %v3912
    %3979 = vmatprep.subr.bf16.mxu0 0
    %3980 = vmatpush2.bf16.msra.mxu0 %v3911
    %3981 = vmatprep.subr.bf16.mxu0 0
    %3982 = vmatpush2.bf16.msra.mxu0 %v3910
    %3983 = vmatprep.subr.bf16.mxu0 0
    %3984 = vmatpush2.bf16.msra.mxu0 %v3909
    %3985 = vmatprep.subr.bf16.mxu0 0
    %3986 = vmatpush2.bf16.msra.mxu0 %v3908
    %3987 = vmatprep.subr.bf16.mxu0 0
    %3988 = vmatpush2.bf16.msra.mxu0 %v3907
    %3989 = vmatprep.subr.bf16.mxu0 0
    %3990 = vmatpush2.bf16.msra.mxu0 %v3906
    %3991 = vmatprep.subr.bf16.mxu0 0
    %3992 = vmatpush2.bf16.msra.mxu0 %v3905
    %3993 = vmatprep.mubr.bf16.mxu0 %v3695
    %3994 = vmatmul.mubr.bf16.gmra.mxu0 %v3694
    %v3995 = vpop.f32.mrf.mxu0
    %v3996 = vadd.f32 %v3767, %v3995
    %v3997 = vpop.f32.mrf.mxu0
    %v3998 = vpop.f32.mrf.mxu0
    %v3999 = vpop.f32.mrf.mxu0
    %4000 = vdwg.mxu0
    %4001 = vmatprep.subr.bf16.mxu0 0
    %4002 = vmatpush1.bf16.msra.mxu0 %v3920
    %4003 = vmatprep.subr.bf16.mxu0 0
    %4004 = vmatpush1.bf16.msra.mxu0 %v3919
    %4005 = vmatprep.subr.bf16.mxu0 0
    %4006 = vmatpush1.bf16.msra.mxu0 %v3918
    %4007 = vmatprep.subr.bf16.mxu0 0
    %4008 = vmatpush1.bf16.msra.mxu0 %v3917
    %4009 = vmatprep.subr.bf16.mxu0 0
    %4010 = vmatpush1.bf16.msra.mxu0 %v3916
    %4011 = vmatprep.subr.bf16.mxu0 0
    %4012 = vmatpush1.bf16.msra.mxu0 %v3915
    %4013 = vmatprep.subr.bf16.mxu0 0
    %4014 = vmatpush1.bf16.msra.mxu0 %v3914
    %4015 = vmatprep.subr.bf16.mxu0 0
    %4016 = vmatpush1.bf16.msra.mxu0 %v3913
    %4017 = vmatprep.subr.bf16.mxu0 0
    %4018 = vmatpush2.bf16.msra.mxu0 %v3928
    %4019 = vmatprep.subr.bf16.mxu0 0
    %4020 = vmatpush2.bf16.msra.mxu0 %v3927
    %4021 = vmatprep.subr.bf16.mxu0 0
    %4022 = vmatpush2.bf16.msra.mxu0 %v3926
    %4023 = vmatprep.subr.bf16.mxu0 0
    %4024 = vmatpush2.bf16.msra.mxu0 %v3925
    %4025 = vmatprep.subr.bf16.mxu0 0
    %4026 = vmatpush2.bf16.msra.mxu0 %v3924
    %4027 = vmatprep.subr.bf16.mxu0 0
    %4028 = vmatpush2.bf16.msra.mxu0 %v3923
    %4029 = vmatprep.subr.bf16.mxu0 0
    %4030 = vmatpush2.bf16.msra.mxu0 %v3922
    %4031 = vmatprep.subr.bf16.mxu0 0
    %4032 = vmatpush2.bf16.msra.mxu0 %v3921
    %4033 = vmatprep.mubr.bf16.mxu0 %v3697
    %4034 = vmatmul.mubr.bf16.gmra.mxu0 %v3696
    %v4035 = vpop.f32.mrf.mxu0
    %v4036 = vadd.f32 %v3996, %v4035
    %v4037 = vpop.f32.mrf.mxu0
    %v4038 = vpop.f32.mrf.mxu0
    %v4039 = vpop.f32.mrf.mxu0
    %4040 = vdwg.mxu0
    %v4041 = vtanh.pop %v4036
    %4042 = vst [vmem:[%s13] sm:$0xff] %v4041
    // Predicated region
    $region74: #{actor_one_step_policy.1} parent=1 // pred_check
      _
    $region75: #{actor_one_step_policy.1} parent=1 // pred_check_branch
      %4044 = sbr.rel (0) target = $region77
    $region76: #{actor_one_step_policy.1} parent=1 // pred_region
      _
    $region77: #{actor_one_step_policy.1} parent=1 // pred_fallthru
      _
    // Predicated region
    $region78: #{actor_one_step_policy.1} parent=1 // pred_check
      _
    $region79: #{actor_one_step_policy.1} parent=1 // pred_check_branch
      %4046 = sbr.rel (0) target = $region81
    $region80: #{actor_one_step_policy.1} parent=1 // pred_region
      _
    $region81: #{actor_one_step_policy.1} parent=1 // pred_fallthru
      _
    %4047 = vsyncpa [#allocation3], 1
    %4048 = vsyncpa [#allocation5], 1
    %4049 = vsyncpa [#allocation8], 1

</llo_original>
